<compile_context>
chip_gen: v5e
topology: v5e:2x2
jax: 0.10.0
libtpu: 0.0.40
codegen_flags: <defaults>
</compile_context>

<pallas_src>
import jax
import jax.numpy as jnp
from jax.experimental import pallas as pl
from jax.experimental.pallas import tpu as pltpu

TILE_M = 8                           # sublane tile for the (padded) batch dim
D_IN, H1, H2, H3, D_OUT = 100, 400, 300, 500, 4
PAD = [128, 512, 384, 512, 128]      # padded: d_in, h1, h2, h3, d_out
W_PACK = 512                         # packed weight operands are (512, 512)


# ---------------------------------------------------------------------------
# Pallas kernel: whole 4-layer MLP on one VMEM-resident tile set (3 inputs)
# ---------------------------------------------------------------------------
def mlp_kernel(x_ref, w13_ref, w24_ref, o_ref):
    def leaky_relu(z):
        # PyTorch nn.LeakyReLU() default negative_slope = 0.01
        return jnp.where(z >= 0, z, 0.01 * z)

    def dense(h_f32, w_bf16):
        # bf16 x bf16 on the MXU, f32 accumulation.  Bias is already folded
        # into a padded weight row and driven by the constant-1 carrier lane.
        return jnp.dot(h_f32.astype(jnp.bfloat16), w_bf16,
                       preferred_element_type=jnp.float32)

    # Static, (8/128)-tile-aligned slices of the packed weights: free VMEM views.
    w1 = w13_ref[:PAD[0], :]      # (128, 512)  rows 0..127   = layer-1 weights
    w3 = w13_ref[PAD[0]:, :]      # (384, 512)  rows 128..511 = layer-3 weights
    w2 = w24_ref[:, :PAD[2]]      # (512, 384)  cols 0..383   = layer-2 weights
    w4 = w24_ref[:, PAD[2]:]      # (512, 128)  cols 384..511 = layer-4 weights

    x = x_ref[...]                           # f32 (8,128);  x[:,100] = 1 carrier
    h1 = leaky_relu(dense(x, w1))            # f32 (8,512);  h1[:,400] = 1 carrier
    h2 = leaky_relu(dense(h1, w2))           # f32 (8,384);  h2[:,300] = 1 carrier
    h3 = leaky_relu(dense(h2, w3))           # f32 (8,512);  h3[:,500] = 1 carrier
    h4 = jnp.tanh(dense(h3, w4))             # f32 (8,128);  padded cols -> tanh(0)=0
    o_ref[...] = h4.astype(o_ref.dtype)


# ---------------------------------------------------------------------------
# Wrapper
# ---------------------------------------------------------------------------
def pytorch_mlp_forward(x, packed_params, output_dim=2):
    """Forward pass matching PyTorchMLP.forward (batch must be 1)."""
    x2d = jnp.reshape(x, (-1, D_IN)).astype(jnp.float32)
    B = x2d.shape[0]
    # The module's final reshape to [output_dim, output_dim] requires B == 1.
    assert B == 1, "PyTorchMLP semantics require a single example (batch == 1)"

    b_pad = ((B + TILE_M - 1) // TILE_M) * TILE_M            # -> 8
    num_steps = b_pad // TILE_M                              # -> 1

    # Zero-pad batch -> 8 rows, features -> 128 lanes.  The constant-1 bias
    # carrier lane (col 100) is only written for the real rows, so the padded
    # rows stay exactly zero through every layer (no garbage to worry about);
    # they are discarded by the [:B] slice below regardless.
    x_pad = jnp.zeros((b_pad, PAD[0]), jnp.float32)
    x_pad = x_pad.at[:B, :D_IN].set(x2d)
    x_pad = x_pad.at[:B, D_IN].set(1.0)

    w13 = packed_params["w13"]                               # (512,512) bf16
    w24 = packed_params["w24"]                               # (512,512) bf16

    # Advisory cost hint (per call, padded shapes).
    mxu_flops = 2 * b_pad * (PAD[0] * PAD[1] + PAD[1] * PAD[2]
                             + PAD[2] * PAD[3] + PAD[3] * PAD[4])
    weight_bytes = 2 * 2 * (W_PACK * W_PACK)                 # two bf16 (512,512)
    io_bytes = 4 * b_pad * (PAD[0] + PAD[4])
    cost = pl.CostEstimate(flops=mxu_flops,
                           transcendentals=b_pad * PAD[4],
                           bytes_accessed=weight_bytes + io_bytes)

    def run(single_buffer_weights):
        def weight_spec():
            # Same block for every grid step -> VMEM-resident across steps.
            if single_buffer_weights:
                # grid=(1,): double-buffering resident weights buys nothing;
                # single-buffer to halve their VMEM footprint.
                return pl.BlockSpec((W_PACK, W_PACK), lambda i: (0, 0),
                                    pipeline_mode=pl.Buffered(1))
            return pl.BlockSpec((W_PACK, W_PACK), lambda i: (0, 0))

        call = pl.pallas_call(
            mlp_kernel,
            out_shape=jax.ShapeDtypeStruct((b_pad, PAD[4]), jnp.float32),
            grid_spec=pltpu.PrefetchScalarGridSpec(
                num_scalar_prefetch=0,
                grid=(num_steps,),
                in_specs=[pl.BlockSpec((TILE_M, PAD[0]), lambda i: (i, 0)),  # x streams
                          weight_spec(),                                      # w13 pinned
                          weight_spec()],                                     # w24 pinned
                out_specs=pl.BlockSpec((TILE_M, PAD[4]), lambda i: (i, 0)),   # lane-dense
                scratch_shapes=()),
            compiler_params=pltpu.CompilerParams(
                dimension_semantics=("parallel",)),
            cost_estimate=cost,
        )
        return jax.block_until_ready(call(x_pad, w13, w24))

    try:
        out_pad = run(single_buffer_weights=True)
    except Exception:
        # pipeline_mode=pl.Buffered(1) not accepted on this jax/backend combo;
        # fall back to default double-buffered resident weights (same math).
        out_pad = run(single_buffer_weights=False)

    return out_pad[:B, :output_dim ** 2].reshape((output_dim, output_dim))


# ---------------------------------------------------------------------------
# Deterministic parameter init (PyTorch Linear-style uniform, [in, out] layout)
# ---------------------------------------------------------------------------
def init_params(key):
    dims = [D_IN, H1, H2, H3, D_OUT]
    params = {}
    keys = jax.random.split(key, 2 * (len(dims) - 1))
    for i in range(len(dims) - 1):
        fan_in, fan_out = dims[i], dims[i + 1]
        bound = 1.0 / jnp.sqrt(fan_in)
        params[f"w{i + 1}"] = jax.random.uniform(
            keys[2 * i], (fan_in, fan_out), jnp.float32, -bound, bound)
        params[f"b{i + 1}"] = jax.random.uniform(
            keys[2 * i + 1], (1, fan_out), jnp.float32, -bound, bound)
    return params


# ---------------------------------------------------------------------------
# One-time packing: zero-pad to (8,128)-aligned tiles, fold biases into padded
# weight rows + constant-1 carrier lanes, pack 4 weights into 2 (512,512) bf16.
# ---------------------------------------------------------------------------
def prepare_packed_params(params):
    # Carrier lane indices live in padded (otherwise-zero) column space:
    #   input carrier = col 100 of x, then cols 400 / 300 / 500 of h1 / h2 / h3.
    # Padding with zeros is mathematically exact; leaky_relu(1) = 1 keeps the
    # carrier alive between layers.
    w1 = jnp.zeros((PAD[0], PAD[1]), jnp.float32)
    w1 = w1.at[:D_IN, :H1].set(params["w1"])
    w1 = w1.at[D_IN, :H1].set(params["b1"].reshape(-1))   # b1 row, driven by x[:,100]=1
    w1 = w1.at[D_IN, H1].set(1.0)                         # emit carrier: h1[:,400]=1

    w2 = jnp.zeros((PAD[1], PAD[2]), jnp.float32)
    w2 = w2.at[:H1, :H2].set(params["w2"])
    w2 = w2.at[H1, :H2].set(params["b2"].reshape(-1))     # b2 row, driven by h1[:,400]
    w2 = w2.at[H1, H2].set(1.0)                           # emit carrier: h2[:,300]=1

    w3 = jnp.zeros((PAD[2], PAD[3]), jnp.float32)
    w3 = w3.at[:H2, :H3].set(params["w3"])
    w3 = w3.at[H2, :H3].set(params["b3"].reshape(-1))     # b3 row, driven by h2[:,300]
    w3 = w3.at[H2, H3].set(1.0)                           # emit carrier: h3[:,500]=1

    w4 = jnp.zeros((PAD[3], PAD[4]), jnp.float32)
    w4 = w4.at[:H3, :D_OUT].set(params["w4"])
    w4 = w4.at[H3, :D_OUT].set(params["b4"].reshape(-1))  # b4 row, driven by h3[:,500]
    # No carrier after the last layer (tanh would not preserve it; not needed).

    w13 = jnp.concatenate([w1, w3], axis=0).astype(jnp.bfloat16)   # (512, 512)
    w24 = jnp.concatenate([w2, w4], axis=1).astype(jnp.bfloat16)   # (512, 512)
    return {"w13": w13, "w24": w24}


# ---------------------------------------------------------------------------
# Main
# ---------------------------------------------------------------------------
if __name__ == "__main__":
    key = jax.random.PRNGKey(0)
    pkey, xkey = jax.random.split(key)

    params = init_params(pkey)
    packed_params = prepare_packed_params(params)

    # batch=1 (forced by the module's final reshape to [2,2]); feature dim 100
    x = jax.random.normal(xkey, (1, D_IN), dtype=jnp.float32)

    out = jax.block_until_ready(
        pytorch_mlp_forward(x, packed_params, output_dim=2))

    # --- references ---------------------------------------------------------
    def leaky(z):
        return jnp.where(z >= 0, z, 0.01 * z)

    def ref_f32(x, p):
        h = x.reshape((-1, D_IN))
        h = leaky(h @ p["w1"] + p["b1"])
        h = leaky(h @ p["w2"] + p["b2"])
        h = leaky(h @ p["w3"] + p["b3"])
        h = jnp.tanh(h @ p["w4"] + p["b4"])
        return h.reshape((2, 2))

    def ref_bf16(x, p):
        # Mirrors the kernel's math: bf16 weights AND biases (biases are folded
        # into the bf16 weight matrices in the kernel), f32 accumulation.
        h = x.reshape((-1, D_IN)).astype(jnp.float32)
        for i in range(1, 5):
            w = p[f"w{i}"].astype(jnp.bfloat16)
            b = p[f"b{i}"].astype(jnp.bfloat16).astype(jnp.float32)
            z = jnp.dot(h.astype(jnp.bfloat16), w,
                        preferred_element_type=jnp.float32) + b
            h = leaky(z) if i < 4 else jnp.tanh(z)
        return h.reshape((2, 2))

    r_bf = jax.block_until_ready(ref_bf16(x, params))
    r_32 = jax.block_until_ready(ref_f32(x, params))

    assert out.shape == (2, 2)
    assert jnp.allclose(out, r_bf, atol=2e-3, rtol=2e-3), (out, r_bf)
    assert jnp.allclose(out, r_32, atol=5e-2, rtol=5e-2), (out, r_32)

    print("KERNEL_OK")
</pallas_src>

<mosaic_0001>
module attributes {stable_mosaic.version = 11 : i64} {
  func.func @mlp_kernel(%arg0: i32, %arg1: memref<8x128xf32, #tpu.memory_space<vmem>>, %arg2: memref<512x512xbf16, #tpu.memory_space<vmem>>, %arg3: memref<512x512xbf16, #tpu.memory_space<vmem>>, %arg4: memref<8x128xf32, #tpu.memory_space<vmem>>) attributes {dimension_semantics = [#tpu.dimension_semantics<parallel>], iteration_bounds = array<i64: 1>, scalar_prefetch = 0 : i64, scratch_operands = 0 : i64, tpu.core_type = #tpu.core_type<tc>, window_params = [{transform_indices = @transform_0, window_bounds = array<i64: 8, 128>}, {pipeline_mode = #tpu.pipeline_mode<synchronous>, transform_indices = @transform_1, window_bounds = array<i64: 512, 512>}, {pipeline_mode = #tpu.pipeline_mode<synchronous>, transform_indices = @transform_2, window_bounds = array<i64: 512, 512>}, {transform_indices = @transform_3, window_bounds = array<i64: 8, 128>}]} {
    %c0 = arith.constant 0 : index
    %c0_0 = arith.constant 0 : index
    %0 = vector.load %arg2[%c0, %c0_0] : memref<512x512xbf16, #tpu.memory_space<vmem>>, vector<128x512xbf16>
    %c128 = arith.constant 128 : index
    %c0_1 = arith.constant 0 : index
    %1 = vector.load %arg2[%c128, %c0_1] : memref<512x512xbf16, #tpu.memory_space<vmem>>, vector<384x512xbf16>
    %c0_2 = arith.constant 0 : index
    %c0_3 = arith.constant 0 : index
    %2 = vector.load %arg3[%c0_2, %c0_3] : memref<512x512xbf16, #tpu.memory_space<vmem>>, vector<512x384xbf16>
    %c0_4 = arith.constant 0 : index
    %c384 = arith.constant 384 : index
    %3 = vector.load %arg3[%c0_4, %c384] : memref<512x512xbf16, #tpu.memory_space<vmem>>, vector<512x128xbf16>
    %c0_5 = arith.constant 0 : index
    %c0_6 = arith.constant 0 : index
    %4 = vector.load %arg1[%c0_5, %c0_6] : memref<8x128xf32, #tpu.memory_space<vmem>>, vector<8x128xf32>
    %5 = arith.truncf %4 : vector<8x128xf32> to vector<8x128xbf16>
    %cst = arith.constant dense<0.000000e+00> : vector<8x512xf32>
    %6 = tpu.matmul %5, %0, %cst {dimension_numbers = #tpu.dot_dimension_numbers<[1], [0], [0], [1], [0, 0, 1, 1], [], []>} : vector<8x128xbf16>, vector<128x512xbf16>, vector<8x512xf32> -> vector<8x512xf32>
    %cst_7 = arith.constant 0.000000e+00 : f32
    %7 = vector.broadcast %cst_7 : f32 to vector<8x512xf32>
    %8 = arith.cmpf oge, %6, %7 : vector<8x512xf32>
    %cst_8 = arith.constant 0.00999999977 : f32
    %9 = vector.broadcast %cst_8 : f32 to vector<8x512xf32>
    %10 = arith.mulf %9, %6 : vector<8x512xf32>
    %11 = arith.select %8, %6, %10 : vector<8x512xi1>, vector<8x512xf32>
    %12 = arith.truncf %11 : vector<8x512xf32> to vector<8x512xbf16>
    %cst_9 = arith.constant dense<0.000000e+00> : vector<8x384xf32>
    %13 = tpu.matmul %12, %2, %cst_9 {dimension_numbers = #tpu.dot_dimension_numbers<[1], [0], [0], [1], [0, 0, 1, 1], [], []>} : vector<8x512xbf16>, vector<512x384xbf16>, vector<8x384xf32> -> vector<8x384xf32>
    %cst_10 = arith.constant 0.000000e+00 : f32
    %14 = vector.broadcast %cst_10 : f32 to vector<8x384xf32>
    %15 = arith.cmpf oge, %13, %14 : vector<8x384xf32>
    %cst_11 = arith.constant 0.00999999977 : f32
    %16 = vector.broadcast %cst_11 : f32 to vector<8x384xf32>
    %17 = arith.mulf %16, %13 : vector<8x384xf32>
    %18 = arith.select %15, %13, %17 : vector<8x384xi1>, vector<8x384xf32>
    %19 = arith.truncf %18 : vector<8x384xf32> to vector<8x384xbf16>
    %cst_12 = arith.constant dense<0.000000e+00> : vector<8x512xf32>
    %20 = tpu.matmul %19, %1, %cst_12 {dimension_numbers = #tpu.dot_dimension_numbers<[1], [0], [0], [1], [0, 0, 1, 1], [], []>} : vector<8x384xbf16>, vector<384x512xbf16>, vector<8x512xf32> -> vector<8x512xf32>
    %cst_13 = arith.constant 0.000000e+00 : f32
    %21 = vector.broadcast %cst_13 : f32 to vector<8x512xf32>
    %22 = arith.cmpf oge, %20, %21 : vector<8x512xf32>
    %cst_14 = arith.constant 0.00999999977 : f32
    %23 = vector.broadcast %cst_14 : f32 to vector<8x512xf32>
    %24 = arith.mulf %23, %20 : vector<8x512xf32>
    %25 = arith.select %22, %20, %24 : vector<8x512xi1>, vector<8x512xf32>
    %26 = arith.truncf %25 : vector<8x512xf32> to vector<8x512xbf16>
    %cst_15 = arith.constant dense<0.000000e+00> : vector<8x128xf32>
    %27 = tpu.matmul %26, %3, %cst_15 {dimension_numbers = #tpu.dot_dimension_numbers<[1], [0], [0], [1], [0, 0, 1, 1], [], []>} : vector<8x512xbf16>, vector<512x128xbf16>, vector<8x128xf32> -> vector<8x128xf32>
    %28 = math.tanh %27 : vector<8x128xf32>
    %c0_16 = arith.constant 0 : index
    %c0_17 = arith.constant 0 : index
    %29 = vector.load %arg4[%c0_16, %c0_17] : memref<8x128xf32, #tpu.memory_space<vmem>>, vector<8x128xf32>
    tpu.vector_store %arg4[%c0_16, %c0_17], %28 {strides = array<i32>} : memref<8x128xf32, #tpu.memory_space<vmem>>, vector<8x128xf32>,
    return
  }
  func.func @transform_0(%arg0: i32) -> (i32, i32) {
    %c0_i32 = arith.constant 0 : i32
    %c0_i32_0 = arith.constant 0 : i32
    return %arg0, %c0_i32 : i32, i32
  }
  func.func @transform_1(%arg0: i32) -> (i32, i32) {
    %c0_i32 = arith.constant 0 : i32
    %c0_i32_0 = arith.constant 0 : i32
    %c0_i32_1 = arith.constant 0 : i32
    return %c0_i32, %c0_i32_0 : i32, i32
  }
  func.func @transform_2(%arg0: i32) -> (i32, i32) {
    %c0_i32 = arith.constant 0 : i32
    %c0_i32_0 = arith.constant 0 : i32
    %c0_i32_1 = arith.constant 0 : i32
    return %c0_i32, %c0_i32_0 : i32, i32
  }
  func.func @transform_3(%arg0: i32) -> (i32, i32) {
    %c0_i32 = arith.constant 0 : i32
    %c0_i32_0 = arith.constant 0 : i32
    return %arg0, %c0_i32 : i32, i32
  }
}

module attributes {stable_mosaic.version = 11 : i64} {
  func.func @mlp_kernel(%arg0: i32, %arg1: memref<8x128xf32, #tpu.memory_space<vmem>>, %arg2: memref<512x512xbf16, #tpu.memory_space<vmem>>, %arg3: memref<512x512xbf16, #tpu.memory_space<vmem>>, %arg4: memref<8x128xf32, #tpu.memory_space<vmem>>) attributes {dimension_semantics = [#tpu.dimension_semantics<parallel>], iteration_bounds = array<i64: 1>, scalar_prefetch = 0 : i64, scratch_operands = 0 : i64, tpu.core_type = #tpu.core_type<tc>, window_params = [{transform_indices = @transform_0, window_bounds = array<i64: 8, 128>}, {pipeline_mode = #tpu.pipeline_mode<synchronous>, transform_indices = @transform_1, window_bounds = array<i64: 512, 512>}, {pipeline_mode = #tpu.pipeline_mode<synchronous>, transform_indices = @transform_2, window_bounds = array<i64: 512, 512>}, {transform_indices = @transform_3, window_bounds = array<i64: 8, 128>}]} {
    %c0 = arith.constant 0 : index
    %c0_0 = arith.constant 0 : index
    %0 = vector.load %arg2[%c0, %c0_0] : memref<512x512xbf16, #tpu.memory_space<vmem>>, vector<128x512xbf16>
    %c128 = arith.constant 128 : index
    %c0_1 = arith.constant 0 : index
    %1 = vector.load %arg2[%c128, %c0_1] : memref<512x512xbf16, #tpu.memory_space<vmem>>, vector<384x512xbf16>
    %c0_2 = arith.constant 0 : index
    %c0_3 = arith.constant 0 : index
    %2 = vector.load %arg3[%c0_2, %c0_3] : memref<512x512xbf16, #tpu.memory_space<vmem>>, vector<512x384xbf16>
    %c0_4 = arith.constant 0 : index
    %c384 = arith.constant 384 : index
    %3 = vector.load %arg3[%c0_4, %c384] : memref<512x512xbf16, #tpu.memory_space<vmem>>, vector<512x128xbf16>
    %c0_5 = arith.constant 0 : index
    %c0_6 = arith.constant 0 : index
    %4 = vector.load %arg1[%c0_5, %c0_6] : memref<8x128xf32, #tpu.memory_space<vmem>>, vector<8x128xf32>
    %5 = arith.truncf %4 : vector<8x128xf32> to vector<8x128xbf16>
    %cst = arith.constant dense<0.000000e+00> : vector<8x512xf32>
    %6 = tpu.matmul %5, %0, %cst {dimension_numbers = #tpu.dot_dimension_numbers<[1], [0], [0], [1], [0, 0, 1, 1], [], []>} : vector<8x128xbf16>, vector<128x512xbf16>, vector<8x512xf32> -> vector<8x512xf32>
    %cst_7 = arith.constant 0.000000e+00 : f32
    %7 = vector.broadcast %cst_7 : f32 to vector<8x512xf32>
    %8 = arith.cmpf oge, %6, %7 : vector<8x512xf32>
    %cst_8 = arith.constant 0.00999999977 : f32
    %9 = vector.broadcast %cst_8 : f32 to vector<8x512xf32>
    %10 = arith.mulf %9, %6 : vector<8x512xf32>
    %11 = arith.select %8, %6, %10 : vector<8x512xi1>, vector<8x512xf32>
    %12 = arith.truncf %11 : vector<8x512xf32> to vector<8x512xbf16>
    %cst_9 = arith.constant dense<0.000000e+00> : vector<8x384xf32>
    %13 = tpu.matmul %12, %2, %cst_9 {dimension_numbers = #tpu.dot_dimension_numbers<[1], [0], [0], [1], [0, 0, 1, 1], [], []>} : vector<8x512xbf16>, vector<512x384xbf16>, vector<8x384xf32> -> vector<8x384xf32>
    %cst_10 = arith.constant 0.000000e+00 : f32
    %14 = vector.broadcast %cst_10 : f32 to vector<8x384xf32>
    %15 = arith.cmpf oge, %13, %14 : vector<8x384xf32>
    %cst_11 = arith.constant 0.00999999977 : f32
    %16 = vector.broadcast %cst_11 : f32 to vector<8x384xf32>
    %17 = arith.mulf %16, %13 : vector<8x384xf32>
    %18 = arith.select %15, %13, %17 : vector<8x384xi1>, vector<8x384xf32>
    %19 = arith.truncf %18 : vector<8x384xf32> to vector<8x384xbf16>
    %cst_12 = arith.constant dense<0.000000e+00> : vector<8x512xf32>
    %20 = tpu.matmul %19, %1, %cst_12 {dimension_numbers = #tpu.dot_dimension_numbers<[1], [0], [0], [1], [0, 0, 1, 1], [], []>} : vector<8x384xbf16>, vector<384x512xbf16>, vector<8x512xf32> -> vector<8x512xf32>
    %cst_13 = arith.constant 0.000000e+00 : f32
    %21 = vector.broadcast %cst_13 : f32 to vector<8x512xf32>
    %22 = arith.cmpf oge, %20, %21 : vector<8x512xf32>
    %cst_14 = arith.constant 0.00999999977 : f32
    %23 = vector.broadcast %cst_14 : f32 to vector<8x512xf32>
    %24 = arith.mulf %23, %20 : vector<8x512xf32>
    %25 = arith.select %22, %20, %24 : vector<8x512xi1>, vector<8x512xf32>
    %26 = arith.truncf %25 : vector<8x512xf32> to vector<8x512xbf16>
    %cst_15 = arith.constant dense<0.000000e+00> : vector<8x128xf32>
    %27 = tpu.matmul %26, %3, %cst_15 {dimension_numbers = #tpu.dot_dimension_numbers<[1], [0], [0], [1], [0, 0, 1, 1], [], []>} : vector<8x512xbf16>, vector<512x128xbf16>, vector<8x128xf32> -> vector<8x128xf32>
    %28 = math.tanh %27 : vector<8x128xf32>
    %c0_16 = arith.constant 0 : index
    %c0_17 = arith.constant 0 : index
    %29 = vector.load %arg4[%c0_16, %c0_17] : memref<8x128xf32, #tpu.memory_space<vmem>>, vector<8x128xf32>
    tpu.vector_store %arg4[%c0_16, %c0_17], %28 {strides = array<i32>} : memref<8x128xf32, #tpu.memory_space<vmem>>, vector<8x128xf32>,
    return
  }
  func.func @transform_0(%arg0: i32) -> (i32, i32) {
    %c0_i32 = arith.constant 0 : i32
    %c0_i32_0 = arith.constant 0 : i32
    return %arg0, %c0_i32 : i32, i32
  }
  func.func @transform_1(%arg0: i32) -> (i32, i32) {
    %c0_i32 = arith.constant 0 : i32
    %c0_i32_0 = arith.constant 0 : i32
    %c0_i32_1 = arith.constant 0 : i32
    return %c0_i32, %c0_i32_0 : i32, i32
  }
  func.func @transform_2(%arg0: i32) -> (i32, i32) {
    %c0_i32 = arith.constant 0 : i32
    %c0_i32_0 = arith.constant 0 : i32
    %c0_i32_1 = arith.constant 0 : i32
    return %c0_i32, %c0_i32_0 : i32, i32
  }
  func.func @transform_3(%arg0: i32) -> (i32, i32) {
    %c0_i32 = arith.constant 0 : i32
    %c0_i32_0 = arith.constant 0 : i32
    return %arg0, %c0_i32 : i32, i32
  }
}

</mosaic_0001>

<llo_original>
// kernel: tpu_custom_call.1
$region0: #{tpu_custom_call.1}
  #allocation0 [shape = 'u32[]', space=smem, size = 0x4, offset = 0x4, fixed_abs, tag = 'smem constant byte address 0x4 - core index']
  #allocation1 [shape = 'u32[72,128]{1,0:T(1,128)}', space=vmem, size = 0x9000, scoped, tag = 'internal scratch']
  %s0 = inlined_call_operand.hbm [shape: f32[8,128], index: 0, kind: input, shape index: {}]
  %s1 = inlined_call_operand.hbm [shape: bf16[512,512], index: 1, kind: input, shape index: {}]
  %s2 = inlined_call_operand.hbm [shape: bf16[512,512], index: 2, kind: input, shape index: {}]
  %s3 = inlined_call_operand.hbm [shape: f32[8,128], index: 3, kind: output, shape index: {}]
  %s4 = sld [smem:[#allocation0]]
  $region34: #{tpu_custom_call.1} parent=0
    _
  %s6 = ssub.s32 1, %s4
  %s7 = scalar_select 0, %s6, %s4
  $region1: #{tpu_custom_call.1} parent=0
    #allocation2 [shape = 'u8[4096]{0}', space=vmem, size = 0x1000, scoped, tag = 'input window, operand 0, single buffered']
    #allocation3 [shape = 's32[1]{0}', space=sflag, size = 0x4, scoped, tag = 'scoped memory for tpu_custom_call.1']
    #allocation4 [shape = 's32[1]{0}', space=sflag, size = 0x4, scoped, tag = 'scoped memory for tpu_custom_call.1']
    #allocation5 [shape = 'u8[524288]{0}', space=vmem, size = 0x80000, scoped, tag = 'input window, operand 1, single buffered']
    #allocation6 [shape = 's32[1]{0}', space=sflag, size = 0x4, scoped, tag = 'scoped memory for tpu_custom_call.1']
    #allocation7 [shape = 'u8[524288]{0}', space=vmem, size = 0x80000, scoped, tag = 'input window, operand 2, single buffered']
    #allocation8 [shape = 'u8[4096]{0}', space=vmem, size = 0x1000, scoped, tag = 'output window, operand 0, single buffered']
    %8 = vsyncpa [#allocation3], 0
    %9 = vsyncpa [#allocation6], 0
    %10 = vsyncpa [#allocation4], 0
    // Predicated region
    $region2: #{tpu_custom_call.1} parent=1 // pred_check
      _
    $region3: #{tpu_custom_call.1} parent=1 // pred_check_branch
      %12 = sbr.rel (0) target = $region5
    $region4: #{tpu_custom_call.1} parent=1 // pred_region
      %14 = vsyncadd [#allocation3], 0
      %s16 = sshll.u32 %s0, 4
      %s17 = int_to_ptr.hbm [resolvable:$true] %s16
      %s18 = sshll.u32 [#allocation2], 4
      %s19 = int_to_ptr.vmem [resolvable:$true] %s18
      %21 = dma.hbm_to_vmem [thread:$0]  %s17, 128, %s19, [#allocation3]
    $region5: #{tpu_custom_call.1} parent=1 // pred_fallthru
      _
    // Predicated region
    $region6: #{tpu_custom_call.1} parent=1 // pred_check
      _
    $region7: #{tpu_custom_call.1} parent=1 // pred_check_branch
      %23 = sbr.rel (0) target = $region9
    $region8: #{tpu_custom_call.1} parent=1 // pred_region
      %25 = vsyncadd [#allocation6], 0
      %s26 = sshll.u32 %s1, 4
      %s27 = int_to_ptr.hbm [resolvable:$true] %s26
      %s28 = sshll.u32 [#allocation5], 4
      %s29 = int_to_ptr.vmem [resolvable:$true] %s28
      %34 = dma.hbm_to_vmem [thread:$0]  %s27, 16384, %s29, [#allocation6], 256, 256, 16
    $region9: #{tpu_custom_call.1} parent=1 // pred_fallthru
      _
    // Predicated region
    $region10: #{tpu_custom_call.1} parent=1 // pred_check
      _
    $region11: #{tpu_custom_call.1} parent=1 // pred_check_branch
      %36 = sbr.rel (0) target = $region13
    $region12: #{tpu_custom_call.1} parent=1 // pred_region
      %38 = vsyncadd [#allocation6], 0
      %s39 = sshll.u32 %s2, 4
      %s40 = int_to_ptr.hbm [resolvable:$true] %s39
      %s41 = sshll.u32 [#allocation7], 4
      %s42 = int_to_ptr.vmem [resolvable:$true] %s41
      %47 = dma.hbm_to_vmem [thread:$0]  %s40, 16384, %s42, [#allocation6], 256, 256, 16
    $region13: #{tpu_custom_call.1} parent=1 // pred_fallthru
      _
    // Predicated region
    $region14: #{tpu_custom_call.1} parent=1 // pred_check
      _
    $region15: #{tpu_custom_call.1} parent=1 // pred_check_branch
      %49 = sbr.rel (0) target = $region17
    $region16: #{tpu_custom_call.1} parent=1 // pred_region
      %51 = dma.done [#allocation3], 128
    $region17: #{tpu_custom_call.1} parent=1 // pred_fallthru
      _
    // Predicated region
    $region18: #{tpu_custom_call.1} parent=1 // pred_check
      _
    $region19: #{tpu_custom_call.1} parent=1 // pred_check_branch
      %53 = sbr.rel (0) target = $region21
    $region20: #{tpu_custom_call.1} parent=1 // pred_region
      %55 = dma.done [#allocation6], 16384
    $region21: #{tpu_custom_call.1} parent=1 // pred_fallthru
      _
    // Predicated region
    $region22: #{tpu_custom_call.1} parent=1 // pred_check
      _
    $region23: #{tpu_custom_call.1} parent=1 // pred_check_branch
      %57 = sbr.rel (0) target = $region25
    $region24: #{tpu_custom_call.1} parent=1 // pred_region
      %59 = dma.done [#allocation6], 16384
    $region25: #{tpu_custom_call.1} parent=1 // pred_fallthru
      _
    %v60 = vld [vmem:[#allocation5] sm:$0xff]
    %v61 = vld [vmem:[#allocation5 + $0x8] sm:$0xff]
    %v62 = vld [vmem:[#allocation5 + $0x10] sm:$0xff]
    %v63 = vld [vmem:[#allocation5 + $0x18] sm:$0xff]
    %v64 = vld [vmem:[#allocation5 + $0x20] sm:$0xff]
    %v65 = vld [vmem:[#allocation5 + $0x28] sm:$0xff]
    %v66 = vld [vmem:[#allocation5 + $0x30] sm:$0xff]
    %v67 = vld [vmem:[#allocation5 + $0x38] sm:$0xff]
    %v68 = vld [vmem:[#allocation5 + $0x40] sm:$0xff]
    %v69 = vld [vmem:[#allocation5 + $0x48] sm:$0xff]
    %v70 = vld [vmem:[#allocation5 + $0x50] sm:$0xff]
    %v71 = vld [vmem:[#allocation5 + $0x58] sm:$0xff]
    %v72 = vld [vmem:[#allocation5 + $0x60] sm:$0xff]
    %v73 = vld [vmem:[#allocation5 + $0x68] sm:$0xff]
    %v74 = vld [vmem:[#allocation5 + $0x70] sm:$0xff]
    %v75 = vld [vmem:[#allocation5 + $0x78] sm:$0xff]
    %v76 = vld [vmem:[#allocation5 + $0x80] sm:$0xff]
    %v77 = vld [vmem:[#allocation5 + $0x88] sm:$0xff]
    %v78 = vld [vmem:[#allocation5 + $0x90] sm:$0xff]
    %v79 = vld [vmem:[#allocation5 + $0x98] sm:$0xff]
    %v80 = vld [vmem:[#allocation5 + $0xa0] sm:$0xff]
    %v81 = vld [vmem:[#allocation5 + $0xa8] sm:$0xff]
    %v82 = vld [vmem:[#allocation5 + $0xb0] sm:$0xff]
    %v83 = vld [vmem:[#allocation5 + $0xb8] sm:$0xff]
    %v84 = vld [vmem:[#allocation5 + $0xc0] sm:$0xff]
    %v85 = vld [vmem:[#allocation5 + $0xc8] sm:$0xff]
    %v86 = vld [vmem:[#allocation5 + $0xd0] sm:$0xff]
    %v87 = vld [vmem:[#allocation5 + $0xd8] sm:$0xff]
    %v88 = vld [vmem:[#allocation5 + $0xe0] sm:$0xff]
    %v89 = vld [vmem:[#allocation5 + $0xe8] sm:$0xff]
    %v90 = vld [vmem:[#allocation5 + $0xf0] sm:$0xff]
    %v91 = vld [vmem:[#allocation5 + $0xf8] sm:$0xff]
    %v92 = vld [vmem:[#allocation5 + $0x100] sm:$0xff]
    %v93 = vld [vmem:[#allocation5 + $0x108] sm:$0xff]
    %v94 = vld [vmem:[#allocation5 + $0x110] sm:$0xff]
    %v95 = vld [vmem:[#allocation5 + $0x118] sm:$0xff]
    %v96 = vld [vmem:[#allocation5 + $0x120] sm:$0xff]
    %v97 = vld [vmem:[#allocation5 + $0x128] sm:$0xff]
    %v98 = vld [vmem:[#allocation5 + $0x130] sm:$0xff]
    %v99 = vld [vmem:[#allocation5 + $0x138] sm:$0xff]
    %v100 = vld [vmem:[#allocation5 + $0x140] sm:$0xff]
    %v101 = vld [vmem:[#allocation5 + $0x148] sm:$0xff]
    %v102 = vld [vmem:[#allocation5 + $0x150] sm:$0xff]
    %v103 = vld [vmem:[#allocation5 + $0x158] sm:$0xff]
    %v104 = vld [vmem:[#allocation5 + $0x160] sm:$0xff]
    %v105 = vld [vmem:[#allocation5 + $0x168] sm:$0xff]
    %v106 = vld [vmem:[#allocation5 + $0x170] sm:$0xff]
    %v107 = vld [vmem:[#allocation5 + $0x178] sm:$0xff]
    %v108 = vld [vmem:[#allocation5 + $0x180] sm:$0xff]
    %v109 = vld [vmem:[#allocation5 + $0x188] sm:$0xff]
    %v110 = vld [vmem:[#allocation5 + $0x190] sm:$0xff]
    %v111 = vld [vmem:[#allocation5 + $0x198] sm:$0xff]
    %v112 = vld [vmem:[#allocation5 + $0x1a0] sm:$0xff]
    %v113 = vld [vmem:[#allocation5 + $0x1a8] sm:$0xff]
    %v114 = vld [vmem:[#allocation5 + $0x1b0] sm:$0xff]
    %v115 = vld [vmem:[#allocation5 + $0x1b8] sm:$0xff]
    %v116 = vld [vmem:[#allocation5 + $0x1c0] sm:$0xff]
    %v117 = vld [vmem:[#allocation5 + $0x1c8] sm:$0xff]
    %v118 = vld [vmem:[#allocation5 + $0x1d0] sm:$0xff]
    %v119 = vld [vmem:[#allocation5 + $0x1d8] sm:$0xff]
    %v120 = vld [vmem:[#allocation5 + $0x1e0] sm:$0xff]
    %v121 = vld [vmem:[#allocation5 + $0x1e8] sm:$0xff]
    %v122 = vld [vmem:[#allocation5 + $0x1f0] sm:$0xff]
    %v123 = vld [vmem:[#allocation5 + $0x1f8] sm:$0xff]
    %v124 = vld [vmem:[#allocation5 + $0x200] sm:$0xff]
    %v125 = vld [vmem:[#allocation5 + $0x208] sm:$0xff]
    %v126 = vld [vmem:[#allocation5 + $0x210] sm:$0xff]
    %v127 = vld [vmem:[#allocation5 + $0x218] sm:$0xff]
    %v128 = vld [vmem:[#allocation5 + $0x220] sm:$0xff]
    %v129 = vld [vmem:[#allocation5 + $0x228] sm:$0xff]
    %v130 = vld [vmem:[#allocation5 + $0x230] sm:$0xff]
    %v131 = vld [vmem:[#allocation5 + $0x238] sm:$0xff]
    %v132 = vld [vmem:[#allocation5 + $0x240] sm:$0xff]
    %v133 = vld [vmem:[#allocation5 + $0x248] sm:$0xff]
    %v134 = vld [vmem:[#allocation5 + $0x250] sm:$0xff]
    %v135 = vld [vmem:[#allocation5 + $0x258] sm:$0xff]
    %v136 = vld [vmem:[#allocation5 + $0x260] sm:$0xff]
    %v137 = vld [vmem:[#allocation5 + $0x268] sm:$0xff]
    %v138 = vld [vmem:[#allocation5 + $0x270] sm:$0xff]
    %v139 = vld [vmem:[#allocation5 + $0x278] sm:$0xff]
    %v140 = vld [vmem:[#allocation5 + $0x280] sm:$0xff]
    %v141 = vld [vmem:[#allocation5 + $0x288] sm:$0xff]
    %v142 = vld [vmem:[#allocation5 + $0x290] sm:$0xff]
    %v143 = vld [vmem:[#allocation5 + $0x298] sm:$0xff]
    %v144 = vld [vmem:[#allocation5 + $0x2a0] sm:$0xff]
    %v145 = vld [vmem:[#allocation5 + $0x2a8] sm:$0xff]
    %v146 = vld [vmem:[#allocation5 + $0x2b0] sm:$0xff]
    %v147 = vld [vmem:[#allocation5 + $0x2b8] sm:$0xff]
    %v148 = vld [vmem:[#allocation5 + $0x2c0] sm:$0xff]
    %v149 = vld [vmem:[#allocation5 + $0x2c8] sm:$0xff]
    %v150 = vld [vmem:[#allocation5 + $0x2d0] sm:$0xff]
    %v151 = vld [vmem:[#allocation5 + $0x2d8] sm:$0xff]
    %v152 = vld [vmem:[#allocation5 + $0x2e0] sm:$0xff]
    %v153 = vld [vmem:[#allocation5 + $0x2e8] sm:$0xff]
    %v154 = vld [vmem:[#allocation5 + $0x2f0] sm:$0xff]
    %v155 = vld [vmem:[#allocation5 + $0x2f8] sm:$0xff]
    %v156 = vld [vmem:[#allocation5 + $0x300] sm:$0xff]
    %v157 = vld [vmem:[#allocation5 + $0x308] sm:$0xff]
    %v158 = vld [vmem:[#allocation5 + $0x310] sm:$0xff]
    %v159 = vld [vmem:[#allocation5 + $0x318] sm:$0xff]
    %v160 = vld [vmem:[#allocation5 + $0x320] sm:$0xff]
    %v161 = vld [vmem:[#allocation5 + $0x328] sm:$0xff]
    %v162 = vld [vmem:[#allocation5 + $0x330] sm:$0xff]
    %v163 = vld [vmem:[#allocation5 + $0x338] sm:$0xff]
    %v164 = vld [vmem:[#allocation5 + $0x340] sm:$0xff]
    %v165 = vld [vmem:[#allocation5 + $0x348] sm:$0xff]
    %v166 = vld [vmem:[#allocation5 + $0x350] sm:$0xff]
    %v167 = vld [vmem:[#allocation5 + $0x358] sm:$0xff]
    %v168 = vld [vmem:[#allocation5 + $0x360] sm:$0xff]
    %v169 = vld [vmem:[#allocation5 + $0x368] sm:$0xff]
    %v170 = vld [vmem:[#allocation5 + $0x370] sm:$0xff]
    %v171 = vld [vmem:[#allocation5 + $0x378] sm:$0xff]
    %v172 = vld [vmem:[#allocation5 + $0x380] sm:$0xff]
    %v173 = vld [vmem:[#allocation5 + $0x388] sm:$0xff]
    %v174 = vld [vmem:[#allocation5 + $0x390] sm:$0xff]
    %v175 = vld [vmem:[#allocation5 + $0x398] sm:$0xff]
    %v176 = vld [vmem:[#allocation5 + $0x3a0] sm:$0xff]
    %v177 = vld [vmem:[#allocation5 + $0x3a8] sm:$0xff]
    %v178 = vld [vmem:[#allocation5 + $0x3b0] sm:$0xff]
    %v179 = vld [vmem:[#allocation5 + $0x3b8] sm:$0xff]
    %v180 = vld [vmem:[#allocation5 + $0x3c0] sm:$0xff]
    %v181 = vld [vmem:[#allocation5 + $0x3c8] sm:$0xff]
    %v182 = vld [vmem:[#allocation5 + $0x3d0] sm:$0xff]
    %v183 = vld [vmem:[#allocation5 + $0x3d8] sm:$0xff]
    %v184 = vld [vmem:[#allocation5 + $0x3e0] sm:$0xff]
    %v185 = vld [vmem:[#allocation5 + $0x3e8] sm:$0xff]
    %v186 = vld [vmem:[#allocation5 + $0x3f0] sm:$0xff]
    %v187 = vld [vmem:[#allocation5 + $0x3f8] sm:$0xff]
    %v188 = vld [vmem:[#allocation7] sm:$0xff]
    %v189 = vld [vmem:[#allocation7 + $0x8] sm:$0xf]
    %v190 = vld [vmem:[#allocation7 + $0x10] sm:$0xff]
    %v191 = vld [vmem:[#allocation7 + $0x18] sm:$0xf]
    %v192 = vld [vmem:[#allocation7 + $0x20] sm:$0xff]
    %v193 = vld [vmem:[#allocation7 + $0x28] sm:$0xf]
    %v194 = vld [vmem:[#allocation7 + $0x30] sm:$0xff]
    %v195 = vld [vmem:[#allocation7 + $0x38] sm:$0xf]
    %v196 = vld [vmem:[#allocation7 + $0x40] sm:$0xff]
    %v197 = vld [vmem:[#allocation7 + $0x48] sm:$0xf]
    %v198 = vld [vmem:[#allocation7 + $0x50] sm:$0xff]
    %v199 = vld [vmem:[#allocation7 + $0x58] sm:$0xf]
    %v200 = vld [vmem:[#allocation7 + $0x60] sm:$0xff]
    %v201 = vld [vmem:[#allocation7 + $0x68] sm:$0xf]
    %v202 = vld [vmem:[#allocation7 + $0x70] sm:$0xff]
    %v203 = vld [vmem:[#allocation7 + $0x78] sm:$0xf]
    %v204 = vld [vmem:[#allocation7 + $0x80] sm:$0xff]
    %v205 = vld [vmem:[#allocation7 + $0x88] sm:$0xf]
    %v206 = vld [vmem:[#allocation7 + $0x90] sm:$0xff]
    %v207 = vld [vmem:[#allocation7 + $0x98] sm:$0xf]
    %v208 = vld [vmem:[#allocation7 + $0xa0] sm:$0xff]
    %v209 = vld [vmem:[#allocation7 + $0xa8] sm:$0xf]
    %v210 = vld [vmem:[#allocation7 + $0xb0] sm:$0xff]
    %v211 = vld [vmem:[#allocation7 + $0xb8] sm:$0xf]
    %v212 = vld [vmem:[#allocation7 + $0xc0] sm:$0xff]
    %v213 = vld [vmem:[#allocation7 + $0xc8] sm:$0xf]
    %v214 = vld [vmem:[#allocation7 + $0xd0] sm:$0xff]
    %v215 = vld [vmem:[#allocation7 + $0xd8] sm:$0xf]
    %v216 = vld [vmem:[#allocation7 + $0xe0] sm:$0xff]
    %v217 = vld [vmem:[#allocation7 + $0xe8] sm:$0xf]
    %v218 = vld [vmem:[#allocation7 + $0xf0] sm:$0xff]
    %v219 = vld [vmem:[#allocation7 + $0xf8] sm:$0xf]
    %v220 = vld [vmem:[#allocation7 + $0x100] sm:$0xff]
    %v221 = vld [vmem:[#allocation7 + $0x108] sm:$0xf]
    %v222 = vld [vmem:[#allocation7 + $0x110] sm:$0xff]
    %v223 = vld [vmem:[#allocation7 + $0x118] sm:$0xf]
    %v224 = vld [vmem:[#allocation7 + $0x120] sm:$0xff]
    %v225 = vld [vmem:[#allocation7 + $0x128] sm:$0xf]
    %v226 = vld [vmem:[#allocation7 + $0x130] sm:$0xff]
    %v227 = vld [vmem:[#allocation7 + $0x138] sm:$0xf]
    %v228 = vld [vmem:[#allocation7 + $0x140] sm:$0xff]
    %v229 = vld [vmem:[#allocation7 + $0x148] sm:$0xf]
    %v230 = vld [vmem:[#allocation7 + $0x150] sm:$0xff]
    %v231 = vld [vmem:[#allocation7 + $0x158] sm:$0xf]
    %v232 = vld [vmem:[#allocation7 + $0x160] sm:$0xff]
    %v233 = vld [vmem:[#allocation7 + $0x168] sm:$0xf]
    %v234 = vld [vmem:[#allocation7 + $0x170] sm:$0xff]
    %v235 = vld [vmem:[#allocation7 + $0x178] sm:$0xf]
    %v236 = vld [vmem:[#allocation7 + $0x180] sm:$0xff]
    %v237 = vld [vmem:[#allocation7 + $0x188] sm:$0xf]
    %v238 = vld [vmem:[#allocation7 + $0x190] sm:$0xff]
    %v239 = vld [vmem:[#allocation7 + $0x198] sm:$0xf]
    %v240 = vld [vmem:[#allocation7 + $0x1a0] sm:$0xff]
    %v241 = vld [vmem:[#allocation7 + $0x1a8] sm:$0xf]
    %v242 = vld [vmem:[#allocation7 + $0x1b0] sm:$0xff]
    %v243 = vld [vmem:[#allocation7 + $0x1b8] sm:$0xf]
    %v244 = vld [vmem:[#allocation7 + $0x1c0] sm:$0xff]
    %v245 = vld [vmem:[#allocation7 + $0x1c8] sm:$0xf]
    %v246 = vld [vmem:[#allocation7 + $0x1d0] sm:$0xff]
    %v247 = vld [vmem:[#allocation7 + $0x1d8] sm:$0xf]
    %v248 = vld [vmem:[#allocation7 + $0x1e0] sm:$0xff]
    %v249 = vld [vmem:[#allocation7 + $0x1e8] sm:$0xf]
    %v250 = vld [vmem:[#allocation7 + $0x1f0] sm:$0xff]
    %v251 = vld [vmem:[#allocation7 + $0x1f8] sm:$0xf]
    %v252 = vld [vmem:[#allocation7 + $0x200] sm:$0xff]
    %v253 = vld [vmem:[#allocation7 + $0x208] sm:$0xf]
    %v254 = vld [vmem:[#allocation7 + $0x210] sm:$0xff]
    %v255 = vld [vmem:[#allocation7 + $0x218] sm:$0xf]
    %v256 = vld [vmem:[#allocation7 + $0x220] sm:$0xff]
    %v257 = vld [vmem:[#allocation7 + $0x228] sm:$0xf]
    %v258 = vld [vmem:[#allocation7 + $0x230] sm:$0xff]
    %v259 = vld [vmem:[#allocation7 + $0x238] sm:$0xf]
    %v260 = vld [vmem:[#allocation7 + $0x240] sm:$0xff]
    %v261 = vld [vmem:[#allocation7 + $0x248] sm:$0xf]
    %v262 = vld [vmem:[#allocation7 + $0x250] sm:$0xff]
    %v263 = vld [vmem:[#allocation7 + $0x258] sm:$0xf]
    %v264 = vld [vmem:[#allocation7 + $0x260] sm:$0xff]
    %v265 = vld [vmem:[#allocation7 + $0x268] sm:$0xf]
    %v266 = vld [vmem:[#allocation7 + $0x270] sm:$0xff]
    %v267 = vld [vmem:[#allocation7 + $0x278] sm:$0xf]
    %v268 = vld [vmem:[#allocation7 + $0x280] sm:$0xff]
    %v269 = vld [vmem:[#allocation7 + $0x288] sm:$0xf]
    %v270 = vld [vmem:[#allocation7 + $0x290] sm:$0xff]
    %v271 = vld [vmem:[#allocation7 + $0x298] sm:$0xf]
    %v272 = vld [vmem:[#allocation7 + $0x2a0] sm:$0xff]
    %v273 = vld [vmem:[#allocation7 + $0x2a8] sm:$0xf]
    %v274 = vld [vmem:[#allocation7 + $0x2b0] sm:$0xff]
    %v275 = vld [vmem:[#allocation7 + $0x2b8] sm:$0xf]
    %v276 = vld [vmem:[#allocation7 + $0x2c0] sm:$0xff]
    %v277 = vld [vmem:[#allocation7 + $0x2c8] sm:$0xf]
    %v278 = vld [vmem:[#allocation7 + $0x2d0] sm:$0xff]
    %v279 = vld [vmem:[#allocation7 + $0x2d8] sm:$0xf]
    %v280 = vld [vmem:[#allocation7 + $0x2e0] sm:$0xff]
    %v281 = vld [vmem:[#allocation7 + $0x2e8] sm:$0xf]
    %v282 = vld [vmem:[#allocation7 + $0x2f0] sm:$0xff]
    %v283 = vld [vmem:[#allocation7 + $0x2f8] sm:$0xf]
    %v284 = vld [vmem:[#allocation7 + $0x300] sm:$0xff]
    %v285 = vld [vmem:[#allocation7 + $0x308] sm:$0xf]
    %v286 = vld [vmem:[#allocation7 + $0x310] sm:$0xff]
    %v287 = vld [vmem:[#allocation7 + $0x318] sm:$0xf]
    %v288 = vld [vmem:[#allocation7 + $0x320] sm:$0xff]
    %v289 = vld [vmem:[#allocation7 + $0x328] sm:$0xf]
    %v290 = vld [vmem:[#allocation7 + $0x330] sm:$0xff]
    %v291 = vld [vmem:[#allocation7 + $0x338] sm:$0xf]
    %v292 = vld [vmem:[#allocation7 + $0x340] sm:$0xff]
    %v293 = vld [vmem:[#allocation7 + $0x348] sm:$0xf]
    %v294 = vld [vmem:[#allocation7 + $0x350] sm:$0xff]
    %v295 = vld [vmem:[#allocation7 + $0x358] sm:$0xf]
    %v296 = vld [vmem:[#allocation7 + $0x360] sm:$0xff]
    %v297 = vld [vmem:[#allocation7 + $0x368] sm:$0xf]
    %v298 = vld [vmem:[#allocation7 + $0x370] sm:$0xff]
    %v299 = vld [vmem:[#allocation7 + $0x378] sm:$0xf]
    %v300 = vld [vmem:[#allocation7 + $0x380] sm:$0xff]
    %v301 = vld [vmem:[#allocation7 + $0x388] sm:$0xf]
    %v302 = vld [vmem:[#allocation7 + $0x390] sm:$0xff]
    %v303 = vld [vmem:[#allocation7 + $0x398] sm:$0xf]
    %v304 = vld [vmem:[#allocation7 + $0x3a0] sm:$0xff]
    %v305 = vld [vmem:[#allocation7 + $0x3a8] sm:$0xf]
    %v306 = vld [vmem:[#allocation7 + $0x3b0] sm:$0xff]
    %v307 = vld [vmem:[#allocation7 + $0x3b8] sm:$0xf]
    %v308 = vld [vmem:[#allocation7 + $0x3c0] sm:$0xff]
    %v309 = vld [vmem:[#allocation7 + $0x3c8] sm:$0xf]
    %v310 = vld [vmem:[#allocation7 + $0x3d0] sm:$0xff]
    %v311 = vld [vmem:[#allocation7 + $0x3d8] sm:$0xf]
    %v312 = vld [vmem:[#allocation7 + $0x3e0] sm:$0xff]
    %v313 = vld [vmem:[#allocation7 + $0x3e8] sm:$0xf]
    %v314 = vld [vmem:[#allocation7 + $0x3f0] sm:$0xff]
    %v315 = vld [vmem:[#allocation7 + $0x3f8] sm:$0xf]
    %v316 = vld [vmem:[#allocation7 + $0xc] sm:$0xf]
    %v317 = vld [vmem:[#allocation7 + $0x1c] sm:$0xf]
    %v318 = vld [vmem:[#allocation7 + $0x2c] sm:$0xf]
    %v319 = vld [vmem:[#allocation7 + $0x3c] sm:$0xf]
    %v320 = vld [vmem:[#allocation7 + $0x4c] sm:$0xf]
    %v321 = vld [vmem:[#allocation7 + $0x5c] sm:$0xf]
    %v322 = vld [vmem:[#allocation7 + $0x6c] sm:$0xf]
    %v323 = vld [vmem:[#allocation7 + $0x7c] sm:$0xf]
    %v324 = vld [vmem:[#allocation7 + $0x8c] sm:$0xf]
    %v325 = vld [vmem:[#allocation7 + $0x9c] sm:$0xf]
    %v326 = vld [vmem:[#allocation7 + $0xac] sm:$0xf]
    %v327 = vld [vmem:[#allocation7 + $0xbc] sm:$0xf]
    %v328 = vld [vmem:[#allocation7 + $0xcc] sm:$0xf]
    %v329 = vld [vmem:[#allocation7 + $0xdc] sm:$0xf]
    %v330 = vld [vmem:[#allocation7 + $0xec] sm:$0xf]
    %v331 = vld [vmem:[#allocation7 + $0xfc] sm:$0xf]
    %v332 = vld [vmem:[#allocation7 + $0x10c] sm:$0xf]
    %v333 = vld [vmem:[#allocation7 + $0x11c] sm:$0xf]
    %v334 = vld [vmem:[#allocation7 + $0x12c] sm:$0xf]
    %v335 = vld [vmem:[#allocation7 + $0x13c] sm:$0xf]
    %v336 = vld [vmem:[#allocation7 + $0x14c] sm:$0xf]
    %v337 = vld [vmem:[#allocation7 + $0x15c] sm:$0xf]
    %v338 = vld [vmem:[#allocation7 + $0x16c] sm:$0xf]
    %v339 = vld [vmem:[#allocation7 + $0x17c] sm:$0xf]
    %v340 = vld [vmem:[#allocation7 + $0x18c] sm:$0xf]
    %v341 = vld [vmem:[#allocation7 + $0x19c] sm:$0xf]
    %v342 = vld [vmem:[#allocation7 + $0x1ac] sm:$0xf]
    %v343 = vld [vmem:[#allocation7 + $0x1bc] sm:$0xf]
    %v344 = vld [vmem:[#allocation7 + $0x1cc] sm:$0xf]
    %v345 = vld [vmem:[#allocation7 + $0x1dc] sm:$0xf]
    %v346 = vld [vmem:[#allocation7 + $0x1ec] sm:$0xf]
    %v347 = vld [vmem:[#allocation7 + $0x1fc] sm:$0xf]
    %v348 = vld [vmem:[#allocation7 + $0x20c] sm:$0xf]
    %v349 = vld [vmem:[#allocation7 + $0x21c] sm:$0xf]
    %v350 = vld [vmem:[#allocation7 + $0x22c] sm:$0xf]
    %v351 = vld [vmem:[#allocation7 + $0x23c] sm:$0xf]
    %v352 = vld [vmem:[#allocation7 + $0x24c] sm:$0xf]
    %v353 = vld [vmem:[#allocation7 + $0x25c] sm:$0xf]
    %v354 = vld [vmem:[#allocation7 + $0x26c] sm:$0xf]
    %v355 = vld [vmem:[#allocation7 + $0x27c] sm:$0xf]
    %v356 = vld [vmem:[#allocation7 + $0x28c] sm:$0xf]
    %v357 = vld [vmem:[#allocation7 + $0x29c] sm:$0xf]
    %v358 = vld [vmem:[#allocation7 + $0x2ac] sm:$0xf]
    %v359 = vld [vmem:[#allocation7 + $0x2bc] sm:$0xf]
    %v360 = vld [vmem:[#allocation7 + $0x2cc] sm:$0xf]
    %v361 = vld [vmem:[#allocation7 + $0x2dc] sm:$0xf]
    %v362 = vld [vmem:[#allocation7 + $0x2ec] sm:$0xf]
    %v363 = vld [vmem:[#allocation7 + $0x2fc] sm:$0xf]
    %v364 = vld [vmem:[#allocation7 + $0x30c] sm:$0xf]
    %v365 = vld [vmem:[#allocation7 + $0x31c] sm:$0xf]
    %v366 = vld [vmem:[#allocation7 + $0x32c] sm:$0xf]
    %v367 = vld [vmem:[#allocation7 + $0x33c] sm:$0xf]
    %v368 = vld [vmem:[#allocation7 + $0x34c] sm:$0xf]
    %v369 = vld [vmem:[#allocation7 + $0x35c] sm:$0xf]
    %v370 = vld [vmem:[#allocation7 + $0x36c] sm:$0xf]
    %v371 = vld [vmem:[#allocation7 + $0x37c] sm:$0xf]
    %v372 = vld [vmem:[#allocation7 + $0x38c] sm:$0xf]
    %v373 = vld [vmem:[#allocation7 + $0x39c] sm:$0xf]
    %v374 = vld [vmem:[#allocation7 + $0x3ac] sm:$0xf]
    %v375 = vld [vmem:[#allocation7 + $0x3bc] sm:$0xf]
    %v376 = vld [vmem:[#allocation7 + $0x3cc] sm:$0xf]
    %v377 = vld [vmem:[#allocation7 + $0x3dc] sm:$0xf]
    %v378 = vld [vmem:[#allocation7 + $0x3ec] sm:$0xf]
    %v379 = vld [vmem:[#allocation7 + $0x3fc] sm:$0xf]
    %v380 = vld [vmem:[#allocation2] sm:$0xff]
    %v381 = vpack.c.bf16 %v380, %v380
    %v414 = vunpack.c.l.b16 %v60
    %v415 = vunpack.c.h.b16 %v60
    %v416 = vunpack.c.l.b16 %v61
    %v417 = vunpack.c.h.b16 %v61
    %v418 = vunpack.c.l.b16 %v62
    %v419 = vunpack.c.h.b16 %v62
    %v420 = vunpack.c.l.b16 %v63
    %v421 = vunpack.c.h.b16 %v63
    %v422 = vunpack.c.l.b16 %v64
    %v423 = vunpack.c.h.b16 %v64
    %v424 = vunpack.c.l.b16 %v65
    %v425 = vunpack.c.h.b16 %v65
    %v426 = vunpack.c.l.b16 %v66
    %v427 = vunpack.c.h.b16 %v66
    %v428 = vunpack.c.l.b16 %v67
    %v429 = vunpack.c.h.b16 %v67
    %v430 = vunpack.c.l.b16 %v68
    %v431 = vunpack.c.h.b16 %v68
    %v432 = vunpack.c.l.b16 %v69
    %v433 = vunpack.c.h.b16 %v69
    %v434 = vunpack.c.l.b16 %v70
    %v435 = vunpack.c.h.b16 %v70
    %v436 = vunpack.c.l.b16 %v71
    %v437 = vunpack.c.h.b16 %v71
    %v438 = vunpack.c.l.b16 %v72
    %v439 = vunpack.c.h.b16 %v72
    %v440 = vunpack.c.l.b16 %v73
    %v441 = vunpack.c.h.b16 %v73
    %v442 = vunpack.c.l.b16 %v74
    %v443 = vunpack.c.h.b16 %v74
    %v444 = vunpack.c.l.b16 %v75
    %v445 = vunpack.c.h.b16 %v75
    %v446 = vunpack.c.l.b16 %v76
    %v447 = vunpack.c.h.b16 %v76
    %v448 = vunpack.c.l.b16 %v77
    %v449 = vunpack.c.h.b16 %v77
    %v450 = vunpack.c.l.b16 %v78
    %v451 = vunpack.c.h.b16 %v78
    %v452 = vunpack.c.l.b16 %v79
    %v453 = vunpack.c.h.b16 %v79
    %v454 = vunpack.c.l.b16 %v80
    %v455 = vunpack.c.h.b16 %v80
    %v456 = vunpack.c.l.b16 %v81
    %v457 = vunpack.c.h.b16 %v81
    %v458 = vunpack.c.l.b16 %v82
    %v459 = vunpack.c.h.b16 %v82
    %v460 = vunpack.c.l.b16 %v83
    %v461 = vunpack.c.h.b16 %v83
    %v462 = vunpack.c.l.b16 %v84
    %v463 = vunpack.c.h.b16 %v84
    %v464 = vunpack.c.l.b16 %v85
    %v465 = vunpack.c.h.b16 %v85
    %v466 = vunpack.c.l.b16 %v86
    %v467 = vunpack.c.h.b16 %v86
    %v468 = vunpack.c.l.b16 %v87
    %v469 = vunpack.c.h.b16 %v87
    %v470 = vunpack.c.l.b16 %v88
    %v471 = vunpack.c.h.b16 %v88
    %v472 = vunpack.c.l.b16 %v89
    %v473 = vunpack.c.h.b16 %v89
    %v474 = vunpack.c.l.b16 %v90
    %v475 = vunpack.c.h.b16 %v90
    %v476 = vunpack.c.l.b16 %v91
    %v477 = vunpack.c.h.b16 %v91
    %v478 = vpack.c.b16 %v418, %v414
    %v479 = vpack.c.b16 %v419, %v415
    %v480 = vpack.c.b16 %v420, %v416
    %v481 = vpack.c.b16 %v421, %v417
    %v482 = vpack.c.b16 %v426, %v422
    %v483 = vpack.c.b16 %v427, %v423
    %v484 = vpack.c.b16 %v428, %v424
    %v485 = vpack.c.b16 %v429, %v425
    %v486 = vpack.c.b16 %v434, %v430
    %v487 = vpack.c.b16 %v435, %v431
    %v488 = vpack.c.b16 %v436, %v432
    %v489 = vpack.c.b16 %v437, %v433
    %v490 = vpack.c.b16 %v442, %v438
    %v491 = vpack.c.b16 %v443, %v439
    %v492 = vpack.c.b16 %v444, %v440
    %v493 = vpack.c.b16 %v445, %v441
    %v494 = vpack.c.b16 %v450, %v446
    %v495 = vpack.c.b16 %v451, %v447
    %v496 = vpack.c.b16 %v452, %v448
    %v497 = vpack.c.b16 %v453, %v449
    %v498 = vpack.c.b16 %v458, %v454
    %v499 = vpack.c.b16 %v459, %v455
    %v500 = vpack.c.b16 %v460, %v456
    %v501 = vpack.c.b16 %v461, %v457
    %v502 = vpack.c.b16 %v466, %v462
    %v503 = vpack.c.b16 %v467, %v463
    %v504 = vpack.c.b16 %v468, %v464
    %v505 = vpack.c.b16 %v469, %v465
    %v506 = vpack.c.b16 %v474, %v470
    %v507 = vpack.c.b16 %v475, %v471
    %v508 = vpack.c.b16 %v476, %v472
    %v509 = vpack.c.b16 %v477, %v473
    %542 = vmatpush.bf16.msra.mxu0 %v506
    %543 = vmatpush.bf16.msra.mxu0 %v502
    %544 = vmatpush.bf16.msra.mxu0 %v498
    %545 = vmatpush.bf16.msra.mxu0 %v494
    %546 = vmatpush.bf16.msra.mxu0 %v490
    %547 = vmatpush.bf16.msra.mxu0 %v486
    %548 = vmatpush.bf16.msra.mxu0 %v482
    %549 = vmatpush.bf16.msra.mxu0 %v478
    %550 = vmatmul.bf16.gmra.mxu0 %v381
    %v551 = vpop.f32.mrf.mxu0
    %v552 = vadd.f32 0.0, %v551
    %v553 = vpop.f32.mrf.mxu0
    %554 = vdwg.mxu0
    %555 = vmatpush.bf16.msra.mxu0 %v507
    %556 = vmatpush.bf16.msra.mxu0 %v503
    %557 = vmatpush.bf16.msra.mxu0 %v499
    %558 = vmatpush.bf16.msra.mxu0 %v495
    %559 = vmatpush.bf16.msra.mxu0 %v491
    %560 = vmatpush.bf16.msra.mxu0 %v487
    %561 = vmatpush.bf16.msra.mxu0 %v483
    %562 = vmatpush.bf16.msra.mxu0 %v479
    %563 = vmatmul.bf16.gmra.mxu0 %v381
    %v564 = vpop.f32.mrf.mxu0
    %v565 = vadd.f32 0.0, %v564
    %v566 = vpop.f32.mrf.mxu0
    %567 = vdwg.mxu0
    %568 = vmatpush.bf16.msra.mxu0 %v508
    %569 = vmatpush.bf16.msra.mxu0 %v504
    %570 = vmatpush.bf16.msra.mxu0 %v500
    %571 = vmatpush.bf16.msra.mxu0 %v496
    %572 = vmatpush.bf16.msra.mxu0 %v492
    %573 = vmatpush.bf16.msra.mxu0 %v488
    %574 = vmatpush.bf16.msra.mxu0 %v484
    %575 = vmatpush.bf16.msra.mxu0 %v480
    %576 = vmatmul.bf16.gmra.mxu0 %v381
    %v577 = vpop.f32.mrf.mxu0
    %v578 = vadd.f32 0.0, %v577
    %v579 = vpop.f32.mrf.mxu0
    %580 = vdwg.mxu0
    %581 = vmatpush.bf16.msra.mxu0 %v509
    %582 = vmatpush.bf16.msra.mxu0 %v505
    %583 = vmatpush.bf16.msra.mxu0 %v501
    %584 = vmatpush.bf16.msra.mxu0 %v497
    %585 = vmatpush.bf16.msra.mxu0 %v493
    %586 = vmatpush.bf16.msra.mxu0 %v489
    %587 = vmatpush.bf16.msra.mxu0 %v485
    %588 = vmatpush.bf16.msra.mxu0 %v481
    %589 = vmatmul.bf16.gmra.mxu0 %v381
    %v590 = vpop.f32.mrf.mxu0
    %v591 = vadd.f32 0.0, %v590
    %v592 = vpop.f32.mrf.mxu0
    %593 = vdwg.mxu0
    %vm594 = vcmp.ge.f32.partialorder %v552, 0.0
    %vm595 = vcmp.ge.f32.partialorder %v565, 0.0
    %vm596 = vcmp.ge.f32.partialorder %v578, 0.0
    %vm597 = vcmp.ge.f32.partialorder %v591, 0.0
    %v598 = vmul.f32 %v552, 0.01
    %v599 = vmul.f32 %v565, 0.01
    %v600 = vmul.f32 %v578, 0.01
    %v601 = vmul.f32 %v591, 0.01
    %v602 = vsel %vm594, %v552, %v598
    %v603 = vsel %vm595, %v565, %v599
    %v604 = vsel %vm596, %v578, %v600
    %v605 = vsel %vm597, %v591, %v601
    %v606 = vpack.c.bf16 %v602, %v602
    %v607 = vpack.c.bf16 %v603, %v603
    %v608 = vpack.c.bf16 %v604, %v604
    %v609 = vpack.c.bf16 %v605, %v605
    %v738 = vunpack.c.l.b16 %v188
    %v739 = vunpack.c.h.b16 %v188
    %v740 = vunpack.c.l.b16 %v189
    %v741 = vunpack.c.l.b16 %v190
    %v742 = vunpack.c.h.b16 %v190
    %v743 = vunpack.c.l.b16 %v191
    %v744 = vunpack.c.l.b16 %v192
    %v745 = vunpack.c.h.b16 %v192
    %v746 = vunpack.c.l.b16 %v193
    %v747 = vunpack.c.l.b16 %v194
    %v748 = vunpack.c.h.b16 %v194
    %v749 = vunpack.c.l.b16 %v195
    %v750 = vunpack.c.l.b16 %v196
    %v751 = vunpack.c.h.b16 %v196
    %v752 = vunpack.c.l.b16 %v197
    %v753 = vunpack.c.l.b16 %v198
    %v754 = vunpack.c.h.b16 %v198
    %v755 = vunpack.c.l.b16 %v199
    %v756 = vunpack.c.l.b16 %v200
    %v757 = vunpack.c.h.b16 %v200
    %v758 = vunpack.c.l.b16 %v201
    %v759 = vunpack.c.l.b16 %v202
    %v760 = vunpack.c.h.b16 %v202
    %v761 = vunpack.c.l.b16 %v203
    %v762 = vunpack.c.l.b16 %v204
    %v763 = vunpack.c.h.b16 %v204
    %v764 = vunpack.c.l.b16 %v205
    %v765 = vunpack.c.l.b16 %v206
    %v766 = vunpack.c.h.b16 %v206
    %v767 = vunpack.c.l.b16 %v207
    %v768 = vunpack.c.l.b16 %v208
    %v769 = vunpack.c.h.b16 %v208
    %v770 = vunpack.c.l.b16 %v209
    %v771 = vunpack.c.l.b16 %v210
    %v772 = vunpack.c.h.b16 %v210
    %v773 = vunpack.c.l.b16 %v211
    %v774 = vunpack.c.l.b16 %v212
    %v775 = vunpack.c.h.b16 %v212
    %v776 = vunpack.c.l.b16 %v213
    %v777 = vunpack.c.l.b16 %v214
    %v778 = vunpack.c.h.b16 %v214
    %v779 = vunpack.c.l.b16 %v215
    %v780 = vunpack.c.l.b16 %v216
    %v781 = vunpack.c.h.b16 %v216
    %v782 = vunpack.c.l.b16 %v217
    %v783 = vunpack.c.l.b16 %v218
    %v784 = vunpack.c.h.b16 %v218
    %v785 = vunpack.c.l.b16 %v219
    %v786 = vunpack.c.l.b16 %v220
    %v787 = vunpack.c.h.b16 %v220
    %v788 = vunpack.c.l.b16 %v221
    %v789 = vunpack.c.l.b16 %v222
    %v790 = vunpack.c.h.b16 %v222
    %v791 = vunpack.c.l.b16 %v223
    %v792 = vunpack.c.l.b16 %v224
    %v793 = vunpack.c.h.b16 %v224
    %v794 = vunpack.c.l.b16 %v225
    %v795 = vunpack.c.l.b16 %v226
    %v796 = vunpack.c.h.b16 %v226
    %v797 = vunpack.c.l.b16 %v227
    %v798 = vunpack.c.l.b16 %v228
    %v799 = vunpack.c.h.b16 %v228
    %v800 = vunpack.c.l.b16 %v229
    %v801 = vunpack.c.l.b16 %v230
    %v802 = vunpack.c.h.b16 %v230
    %v803 = vunpack.c.l.b16 %v231
    %v804 = vunpack.c.l.b16 %v232
    %v805 = vunpack.c.h.b16 %v232
    %v806 = vunpack.c.l.b16 %v233
    %v807 = vunpack.c.l.b16 %v234
    %v808 = vunpack.c.h.b16 %v234
    %v809 = vunpack.c.l.b16 %v235
    %v810 = vunpack.c.l.b16 %v236
    %v811 = vunpack.c.h.b16 %v236
    %v812 = vunpack.c.l.b16 %v237
    %v813 = vunpack.c.l.b16 %v238
    %v814 = vunpack.c.h.b16 %v238
    %v815 = vunpack.c.l.b16 %v239
    %v816 = vunpack.c.l.b16 %v240
    %v817 = vunpack.c.h.b16 %v240
    %v818 = vunpack.c.l.b16 %v241
    %v819 = vunpack.c.l.b16 %v242
    %v820 = vunpack.c.h.b16 %v242
    %v821 = vunpack.c.l.b16 %v243
    %v822 = vunpack.c.l.b16 %v244
    %v823 = vunpack.c.h.b16 %v244
    %v824 = vunpack.c.l.b16 %v245
    %v825 = vunpack.c.l.b16 %v246
    %v826 = vunpack.c.h.b16 %v246
    %v827 = vunpack.c.l.b16 %v247
    %v828 = vunpack.c.l.b16 %v248
    %v829 = vunpack.c.h.b16 %v248
    %v830 = vunpack.c.l.b16 %v249
    %v831 = vunpack.c.l.b16 %v250
    %v832 = vunpack.c.h.b16 %v250
    %v833 = vunpack.c.l.b16 %v251
    %v834 = vunpack.c.l.b16 %v252
    %v835 = vunpack.c.h.b16 %v252
    %v836 = vunpack.c.l.b16 %v253
    %v837 = vunpack.c.l.b16 %v254
    %v838 = vunpack.c.h.b16 %v254
    %v839 = vunpack.c.l.b16 %v255
    %v840 = vunpack.c.l.b16 %v256
    %v841 = vunpack.c.h.b16 %v256
    %v842 = vunpack.c.l.b16 %v257
    %v843 = vunpack.c.l.b16 %v258
    %v844 = vunpack.c.h.b16 %v258
    %v845 = vunpack.c.l.b16 %v259
    %v846 = vunpack.c.l.b16 %v260
    %v847 = vunpack.c.h.b16 %v260
    %v848 = vunpack.c.l.b16 %v261
    %v849 = vunpack.c.l.b16 %v262
    %v850 = vunpack.c.h.b16 %v262
    %v851 = vunpack.c.l.b16 %v263
    %v852 = vunpack.c.l.b16 %v264
    %v853 = vunpack.c.h.b16 %v264
    %v854 = vunpack.c.l.b16 %v265
    %v855 = vunpack.c.l.b16 %v266
    %v856 = vunpack.c.h.b16 %v266
    %v857 = vunpack.c.l.b16 %v267
    %v858 = vunpack.c.l.b16 %v268
    %v859 = vunpack.c.h.b16 %v268
    %v860 = vunpack.c.l.b16 %v269
    %v861 = vunpack.c.l.b16 %v270
    %v862 = vunpack.c.h.b16 %v270
    %v863 = vunpack.c.l.b16 %v271
    %v864 = vunpack.c.l.b16 %v272
    %v865 = vunpack.c.h.b16 %v272
    %v866 = vunpack.c.l.b16 %v273
    %v867 = vunpack.c.l.b16 %v274
    %v868 = vunpack.c.h.b16 %v274
    %v869 = vunpack.c.l.b16 %v275
    %v870 = vunpack.c.l.b16 %v276
    %v871 = vunpack.c.h.b16 %v276
    %v872 = vunpack.c.l.b16 %v277
    %v873 = vunpack.c.l.b16 %v278
    %v874 = vunpack.c.h.b16 %v278
    %v875 = vunpack.c.l.b16 %v279
    %v876 = vunpack.c.l.b16 %v280
    %v877 = vunpack.c.h.b16 %v280
    %v878 = vunpack.c.l.b16 %v281
    %v879 = vunpack.c.l.b16 %v282
    %v880 = vunpack.c.h.b16 %v282
    %v881 = vunpack.c.l.b16 %v283
    %v882 = vunpack.c.l.b16 %v284
    %v883 = vunpack.c.h.b16 %v284
    %v884 = vunpack.c.l.b16 %v285
    %v885 = vunpack.c.l.b16 %v286
    %v886 = vunpack.c.h.b16 %v286
    %v887 = vunpack.c.l.b16 %v287
    %v888 = vunpack.c.l.b16 %v288
    %v889 = vunpack.c.h.b16 %v288
    %v890 = vunpack.c.l.b16 %v289
    %v891 = vunpack.c.l.b16 %v290
    %v892 = vunpack.c.h.b16 %v290
    %v893 = vunpack.c.l.b16 %v291
    %v894 = vunpack.c.l.b16 %v292
    %v895 = vunpack.c.h.b16 %v292
    %v896 = vunpack.c.l.b16 %v293
    %v897 = vunpack.c.l.b16 %v294
    %v898 = vunpack.c.h.b16 %v294
    %v899 = vunpack.c.l.b16 %v295
    %v900 = vunpack.c.l.b16 %v296
    %v901 = vunpack.c.h.b16 %v296
    %v902 = vunpack.c.l.b16 %v297
    %v903 = vunpack.c.l.b16 %v298
    %v904 = vunpack.c.h.b16 %v298
    %v905 = vunpack.c.l.b16 %v299
    %v906 = vunpack.c.l.b16 %v300
    %v907 = vunpack.c.h.b16 %v300
    %v908 = vunpack.c.l.b16 %v301
    %v909 = vunpack.c.l.b16 %v302
    %v910 = vunpack.c.h.b16 %v302
    %v911 = vunpack.c.l.b16 %v303
    %v912 = vunpack.c.l.b16 %v304
    %v913 = vunpack.c.h.b16 %v304
    %v914 = vunpack.c.l.b16 %v305
    %v915 = vunpack.c.l.b16 %v306
    %v916 = vunpack.c.h.b16 %v306
    %v917 = vunpack.c.l.b16 %v307
    %v918 = vunpack.c.l.b16 %v308
    %v919 = vunpack.c.h.b16 %v308
    %v920 = vunpack.c.l.b16 %v309
    %v921 = vunpack.c.l.b16 %v310
    %v922 = vunpack.c.h.b16 %v310
    %v923 = vunpack.c.l.b16 %v311
    %v924 = vunpack.c.l.b16 %v312
    %v925 = vunpack.c.h.b16 %v312
    %v926 = vunpack.c.l.b16 %v313
    %v927 = vunpack.c.l.b16 %v314
    %v928 = vunpack.c.h.b16 %v314
    %v929 = vunpack.c.l.b16 %v315
    %v930 = vpack.c.b16 %v741, %v738
    %v931 = vpack.c.b16 %v742, %v739
    %v932 = vpack.c.b16 %v743, %v740
    %v933 = vpack.c.b16 %v747, %v744
    %v934 = vpack.c.b16 %v748, %v745
    %v935 = vpack.c.b16 %v749, %v746
    %v936 = vpack.c.b16 %v753, %v750
    %v937 = vpack.c.b16 %v754, %v751
    %v938 = vpack.c.b16 %v755, %v752
    %v939 = vpack.c.b16 %v759, %v756
    %v940 = vpack.c.b16 %v760, %v757
    %v941 = vpack.c.b16 %v761, %v758
    %v942 = vpack.c.b16 %v765, %v762
    %v943 = vpack.c.b16 %v766, %v763
    %v944 = vpack.c.b16 %v767, %v764
    %v945 = vpack.c.b16 %v771, %v768
    %v946 = vpack.c.b16 %v772, %v769
    %v947 = vpack.c.b16 %v773, %v770
    %v948 = vpack.c.b16 %v777, %v774
    %v949 = vpack.c.b16 %v778, %v775
    %v950 = vpack.c.b16 %v779, %v776
    %v951 = vpack.c.b16 %v783, %v780
    %v952 = vpack.c.b16 %v784, %v781
    %v953 = vpack.c.b16 %v785, %v782
    %v954 = vpack.c.b16 %v789, %v786
    %v955 = vpack.c.b16 %v790, %v787
    %v956 = vpack.c.b16 %v791, %v788
    %v957 = vpack.c.b16 %v795, %v792
    %v958 = vpack.c.b16 %v796, %v793
    %v959 = vpack.c.b16 %v797, %v794
    %v960 = vpack.c.b16 %v801, %v798
    %v961 = vpack.c.b16 %v802, %v799
    %v962 = vpack.c.b16 %v803, %v800
    %v963 = vpack.c.b16 %v807, %v804
    %v964 = vpack.c.b16 %v808, %v805
    %v965 = vpack.c.b16 %v809, %v806
    %v966 = vpack.c.b16 %v813, %v810
    %v967 = vpack.c.b16 %v814, %v811
    %v968 = vpack.c.b16 %v815, %v812
    %v969 = vpack.c.b16 %v819, %v816
    %v970 = vpack.c.b16 %v820, %v817
    %v971 = vpack.c.b16 %v821, %v818
    %v972 = vpack.c.b16 %v825, %v822
    %v973 = vpack.c.b16 %v826, %v823
    %v974 = vpack.c.b16 %v827, %v824
    %v975 = vpack.c.b16 %v831, %v828
    %v976 = vpack.c.b16 %v832, %v829
    %v977 = vpack.c.b16 %v833, %v830
    %v978 = vpack.c.b16 %v837, %v834
    %v979 = vpack.c.b16 %v838, %v835
    %v980 = vpack.c.b16 %v839, %v836
    %v981 = vpack.c.b16 %v843, %v840
    %v982 = vpack.c.b16 %v844, %v841
    %v983 = vpack.c.b16 %v845, %v842
    %v984 = vpack.c.b16 %v849, %v846
    %v985 = vpack.c.b16 %v850, %v847
    %v986 = vpack.c.b16 %v851, %v848
    %v987 = vpack.c.b16 %v855, %v852
    %v988 = vpack.c.b16 %v856, %v853
    %v989 = vpack.c.b16 %v857, %v854
    %v990 = vpack.c.b16 %v861, %v858
    %v991 = vpack.c.b16 %v862, %v859
    %v992 = vpack.c.b16 %v863, %v860
    %v993 = vpack.c.b16 %v867, %v864
    %v994 = vpack.c.b16 %v868, %v865
    %v995 = vpack.c.b16 %v869, %v866
    %v996 = vpack.c.b16 %v873, %v870
    %v997 = vpack.c.b16 %v874, %v871
    %v998 = vpack.c.b16 %v875, %v872
    %v999 = vpack.c.b16 %v879, %v876
    %v1000 = vpack.c.b16 %v880, %v877
    %v1001 = vpack.c.b16 %v881, %v878
    %v1002 = vpack.c.b16 %v885, %v882
    %v1003 = vpack.c.b16 %v886, %v883
    %v1004 = vpack.c.b16 %v887, %v884
    %v1005 = vpack.c.b16 %v891, %v888
    %v1006 = vpack.c.b16 %v892, %v889
    %v1007 = vpack.c.b16 %v893, %v890
    %v1008 = vpack.c.b16 %v897, %v894
    %v1009 = vpack.c.b16 %v898, %v895
    %v1010 = vpack.c.b16 %v899, %v896
    %v1011 = vpack.c.b16 %v903, %v900
    %v1012 = vpack.c.b16 %v904, %v901
    %v1013 = vpack.c.b16 %v905, %v902
    %v1014 = vpack.c.b16 %v909, %v906
    %v1015 = vpack.c.b16 %v910, %v907
    %v1016 = vpack.c.b16 %v911, %v908
    %v1017 = vpack.c.b16 %v915, %v912
    %v1018 = vpack.c.b16 %v916, %v913
    %v1019 = vpack.c.b16 %v917, %v914
    %v1020 = vpack.c.b16 %v921, %v918
    %v1021 = vpack.c.b16 %v922, %v919
    %v1022 = vpack.c.b16 %v923, %v920
    %v1023 = vpack.c.b16 %v927, %v924
    %v1024 = vpack.c.b16 %v928, %v925
    %v1025 = vpack.c.b16 %v929, %v926
    %1122 = vmatpush.bf16.msra.mxu0 %v951
    %1123 = vmatpush.bf16.msra.mxu0 %v948
    %1124 = vmatpush.bf16.msra.mxu0 %v945
    %1125 = vmatpush.bf16.msra.mxu0 %v942
    %1126 = vmatpush.bf16.msra.mxu0 %v939
    %1127 = vmatpush.bf16.msra.mxu0 %v936
    %1128 = vmatpush.bf16.msra.mxu0 %v933
    %1129 = vmatpush.bf16.msra.mxu0 %v930
    %1130 = vmatmul.bf16.gmra.mxu0 %v606
    %v1131 = vpop.f32.mrf.mxu0
    %v1132 = vadd.f32 0.0, %v1131
    %v1133 = vpop.f32.mrf.mxu0
    %1134 = vdwg.mxu0
    %1135 = vmatpush.bf16.msra.mxu0 %v975
    %1136 = vmatpush.bf16.msra.mxu0 %v972
    %1137 = vmatpush.bf16.msra.mxu0 %v969
    %1138 = vmatpush.bf16.msra.mxu0 %v966
    %1139 = vmatpush.bf16.msra.mxu0 %v963
    %1140 = vmatpush.bf16.msra.mxu0 %v960
    %1141 = vmatpush.bf16.msra.mxu0 %v957
    %1142 = vmatpush.bf16.msra.mxu0 %v954
    %1143 = vmatmul.bf16.gmra.mxu0 %v607
    %v1144 = vpop.f32.mrf.mxu0
    %v1145 = vadd.f32 %v1132, %v1144
    %v1146 = vpop.f32.mrf.mxu0
    %1147 = vdwg.mxu0
    %1148 = vmatpush.bf16.msra.mxu0 %v999
    %1149 = vmatpush.bf16.msra.mxu0 %v996
    %1150 = vmatpush.bf16.msra.mxu0 %v993
    %1151 = vmatpush.bf16.msra.mxu0 %v990
    %1152 = vmatpush.bf16.msra.mxu0 %v987
    %1153 = vmatpush.bf16.msra.mxu0 %v984
    %1154 = vmatpush.bf16.msra.mxu0 %v981
    %1155 = vmatpush.bf16.msra.mxu0 %v978
    %1156 = vmatmul.bf16.gmra.mxu0 %v608
    %v1157 = vpop.f32.mrf.mxu0
    %v1158 = vadd.f32 %v1145, %v1157
    %v1159 = vpop.f32.mrf.mxu0
    %1160 = vdwg.mxu0
    %1161 = vmatpush.bf16.msra.mxu0 %v1023
    %1162 = vmatpush.bf16.msra.mxu0 %v1020
    %1163 = vmatpush.bf16.msra.mxu0 %v1017
    %1164 = vmatpush.bf16.msra.mxu0 %v1014
    %1165 = vmatpush.bf16.msra.mxu0 %v1011
    %1166 = vmatpush.bf16.msra.mxu0 %v1008
    %1167 = vmatpush.bf16.msra.mxu0 %v1005
    %1168 = vmatpush.bf16.msra.mxu0 %v1002
    %1169 = vmatmul.bf16.gmra.mxu0 %v609
    %v1170 = vpop.f32.mrf.mxu0
    %v1171 = vadd.f32 %v1158, %v1170
    %v1172 = vpop.f32.mrf.mxu0
    %1173 = vdwg.mxu0
    %1174 = vmatpush.bf16.msra.mxu0 %v952
    %1175 = vmatpush.bf16.msra.mxu0 %v949
    %1176 = vmatpush.bf16.msra.mxu0 %v946
    %1177 = vmatpush.bf16.msra.mxu0 %v943
    %1178 = vmatpush.bf16.msra.mxu0 %v940
    %1179 = vmatpush.bf16.msra.mxu0 %v937
    %1180 = vmatpush.bf16.msra.mxu0 %v934
    %1181 = vmatpush.bf16.msra.mxu0 %v931
    %1182 = vmatmul.bf16.gmra.mxu0 %v606
    %v1183 = vpop.f32.mrf.mxu0
    %v1184 = vadd.f32 0.0, %v1183
    %v1185 = vpop.f32.mrf.mxu0
    %1186 = vdwg.mxu0
    %1187 = vmatpush.bf16.msra.mxu0 %v976
    %1188 = vmatpush.bf16.msra.mxu0 %v973
    %1189 = vmatpush.bf16.msra.mxu0 %v970
    %1190 = vmatpush.bf16.msra.mxu0 %v967
    %1191 = vmatpush.bf16.msra.mxu0 %v964
    %1192 = vmatpush.bf16.msra.mxu0 %v961
    %1193 = vmatpush.bf16.msra.mxu0 %v958
    %1194 = vmatpush.bf16.msra.mxu0 %v955
    %1195 = vmatmul.bf16.gmra.mxu0 %v607
    %v1196 = vpop.f32.mrf.mxu0
    %v1197 = vadd.f32 %v1184, %v1196
    %v1198 = vpop.f32.mrf.mxu0
    %1199 = vdwg.mxu0
    %1200 = vmatpush.bf16.msra.mxu0 %v1000
    %1201 = vmatpush.bf16.msra.mxu0 %v997
    %1202 = vmatpush.bf16.msra.mxu0 %v994
    %1203 = vmatpush.bf16.msra.mxu0 %v991
    %1204 = vmatpush.bf16.msra.mxu0 %v988
    %1205 = vmatpush.bf16.msra.mxu0 %v985
    %1206 = vmatpush.bf16.msra.mxu0 %v982
    %1207 = vmatpush.bf16.msra.mxu0 %v979
    %1208 = vmatmul.bf16.gmra.mxu0 %v608
    %v1209 = vpop.f32.mrf.mxu0
    %v1210 = vadd.f32 %v1197, %v1209
    %v1211 = vpop.f32.mrf.mxu0
    %1212 = vdwg.mxu0
    %1213 = vmatpush.bf16.msra.mxu0 %v1024
    %1214 = vmatpush.bf16.msra.mxu0 %v1021
    %1215 = vmatpush.bf16.msra.mxu0 %v1018
    %1216 = vmatpush.bf16.msra.mxu0 %v1015
    %1217 = vmatpush.bf16.msra.mxu0 %v1012
    %1218 = vmatpush.bf16.msra.mxu0 %v1009
    %1219 = vmatpush.bf16.msra.mxu0 %v1006
    %1220 = vmatpush.bf16.msra.mxu0 %v1003
    %1221 = vmatmul.bf16.gmra.mxu0 %v609
    %v1222 = vpop.f32.mrf.mxu0
    %v1223 = vadd.f32 %v1210, %v1222
    %v1224 = vpop.f32.mrf.mxu0
    %1225 = vdwg.mxu0
    %1226 = vmatpush.bf16.msra.mxu0 %v953
    %1227 = vmatpush.bf16.msra.mxu0 %v950
    %1228 = vmatpush.bf16.msra.mxu0 %v947
    %1229 = vmatpush.bf16.msra.mxu0 %v944
    %1230 = vmatpush.bf16.msra.mxu0 %v941
    %1231 = vmatpush.bf16.msra.mxu0 %v938
    %1232 = vmatpush.bf16.msra.mxu0 %v935
    %1233 = vmatpush.bf16.msra.mxu0 %v932
    %1234 = vmatmul.bf16.gmra.mxu0 %v606
    %v1235 = vpop.f32.mrf.mxu0
    %v1236 = vadd.f32 0.0, %v1235
    %v1237 = vpop.f32.mrf.mxu0
    %1238 = vdwg.mxu0
    %1239 = vmatpush.bf16.msra.mxu0 %v977
    %1240 = vmatpush.bf16.msra.mxu0 %v974
    %1241 = vmatpush.bf16.msra.mxu0 %v971
    %1242 = vmatpush.bf16.msra.mxu0 %v968
    %1243 = vmatpush.bf16.msra.mxu0 %v965
    %1244 = vmatpush.bf16.msra.mxu0 %v962
    %1245 = vmatpush.bf16.msra.mxu0 %v959
    %1246 = vmatpush.bf16.msra.mxu0 %v956
    %1247 = vmatmul.bf16.gmra.mxu0 %v607
    %v1248 = vpop.f32.mrf.mxu0
    %v1249 = vadd.f32 %v1236, %v1248
    %v1250 = vpop.f32.mrf.mxu0
    %1251 = vdwg.mxu0
    %1252 = vmatpush.bf16.msra.mxu0 %v1001
    %1253 = vmatpush.bf16.msra.mxu0 %v998
    %1254 = vmatpush.bf16.msra.mxu0 %v995
    %1255 = vmatpush.bf16.msra.mxu0 %v992
    %1256 = vmatpush.bf16.msra.mxu0 %v989
    %1257 = vmatpush.bf16.msra.mxu0 %v986
    %1258 = vmatpush.bf16.msra.mxu0 %v983
    %1259 = vmatpush.bf16.msra.mxu0 %v980
    %1260 = vmatmul.bf16.gmra.mxu0 %v608
    %v1261 = vpop.f32.mrf.mxu0
    %v1262 = vadd.f32 %v1249, %v1261
    %v1263 = vpop.f32.mrf.mxu0
    %1264 = vdwg.mxu0
    %1265 = vmatpush.bf16.msra.mxu0 %v1025
    %1266 = vmatpush.bf16.msra.mxu0 %v1022
    %1267 = vmatpush.bf16.msra.mxu0 %v1019
    %1268 = vmatpush.bf16.msra.mxu0 %v1016
    %1269 = vmatpush.bf16.msra.mxu0 %v1013
    %1270 = vmatpush.bf16.msra.mxu0 %v1010
    %1271 = vmatpush.bf16.msra.mxu0 %v1007
    %1272 = vmatpush.bf16.msra.mxu0 %v1004
    %1273 = vmatmul.bf16.gmra.mxu0 %v609
    %v1274 = vpop.f32.mrf.mxu0
    %v1275 = vadd.f32 %v1262, %v1274
    %v1276 = vpop.f32.mrf.mxu0
    %1277 = vdwg.mxu0
    %vm1278 = vcmp.ge.f32.partialorder %v1171, 0.0
    %vm1279 = vcmp.ge.f32.partialorder %v1223, 0.0
    %vm1280 = vcmp.ge.f32.partialorder %v1275, 0.0
    %v1281 = vmul.f32 %v1171, 0.01
    %v1282 = vmul.f32 %v1223, 0.01
    %v1283 = vmul.f32 %v1275, 0.01
    %v1284 = vsel %vm1278, %v1171, %v1281
    %v1285 = vsel %vm1279, %v1223, %v1282
    %v1286 = vsel %vm1280, %v1275, %v1283
    %v1287 = vpack.c.bf16 %v1284, %v1284
    %v1288 = vpack.c.bf16 %v1285, %v1285
    %v1289 = vpack.c.bf16 %v1286, %v1286
    %v1386 = vunpack.c.l.b16 %v92
    %v1387 = vunpack.c.h.b16 %v92
    %v1388 = vunpack.c.l.b16 %v93
    %v1389 = vunpack.c.h.b16 %v93
    %v1390 = vunpack.c.l.b16 %v94
    %v1391 = vunpack.c.h.b16 %v94
    %v1392 = vunpack.c.l.b16 %v95
    %v1393 = vunpack.c.h.b16 %v95
    %v1394 = vunpack.c.l.b16 %v96
    %v1395 = vunpack.c.h.b16 %v96
    %v1396 = vunpack.c.l.b16 %v97
    %v1397 = vunpack.c.h.b16 %v97
    %v1398 = vunpack.c.l.b16 %v98
    %v1399 = vunpack.c.h.b16 %v98
    %v1400 = vunpack.c.l.b16 %v99
    %v1401 = vunpack.c.h.b16 %v99
    %v1402 = vunpack.c.l.b16 %v100
    %v1403 = vunpack.c.h.b16 %v100
    %v1404 = vunpack.c.l.b16 %v101
    %v1405 = vunpack.c.h.b16 %v101
    %v1406 = vunpack.c.l.b16 %v102
    %v1407 = vunpack.c.h.b16 %v102
    %v1408 = vunpack.c.l.b16 %v103
    %v1409 = vunpack.c.h.b16 %v103
    %v1410 = vunpack.c.l.b16 %v104
    %v1411 = vunpack.c.h.b16 %v104
    %v1412 = vunpack.c.l.b16 %v105
    %v1413 = vunpack.c.h.b16 %v105
    %v1414 = vunpack.c.l.b16 %v106
    %v1415 = vunpack.c.h.b16 %v106
    %v1416 = vunpack.c.l.b16 %v107
    %v1417 = vunpack.c.h.b16 %v107
    %v1418 = vunpack.c.l.b16 %v108
    %v1419 = vunpack.c.h.b16 %v108
    %v1420 = vunpack.c.l.b16 %v109
    %v1421 = vunpack.c.h.b16 %v109
    %v1422 = vunpack.c.l.b16 %v110
    %v1423 = vunpack.c.h.b16 %v110
    %v1424 = vunpack.c.l.b16 %v111
    %v1425 = vunpack.c.h.b16 %v111
    %v1426 = vunpack.c.l.b16 %v112
    %v1427 = vunpack.c.h.b16 %v112
    %v1428 = vunpack.c.l.b16 %v113
    %v1429 = vunpack.c.h.b16 %v113
    %v1430 = vunpack.c.l.b16 %v114
    %v1431 = vunpack.c.h.b16 %v114
    %v1432 = vunpack.c.l.b16 %v115
    %v1433 = vunpack.c.h.b16 %v115
    %v1434 = vunpack.c.l.b16 %v116
    %v1435 = vunpack.c.h.b16 %v116
    %v1436 = vunpack.c.l.b16 %v117
    %v1437 = vunpack.c.h.b16 %v117
    %v1438 = vunpack.c.l.b16 %v118
    %v1439 = vunpack.c.h.b16 %v118
    %v1440 = vunpack.c.l.b16 %v119
    %v1441 = vunpack.c.h.b16 %v119
    %v1442 = vunpack.c.l.b16 %v120
    %v1443 = vunpack.c.h.b16 %v120
    %v1444 = vunpack.c.l.b16 %v121
    %v1445 = vunpack.c.h.b16 %v121
    %v1446 = vunpack.c.l.b16 %v122
    %v1447 = vunpack.c.h.b16 %v122
    %v1448 = vunpack.c.l.b16 %v123
    %v1449 = vunpack.c.h.b16 %v123
    %v1450 = vunpack.c.l.b16 %v124
    %v1451 = vunpack.c.h.b16 %v124
    %v1452 = vunpack.c.l.b16 %v125
    %v1453 = vunpack.c.h.b16 %v125
    %v1454 = vunpack.c.l.b16 %v126
    %v1455 = vunpack.c.h.b16 %v126
    %v1456 = vunpack.c.l.b16 %v127
    %v1457 = vunpack.c.h.b16 %v127
    %v1458 = vunpack.c.l.b16 %v128
    %v1459 = vunpack.c.h.b16 %v128
    %v1460 = vunpack.c.l.b16 %v129
    %v1461 = vunpack.c.h.b16 %v129
    %v1462 = vunpack.c.l.b16 %v130
    %v1463 = vunpack.c.h.b16 %v130
    %v1464 = vunpack.c.l.b16 %v131
    %v1465 = vunpack.c.h.b16 %v131
    %v1466 = vunpack.c.l.b16 %v132
    %v1467 = vunpack.c.h.b16 %v132
    %v1468 = vunpack.c.l.b16 %v133
    %v1469 = vunpack.c.h.b16 %v133
    %v1470 = vunpack.c.l.b16 %v134
    %v1471 = vunpack.c.h.b16 %v134
    %v1472 = vunpack.c.l.b16 %v135
    %v1473 = vunpack.c.h.b16 %v135
    %v1474 = vunpack.c.l.b16 %v136
    %v1475 = vunpack.c.h.b16 %v136
    %v1476 = vunpack.c.l.b16 %v137
    %v1477 = vunpack.c.h.b16 %v137
    %v1478 = vunpack.c.l.b16 %v138
    %v1479 = vunpack.c.h.b16 %v138
    %v1480 = vunpack.c.l.b16 %v139
    %v1481 = vunpack.c.h.b16 %v139
    %v1482 = vunpack.c.l.b16 %v140
    %v1483 = vunpack.c.h.b16 %v140
    %v1484 = vunpack.c.l.b16 %v141
    %v1485 = vunpack.c.h.b16 %v141
    %v1486 = vunpack.c.l.b16 %v142
    %v1487 = vunpack.c.h.b16 %v142
    %v1488 = vunpack.c.l.b16 %v143
    %v1489 = vunpack.c.h.b16 %v143
    %v1490 = vunpack.c.l.b16 %v144
    %v1491 = vunpack.c.h.b16 %v144
    %v1492 = vunpack.c.l.b16 %v145
    %v1493 = vunpack.c.h.b16 %v145
    %v1494 = vunpack.c.l.b16 %v146
    %v1495 = vunpack.c.h.b16 %v146
    %v1496 = vunpack.c.l.b16 %v147
    %v1497 = vunpack.c.h.b16 %v147
    %v1498 = vunpack.c.l.b16 %v148
    %v1499 = vunpack.c.h.b16 %v148
    %v1500 = vunpack.c.l.b16 %v149
    %v1501 = vunpack.c.h.b16 %v149
    %v1502 = vunpack.c.l.b16 %v150
    %v1503 = vunpack.c.h.b16 %v150
    %v1504 = vunpack.c.l.b16 %v151
    %v1505 = vunpack.c.h.b16 %v151
    %v1506 = vunpack.c.l.b16 %v152
    %v1507 = vunpack.c.h.b16 %v152
    %v1508 = vunpack.c.l.b16 %v153
    %v1509 = vunpack.c.h.b16 %v153
    %v1510 = vunpack.c.l.b16 %v154
    %v1511 = vunpack.c.h.b16 %v154
    %v1512 = vunpack.c.l.b16 %v155
    %v1513 = vunpack.c.h.b16 %v155
    %v1514 = vunpack.c.l.b16 %v156
    %v1515 = vunpack.c.h.b16 %v156
    %v1516 = vunpack.c.l.b16 %v157
    %v1517 = vunpack.c.h.b16 %v157
    %v1518 = vunpack.c.l.b16 %v158
    %v1519 = vunpack.c.h.b16 %v158
    %v1520 = vunpack.c.l.b16 %v159
    %v1521 = vunpack.c.h.b16 %v159
    %v1522 = vunpack.c.l.b16 %v160
    %v1523 = vunpack.c.h.b16 %v160
    %v1524 = vunpack.c.l.b16 %v161
    %v1525 = vunpack.c.h.b16 %v161
    %v1526 = vunpack.c.l.b16 %v162
    %v1527 = vunpack.c.h.b16 %v162
    %v1528 = vunpack.c.l.b16 %v163
    %v1529 = vunpack.c.h.b16 %v163
    %v1530 = vunpack.c.l.b16 %v164
    %v1531 = vunpack.c.h.b16 %v164
    %v1532 = vunpack.c.l.b16 %v165
    %v1533 = vunpack.c.h.b16 %v165
    %v1534 = vunpack.c.l.b16 %v166
    %v1535 = vunpack.c.h.b16 %v166
    %v1536 = vunpack.c.l.b16 %v167
    %v1537 = vunpack.c.h.b16 %v167
    %v1538 = vunpack.c.l.b16 %v168
    %v1539 = vunpack.c.h.b16 %v168
    %v1540 = vunpack.c.l.b16 %v169
    %v1541 = vunpack.c.h.b16 %v169
    %v1542 = vunpack.c.l.b16 %v170
    %v1543 = vunpack.c.h.b16 %v170
    %v1544 = vunpack.c.l.b16 %v171
    %v1545 = vunpack.c.h.b16 %v171
    %v1546 = vunpack.c.l.b16 %v172
    %v1547 = vunpack.c.h.b16 %v172
    %v1548 = vunpack.c.l.b16 %v173
    %v1549 = vunpack.c.h.b16 %v173
    %v1550 = vunpack.c.l.b16 %v174
    %v1551 = vunpack.c.h.b16 %v174
    %v1552 = vunpack.c.l.b16 %v175
    %v1553 = vunpack.c.h.b16 %v175
    %v1554 = vunpack.c.l.b16 %v176
    %v1555 = vunpack.c.h.b16 %v176
    %v1556 = vunpack.c.l.b16 %v177
    %v1557 = vunpack.c.h.b16 %v177
    %v1558 = vunpack.c.l.b16 %v178
    %v1559 = vunpack.c.h.b16 %v178
    %v1560 = vunpack.c.l.b16 %v179
    %v1561 = vunpack.c.h.b16 %v179
    %v1562 = vunpack.c.l.b16 %v180
    %v1563 = vunpack.c.h.b16 %v180
    %v1564 = vunpack.c.l.b16 %v181
    %v1565 = vunpack.c.h.b16 %v181
    %v1566 = vunpack.c.l.b16 %v182
    %v1567 = vunpack.c.h.b16 %v182
    %v1568 = vunpack.c.l.b16 %v183
    %v1569 = vunpack.c.h.b16 %v183
    %v1570 = vunpack.c.l.b16 %v184
    %v1571 = vunpack.c.h.b16 %v184
    %v1572 = vunpack.c.l.b16 %v185
    %v1573 = vunpack.c.h.b16 %v185
    %v1574 = vunpack.c.l.b16 %v186
    %v1575 = vunpack.c.h.b16 %v186
    %v1576 = vunpack.c.l.b16 %v187
    %v1577 = vunpack.c.h.b16 %v187
    %v1578 = vpack.c.b16 %v1390, %v1386
    %v1579 = vpack.c.b16 %v1391, %v1387
    %v1580 = vpack.c.b16 %v1392, %v1388
    %v1581 = vpack.c.b16 %v1393, %v1389
    %v1582 = vpack.c.b16 %v1398, %v1394
    %v1583 = vpack.c.b16 %v1399, %v1395
    %v1584 = vpack.c.b16 %v1400, %v1396
    %v1585 = vpack.c.b16 %v1401, %v1397
    %v1586 = vpack.c.b16 %v1406, %v1402
    %v1587 = vpack.c.b16 %v1407, %v1403
    %v1588 = vpack.c.b16 %v1408, %v1404
    %v1589 = vpack.c.b16 %v1409, %v1405
    %v1590 = vpack.c.b16 %v1414, %v1410
    %v1591 = vpack.c.b16 %v1415, %v1411
    %v1592 = vpack.c.b16 %v1416, %v1412
    %v1593 = vpack.c.b16 %v1417, %v1413
    %v1594 = vpack.c.b16 %v1422, %v1418
    %v1595 = vpack.c.b16 %v1423, %v1419
    %v1596 = vpack.c.b16 %v1424, %v1420
    %v1597 = vpack.c.b16 %v1425, %v1421
    %v1598 = vpack.c.b16 %v1430, %v1426
    %v1599 = vpack.c.b16 %v1431, %v1427
    %v1600 = vpack.c.b16 %v1432, %v1428
    %v1601 = vpack.c.b16 %v1433, %v1429
    %v1602 = vpack.c.b16 %v1438, %v1434
    %v1603 = vpack.c.b16 %v1439, %v1435
    %v1604 = vpack.c.b16 %v1440, %v1436
    %v1605 = vpack.c.b16 %v1441, %v1437
    %v1606 = vpack.c.b16 %v1446, %v1442
    %v1607 = vpack.c.b16 %v1447, %v1443
    %v1608 = vpack.c.b16 %v1448, %v1444
    %v1609 = vpack.c.b16 %v1449, %v1445
    %v1610 = vpack.c.b16 %v1454, %v1450
    %v1611 = vpack.c.b16 %v1455, %v1451
    %v1612 = vpack.c.b16 %v1456, %v1452
    %v1613 = vpack.c.b16 %v1457, %v1453
    %v1614 = vpack.c.b16 %v1462, %v1458
    %v1615 = vpack.c.b16 %v1463, %v1459
    %v1616 = vpack.c.b16 %v1464, %v1460
    %v1617 = vpack.c.b16 %v1465, %v1461
    %v1618 = vpack.c.b16 %v1470, %v1466
    %v1619 = vpack.c.b16 %v1471, %v1467
    %v1620 = vpack.c.b16 %v1472, %v1468
    %v1621 = vpack.c.b16 %v1473, %v1469
    %v1622 = vpack.c.b16 %v1478, %v1474
    %v1623 = vpack.c.b16 %v1479, %v1475
    %v1624 = vpack.c.b16 %v1480, %v1476
    %v1625 = vpack.c.b16 %v1481, %v1477
    %v1626 = vpack.c.b16 %v1486, %v1482
    %v1627 = vpack.c.b16 %v1487, %v1483
    %v1628 = vpack.c.b16 %v1488, %v1484
    %v1629 = vpack.c.b16 %v1489, %v1485
    %v1630 = vpack.c.b16 %v1494, %v1490
    %v1631 = vpack.c.b16 %v1495, %v1491
    %v1632 = vpack.c.b16 %v1496, %v1492
    %v1633 = vpack.c.b16 %v1497, %v1493
    %v1634 = vpack.c.b16 %v1502, %v1498
    %v1635 = vpack.c.b16 %v1503, %v1499
    %v1636 = vpack.c.b16 %v1504, %v1500
    %v1637 = vpack.c.b16 %v1505, %v1501
    %v1638 = vpack.c.b16 %v1510, %v1506
    %v1639 = vpack.c.b16 %v1511, %v1507
    %v1640 = vpack.c.b16 %v1512, %v1508
    %v1641 = vpack.c.b16 %v1513, %v1509
    %v1642 = vpack.c.b16 %v1518, %v1514
    %v1643 = vpack.c.b16 %v1519, %v1515
    %v1644 = vpack.c.b16 %v1520, %v1516
    %v1645 = vpack.c.b16 %v1521, %v1517
    %v1646 = vpack.c.b16 %v1526, %v1522
    %v1647 = vpack.c.b16 %v1527, %v1523
    %v1648 = vpack.c.b16 %v1528, %v1524
    %v1649 = vpack.c.b16 %v1529, %v1525
    %v1650 = vpack.c.b16 %v1534, %v1530
    %v1651 = vpack.c.b16 %v1535, %v1531
    %v1652 = vpack.c.b16 %v1536, %v1532
    %v1653 = vpack.c.b16 %v1537, %v1533
    %v1654 = vpack.c.b16 %v1542, %v1538
    %v1655 = vpack.c.b16 %v1543, %v1539
    %v1656 = vpack.c.b16 %v1544, %v1540
    %v1657 = vpack.c.b16 %v1545, %v1541
    %v1658 = vpack.c.b16 %v1550, %v1546
    %v1659 = vpack.c.b16 %v1551, %v1547
    %v1660 = vpack.c.b16 %v1552, %v1548
    %v1661 = vpack.c.b16 %v1553, %v1549
    %v1662 = vpack.c.b16 %v1558, %v1554
    %v1663 = vpack.c.b16 %v1559, %v1555
    %v1664 = vpack.c.b16 %v1560, %v1556
    %v1665 = vpack.c.b16 %v1561, %v1557
    %v1666 = vpack.c.b16 %v1566, %v1562
    %v1667 = vpack.c.b16 %v1567, %v1563
    %v1668 = vpack.c.b16 %v1568, %v1564
    %v1669 = vpack.c.b16 %v1569, %v1565
    %v1670 = vpack.c.b16 %v1574, %v1570
    %v1671 = vpack.c.b16 %v1575, %v1571
    %v1672 = vpack.c.b16 %v1576, %v1572
    %v1673 = vpack.c.b16 %v1577, %v1573
    %1770 = vmatpush.bf16.msra.mxu0 %v1606
    %1771 = vmatpush.bf16.msra.mxu0 %v1602
    %1772 = vmatpush.bf16.msra.mxu0 %v1598
    %1773 = vmatpush.bf16.msra.mxu0 %v1594
    %1774 = vmatpush.bf16.msra.mxu0 %v1590
    %1775 = vmatpush.bf16.msra.mxu0 %v1586
    %1776 = vmatpush.bf16.msra.mxu0 %v1582
    %1777 = vmatpush.bf16.msra.mxu0 %v1578
    %1778 = vmatmul.bf16.gmra.mxu0 %v1287
    %v1779 = vpop.f32.mrf.mxu0
    %v1780 = vadd.f32 0.0, %v1779
    %v1781 = vpop.f32.mrf.mxu0
    %1782 = vdwg.mxu0
    %1783 = vmatpush.bf16.msra.mxu0 %v1638
    %1784 = vmatpush.bf16.msra.mxu0 %v1634
    %1785 = vmatpush.bf16.msra.mxu0 %v1630
    %1786 = vmatpush.bf16.msra.mxu0 %v1626
    %1787 = vmatpush.bf16.msra.mxu0 %v1622
    %1788 = vmatpush.bf16.msra.mxu0 %v1618
    %1789 = vmatpush.bf16.msra.mxu0 %v1614
    %1790 = vmatpush.bf16.msra.mxu0 %v1610
    %1791 = vmatmul.bf16.gmra.mxu0 %v1288
    %v1792 = vpop.f32.mrf.mxu0
    %v1793 = vadd.f32 %v1780, %v1792
    %v1794 = vpop.f32.mrf.mxu0
    %1795 = vdwg.mxu0
    %1796 = vmatpush.bf16.msra.mxu0 %v1670
    %1797 = vmatpush.bf16.msra.mxu0 %v1666
    %1798 = vmatpush.bf16.msra.mxu0 %v1662
    %1799 = vmatpush.bf16.msra.mxu0 %v1658
    %1800 = vmatpush.bf16.msra.mxu0 %v1654
    %1801 = vmatpush.bf16.msra.mxu0 %v1650
    %1802 = vmatpush.bf16.msra.mxu0 %v1646
    %1803 = vmatpush.bf16.msra.mxu0 %v1642
    %1804 = vmatmul.bf16.gmra.mxu0 %v1289
    %v1805 = vpop.f32.mrf.mxu0
    %v1806 = vadd.f32 %v1793, %v1805
    %v1807 = vpop.f32.mrf.mxu0
    %1808 = vdwg.mxu0
    %1809 = vmatpush.bf16.msra.mxu0 %v1607
    %1810 = vmatpush.bf16.msra.mxu0 %v1603
    %1811 = vmatpush.bf16.msra.mxu0 %v1599
    %1812 = vmatpush.bf16.msra.mxu0 %v1595
    %1813 = vmatpush.bf16.msra.mxu0 %v1591
    %1814 = vmatpush.bf16.msra.mxu0 %v1587
    %1815 = vmatpush.bf16.msra.mxu0 %v1583
    %1816 = vmatpush.bf16.msra.mxu0 %v1579
    %1817 = vmatmul.bf16.gmra.mxu0 %v1287
    %v1818 = vpop.f32.mrf.mxu0
    %v1819 = vadd.f32 0.0, %v1818
    %v1820 = vpop.f32.mrf.mxu0
    %1821 = vdwg.mxu0
    %1822 = vmatpush.bf16.msra.mxu0 %v1639
    %1823 = vmatpush.bf16.msra.mxu0 %v1635
    %1824 = vmatpush.bf16.msra.mxu0 %v1631
    %1825 = vmatpush.bf16.msra.mxu0 %v1627
    %1826 = vmatpush.bf16.msra.mxu0 %v1623
    %1827 = vmatpush.bf16.msra.mxu0 %v1619
    %1828 = vmatpush.bf16.msra.mxu0 %v1615
    %1829 = vmatpush.bf16.msra.mxu0 %v1611
    %1830 = vmatmul.bf16.gmra.mxu0 %v1288
    %v1831 = vpop.f32.mrf.mxu0
    %v1832 = vadd.f32 %v1819, %v1831
    %v1833 = vpop.f32.mrf.mxu0
    %1834 = vdwg.mxu0
    %1835 = vmatpush.bf16.msra.mxu0 %v1671
    %1836 = vmatpush.bf16.msra.mxu0 %v1667
    %1837 = vmatpush.bf16.msra.mxu0 %v1663
    %1838 = vmatpush.bf16.msra.mxu0 %v1659
    %1839 = vmatpush.bf16.msra.mxu0 %v1655
    %1840 = vmatpush.bf16.msra.mxu0 %v1651
    %1841 = vmatpush.bf16.msra.mxu0 %v1647
    %1842 = vmatpush.bf16.msra.mxu0 %v1643
    %1843 = vmatmul.bf16.gmra.mxu0 %v1289
    %v1844 = vpop.f32.mrf.mxu0
    %v1845 = vadd.f32 %v1832, %v1844
    %v1846 = vpop.f32.mrf.mxu0
    %1847 = vdwg.mxu0
    %1848 = vmatpush.bf16.msra.mxu0 %v1608
    %1849 = vmatpush.bf16.msra.mxu0 %v1604
    %1850 = vmatpush.bf16.msra.mxu0 %v1600
    %1851 = vmatpush.bf16.msra.mxu0 %v1596
    %1852 = vmatpush.bf16.msra.mxu0 %v1592
    %1853 = vmatpush.bf16.msra.mxu0 %v1588
    %1854 = vmatpush.bf16.msra.mxu0 %v1584
    %1855 = vmatpush.bf16.msra.mxu0 %v1580
    %1856 = vmatmul.bf16.gmra.mxu0 %v1287
    %v1857 = vpop.f32.mrf.mxu0
    %v1858 = vadd.f32 0.0, %v1857
    %v1859 = vpop.f32.mrf.mxu0
    %1860 = vdwg.mxu0
    %1861 = vmatpush.bf16.msra.mxu0 %v1640
    %1862 = vmatpush.bf16.msra.mxu0 %v1636
    %1863 = vmatpush.bf16.msra.mxu0 %v1632
    %1864 = vmatpush.bf16.msra.mxu0 %v1628
    %1865 = vmatpush.bf16.msra.mxu0 %v1624
    %1866 = vmatpush.bf16.msra.mxu0 %v1620
    %1867 = vmatpush.bf16.msra.mxu0 %v1616
    %1868 = vmatpush.bf16.msra.mxu0 %v1612
    %1869 = vmatmul.bf16.gmra.mxu0 %v1288
    %v1870 = vpop.f32.mrf.mxu0
    %v1871 = vadd.f32 %v1858, %v1870
    %v1872 = vpop.f32.mrf.mxu0
    %1873 = vdwg.mxu0
    %1874 = vmatpush.bf16.msra.mxu0 %v1672
    %1875 = vmatpush.bf16.msra.mxu0 %v1668
    %1876 = vmatpush.bf16.msra.mxu0 %v1664
    %1877 = vmatpush.bf16.msra.mxu0 %v1660
    %1878 = vmatpush.bf16.msra.mxu0 %v1656
    %1879 = vmatpush.bf16.msra.mxu0 %v1652
    %1880 = vmatpush.bf16.msra.mxu0 %v1648
    %1881 = vmatpush.bf16.msra.mxu0 %v1644
    %1882 = vmatmul.bf16.gmra.mxu0 %v1289
    %v1883 = vpop.f32.mrf.mxu0
    %v1884 = vadd.f32 %v1871, %v1883
    %v1885 = vpop.f32.mrf.mxu0
    %1886 = vdwg.mxu0
    %1887 = vmatpush.bf16.msra.mxu0 %v1609
    %1888 = vmatpush.bf16.msra.mxu0 %v1605
    %1889 = vmatpush.bf16.msra.mxu0 %v1601
    %1890 = vmatpush.bf16.msra.mxu0 %v1597
    %1891 = vmatpush.bf16.msra.mxu0 %v1593
    %1892 = vmatpush.bf16.msra.mxu0 %v1589
    %1893 = vmatpush.bf16.msra.mxu0 %v1585
    %1894 = vmatpush.bf16.msra.mxu0 %v1581
    %1895 = vmatmul.bf16.gmra.mxu0 %v1287
    %v1896 = vpop.f32.mrf.mxu0
    %v1897 = vadd.f32 0.0, %v1896
    %v1898 = vpop.f32.mrf.mxu0
    %1899 = vdwg.mxu0
    %1900 = vmatpush.bf16.msra.mxu0 %v1641
    %1901 = vmatpush.bf16.msra.mxu0 %v1637
    %1902 = vmatpush.bf16.msra.mxu0 %v1633
    %1903 = vmatpush.bf16.msra.mxu0 %v1629
    %1904 = vmatpush.bf16.msra.mxu0 %v1625
    %1905 = vmatpush.bf16.msra.mxu0 %v1621
    %1906 = vmatpush.bf16.msra.mxu0 %v1617
    %1907 = vmatpush.bf16.msra.mxu0 %v1613
    %1908 = vmatmul.bf16.gmra.mxu0 %v1288
    %v1909 = vpop.f32.mrf.mxu0
    %v1910 = vadd.f32 %v1897, %v1909
    %v1911 = vpop.f32.mrf.mxu0
    %1912 = vdwg.mxu0
    %1913 = vmatpush.bf16.msra.mxu0 %v1673
    %1914 = vmatpush.bf16.msra.mxu0 %v1669
    %1915 = vmatpush.bf16.msra.mxu0 %v1665
    %1916 = vmatpush.bf16.msra.mxu0 %v1661
    %1917 = vmatpush.bf16.msra.mxu0 %v1657
    %1918 = vmatpush.bf16.msra.mxu0 %v1653
    %1919 = vmatpush.bf16.msra.mxu0 %v1649
    %1920 = vmatpush.bf16.msra.mxu0 %v1645
    %1921 = vmatmul.bf16.gmra.mxu0 %v1289
    %v1922 = vpop.f32.mrf.mxu0
    %v1923 = vadd.f32 %v1910, %v1922
    %v1924 = vpop.f32.mrf.mxu0
    %1925 = vdwg.mxu0
    %vm1926 = vcmp.ge.f32.partialorder %v1806, 0.0
    %vm1927 = vcmp.ge.f32.partialorder %v1845, 0.0
    %vm1928 = vcmp.ge.f32.partialorder %v1884, 0.0
    %vm1929 = vcmp.ge.f32.partialorder %v1923, 0.0
    %v1930 = vmul.f32 %v1806, 0.01
    %v1931 = vmul.f32 %v1845, 0.01
    %v1932 = vmul.f32 %v1884, 0.01
    %v1933 = vmul.f32 %v1923, 0.01
    %v1934 = vsel %vm1926, %v1806, %v1930
    %v1935 = vsel %vm1927, %v1845, %v1931
    %v1936 = vsel %vm1928, %v1884, %v1932
    %v1937 = vsel %vm1929, %v1923, %v1933
    %v1938 = vpack.c.bf16 %v1934, %v1934
    %v1939 = vpack.c.bf16 %v1935, %v1935
    %v1940 = vpack.c.bf16 %v1936, %v1936
    %v1941 = vpack.c.bf16 %v1937, %v1937
    %v2006 = vunpack.c.l.b16 %v316
    %v2007 = vunpack.c.l.b16 %v317
    %v2008 = vunpack.c.l.b16 %v318
    %v2009 = vunpack.c.l.b16 %v319
    %v2010 = vunpack.c.l.b16 %v320
    %v2011 = vunpack.c.l.b16 %v321
    %v2012 = vunpack.c.l.b16 %v322
    %v2013 = vunpack.c.l.b16 %v323
    %v2014 = vunpack.c.l.b16 %v324
    %v2015 = vunpack.c.l.b16 %v325
    %v2016 = vunpack.c.l.b16 %v326
    %v2017 = vunpack.c.l.b16 %v327
    %v2018 = vunpack.c.l.b16 %v328
    %v2019 = vunpack.c.l.b16 %v329
    %v2020 = vunpack.c.l.b16 %v330
    %v2021 = vunpack.c.l.b16 %v331
    %v2022 = vunpack.c.l.b16 %v332
    %v2023 = vunpack.c.l.b16 %v333
    %v2024 = vunpack.c.l.b16 %v334
    %v2025 = vunpack.c.l.b16 %v335
    %v2026 = vunpack.c.l.b16 %v336
    %v2027 = vunpack.c.l.b16 %v337
    %v2028 = vunpack.c.l.b16 %v338
    %v2029 = vunpack.c.l.b16 %v339
    %v2030 = vunpack.c.l.b16 %v340
    %v2031 = vunpack.c.l.b16 %v341
    %v2032 = vunpack.c.l.b16 %v342
    %v2033 = vunpack.c.l.b16 %v343
    %v2034 = vunpack.c.l.b16 %v344
    %v2035 = vunpack.c.l.b16 %v345
    %v2036 = vunpack.c.l.b16 %v346
    %v2037 = vunpack.c.l.b16 %v347
    %v2038 = vunpack.c.l.b16 %v348
    %v2039 = vunpack.c.l.b16 %v349
    %v2040 = vunpack.c.l.b16 %v350
    %v2041 = vunpack.c.l.b16 %v351
    %v2042 = vunpack.c.l.b16 %v352
    %v2043 = vunpack.c.l.b16 %v353
    %v2044 = vunpack.c.l.b16 %v354
    %v2045 = vunpack.c.l.b16 %v355
    %v2046 = vunpack.c.l.b16 %v356
    %v2047 = vunpack.c.l.b16 %v357
    %v2048 = vunpack.c.l.b16 %v358
    %v2049 = vunpack.c.l.b16 %v359
    %v2050 = vunpack.c.l.b16 %v360
    %v2051 = vunpack.c.l.b16 %v361
    %v2052 = vunpack.c.l.b16 %v362
    %v2053 = vunpack.c.l.b16 %v363
    %v2054 = vunpack.c.l.b16 %v364
    %v2055 = vunpack.c.l.b16 %v365
    %v2056 = vunpack.c.l.b16 %v366
    %v2057 = vunpack.c.l.b16 %v367
    %v2058 = vunpack.c.l.b16 %v368
    %v2059 = vunpack.c.l.b16 %v369
    %v2060 = vunpack.c.l.b16 %v370
    %v2061 = vunpack.c.l.b16 %v371
    %v2062 = vunpack.c.l.b16 %v372
    %v2063 = vunpack.c.l.b16 %v373
    %v2064 = vunpack.c.l.b16 %v374
    %v2065 = vunpack.c.l.b16 %v375
    %v2066 = vunpack.c.l.b16 %v376
    %v2067 = vunpack.c.l.b16 %v377
    %v2068 = vunpack.c.l.b16 %v378
    %v2069 = vunpack.c.l.b16 %v379
    %v2070 = vpack.c.b16 %v2007, %v2006
    %v2071 = vpack.c.b16 %v2009, %v2008
    %v2072 = vpack.c.b16 %v2011, %v2010
    %v2073 = vpack.c.b16 %v2013, %v2012
    %v2074 = vpack.c.b16 %v2015, %v2014
    %v2075 = vpack.c.b16 %v2017, %v2016
    %v2076 = vpack.c.b16 %v2019, %v2018
    %v2077 = vpack.c.b16 %v2021, %v2020
    %v2078 = vpack.c.b16 %v2023, %v2022
    %v2079 = vpack.c.b16 %v2025, %v2024
    %v2080 = vpack.c.b16 %v2027, %v2026
    %v2081 = vpack.c.b16 %v2029, %v2028
    %v2082 = vpack.c.b16 %v2031, %v2030
    %v2083 = vpack.c.b16 %v2033, %v2032
    %v2084 = vpack.c.b16 %v2035, %v2034
    %v2085 = vpack.c.b16 %v2037, %v2036
    %v2086 = vpack.c.b16 %v2039, %v2038
    %v2087 = vpack.c.b16 %v2041, %v2040
    %v2088 = vpack.c.b16 %v2043, %v2042
    %v2089 = vpack.c.b16 %v2045, %v2044
    %v2090 = vpack.c.b16 %v2047, %v2046
    %v2091 = vpack.c.b16 %v2049, %v2048
    %v2092 = vpack.c.b16 %v2051, %v2050
    %v2093 = vpack.c.b16 %v2053, %v2052
    %v2094 = vpack.c.b16 %v2055, %v2054
    %v2095 = vpack.c.b16 %v2057, %v2056
    %v2096 = vpack.c.b16 %v2059, %v2058
    %v2097 = vpack.c.b16 %v2061, %v2060
    %v2098 = vpack.c.b16 %v2063, %v2062
    %v2099 = vpack.c.b16 %v2065, %v2064
    %v2100 = vpack.c.b16 %v2067, %v2066
    %v2101 = vpack.c.b16 %v2069, %v2068
    %2134 = vmatpush.bf16.msra.mxu0 %v2077
    %2135 = vmatpush.bf16.msra.mxu0 %v2076
    %2136 = vmatpush.bf16.msra.mxu0 %v2075
    %2137 = vmatpush.bf16.msra.mxu0 %v2074
    %2138 = vmatpush.bf16.msra.mxu0 %v2073
    %2139 = vmatpush.bf16.msra.mxu0 %v2072
    %2140 = vmatpush.bf16.msra.mxu0 %v2071
    %2141 = vmatpush.bf16.msra.mxu0 %v2070
    %2142 = vmatmul.bf16.gmra.mxu0 %v1938
    %v2143 = vpop.f32.mrf.mxu0
    %v2144 = vadd.f32 0.0, %v2143
    %v2145 = vpop.f32.mrf.mxu0
    %2146 = vdwg.mxu0
    %2147 = vmatpush.bf16.msra.mxu0 %v2085
    %2148 = vmatpush.bf16.msra.mxu0 %v2084
    %2149 = vmatpush.bf16.msra.mxu0 %v2083
    %2150 = vmatpush.bf16.msra.mxu0 %v2082
    %2151 = vmatpush.bf16.msra.mxu0 %v2081
    %2152 = vmatpush.bf16.msra.mxu0 %v2080
    %2153 = vmatpush.bf16.msra.mxu0 %v2079
    %2154 = vmatpush.bf16.msra.mxu0 %v2078
    %2155 = vmatmul.bf16.gmra.mxu0 %v1939
    %v2156 = vpop.f32.mrf.mxu0
    %v2157 = vadd.f32 %v2144, %v2156
    %v2158 = vpop.f32.mrf.mxu0
    %2159 = vdwg.mxu0
    %2160 = vmatpush.bf16.msra.mxu0 %v2093
    %2161 = vmatpush.bf16.msra.mxu0 %v2092
    %2162 = vmatpush.bf16.msra.mxu0 %v2091
    %2163 = vmatpush.bf16.msra.mxu0 %v2090
    %2164 = vmatpush.bf16.msra.mxu0 %v2089
    %2165 = vmatpush.bf16.msra.mxu0 %v2088
    %2166 = vmatpush.bf16.msra.mxu0 %v2087
    %2167 = vmatpush.bf16.msra.mxu0 %v2086
    %2168 = vmatmul.bf16.gmra.mxu0 %v1940
    %v2169 = vpop.f32.mrf.mxu0
    %v2170 = vadd.f32 %v2157, %v2169
    %v2171 = vpop.f32.mrf.mxu0
    %2172 = vdwg.mxu0
    %2173 = vmatpush.bf16.msra.mxu0 %v2101
    %2174 = vmatpush.bf16.msra.mxu0 %v2100
    %2175 = vmatpush.bf16.msra.mxu0 %v2099
    %2176 = vmatpush.bf16.msra.mxu0 %v2098
    %2177 = vmatpush.bf16.msra.mxu0 %v2097
    %2178 = vmatpush.bf16.msra.mxu0 %v2096
    %2179 = vmatpush.bf16.msra.mxu0 %v2095
    %2180 = vmatpush.bf16.msra.mxu0 %v2094
    %2181 = vmatmul.bf16.gmra.mxu0 %v1941
    %v2182 = vpop.f32.mrf.mxu0
    %v2183 = vadd.f32 %v2170, %v2182
    %v2184 = vpop.f32.mrf.mxu0
    %2185 = vdwg.mxu0
    %v2186 = vtanh.pop %v2183
    %2187 = vst [vmem:[#allocation8] sm:$0xff] %v2186
    // Predicated region
    $region26: #{tpu_custom_call.1} parent=1 // pred_check
      _
    $region27: #{tpu_custom_call.1} parent=1 // pred_check_branch
      %2189 = sbr.rel (0) target = $region29
    $region28: #{tpu_custom_call.1} parent=1 // pred_region
      %2191 = vsyncadd [#allocation4], 0
      %s2193 = sshll.u32 [#allocation8], 4
      %s2194 = int_to_ptr.vmem [resolvable:$true] %s2193
      %s2195 = sshll.u32 %s3, 4
      %s2196 = int_to_ptr.hbm [resolvable:$true] %s2195
      %2198 = dma.vmem_to_hbm [thread:$0]  %s2194, 128, %s2196, [#allocation4]
    $region29: #{tpu_custom_call.1} parent=1 // pred_fallthru
      _
    // Predicated region
    $region30: #{tpu_custom_call.1} parent=1 // pred_check
      _
    $region31: #{tpu_custom_call.1} parent=1 // pred_check_branch
      %2200 = sbr.rel (0) target = $region33
    $region32: #{tpu_custom_call.1} parent=1 // pred_region
      %2202 = dma.done [#allocation4], 128
    $region33: #{tpu_custom_call.1} parent=1 // pred_fallthru
      _
    %2203 = vsyncpa [#allocation3], 1
    %2204 = vsyncpa [#allocation6], 1
    %2205 = vsyncpa [#allocation4], 1

// kernel: tpu_custom_call.1
$region0: #{tpu_custom_call.1}
  #allocation0 [shape = 'u32[]', space=smem, size = 0x4, offset = 0x4, fixed_abs, tag = 'smem constant byte address 0x4 - core index']
  #allocation1 [shape = 'u32[72,128]{1,0:T(1,128)}', space=vmem, size = 0x9000, scoped, tag = 'internal scratch']
  %s0 = inlined_call_operand.hbm [shape: f32[8,128], index: 0, kind: input, shape index: {}]
  %s1 = inlined_call_operand.hbm [shape: bf16[512,512], index: 1, kind: input, shape index: {}]
  %s2 = inlined_call_operand.hbm [shape: bf16[512,512], index: 2, kind: input, shape index: {}]
  %s3 = inlined_call_operand.hbm [shape: f32[8,128], index: 3, kind: output, shape index: {}]
  %s4 = sld [smem:[#allocation0]]
  $region34: #{tpu_custom_call.1} parent=0
    _
  %s6 = ssub.s32 1, %s4
  %s7 = scalar_select 0, %s6, %s4
  $region1: #{tpu_custom_call.1} parent=0
    #allocation2 [shape = 'u8[4096]{0}', space=vmem, size = 0x1000, scoped, tag = 'input window, operand 0, single buffered']
    #allocation3 [shape = 's32[1]{0}', space=sflag, size = 0x4, scoped, tag = 'scoped memory for tpu_custom_call.1']
    #allocation4 [shape = 's32[1]{0}', space=sflag, size = 0x4, scoped, tag = 'scoped memory for tpu_custom_call.1']
    #allocation5 [shape = 'u8[524288]{0}', space=vmem, size = 0x80000, scoped, tag = 'input window, operand 1, single buffered']
    #allocation6 [shape = 's32[1]{0}', space=sflag, size = 0x4, scoped, tag = 'scoped memory for tpu_custom_call.1']
    #allocation7 [shape = 'u8[524288]{0}', space=vmem, size = 0x80000, scoped, tag = 'input window, operand 2, single buffered']
    #allocation8 [shape = 'u8[4096]{0}', space=vmem, size = 0x1000, scoped, tag = 'output window, operand 0, single buffered']
    %8 = vsyncpa [#allocation3], 0
    %9 = vsyncpa [#allocation6], 0
    %10 = vsyncpa [#allocation4], 0
    // Predicated region
    $region2: #{tpu_custom_call.1} parent=1 // pred_check
      _
    $region3: #{tpu_custom_call.1} parent=1 // pred_check_branch
      %12 = sbr.rel (0) target = $region5
    $region4: #{tpu_custom_call.1} parent=1 // pred_region
      %14 = vsyncadd [#allocation3], 0
      %s16 = sshll.u32 %s0, 4
      %s17 = int_to_ptr.hbm [resolvable:$true] %s16
      %s18 = sshll.u32 [#allocation2], 4
      %s19 = int_to_ptr.vmem [resolvable:$true] %s18
      %21 = dma.hbm_to_vmem [thread:$0]  %s17, 128, %s19, [#allocation3]
    $region5: #{tpu_custom_call.1} parent=1 // pred_fallthru
      _
    // Predicated region
    $region6: #{tpu_custom_call.1} parent=1 // pred_check
      _
    $region7: #{tpu_custom_call.1} parent=1 // pred_check_branch
      %23 = sbr.rel (0) target = $region9
    $region8: #{tpu_custom_call.1} parent=1 // pred_region
      %25 = vsyncadd [#allocation6], 0
      %s26 = sshll.u32 %s1, 4
      %s27 = int_to_ptr.hbm [resolvable:$true] %s26
      %s28 = sshll.u32 [#allocation5], 4
      %s29 = int_to_ptr.vmem [resolvable:$true] %s28
      %34 = dma.hbm_to_vmem [thread:$0]  %s27, 16384, %s29, [#allocation6], 256, 256, 16
    $region9: #{tpu_custom_call.1} parent=1 // pred_fallthru
      _
    // Predicated region
    $region10: #{tpu_custom_call.1} parent=1 // pred_check
      _
    $region11: #{tpu_custom_call.1} parent=1 // pred_check_branch
      %36 = sbr.rel (0) target = $region13
    $region12: #{tpu_custom_call.1} parent=1 // pred_region
      %38 = vsyncadd [#allocation6], 0
      %s39 = sshll.u32 %s2, 4
      %s40 = int_to_ptr.hbm [resolvable:$true] %s39
      %s41 = sshll.u32 [#allocation7], 4
      %s42 = int_to_ptr.vmem [resolvable:$true] %s41
      %47 = dma.hbm_to_vmem [thread:$0]  %s40, 16384, %s42, [#allocation6], 256, 256, 16
    $region13: #{tpu_custom_call.1} parent=1 // pred_fallthru
      _
    // Predicated region
    $region14: #{tpu_custom_call.1} parent=1 // pred_check
      _
    $region15: #{tpu_custom_call.1} parent=1 // pred_check_branch
      %49 = sbr.rel (0) target = $region17
    $region16: #{tpu_custom_call.1} parent=1 // pred_region
      %51 = dma.done [#allocation3], 128
    $region17: #{tpu_custom_call.1} parent=1 // pred_fallthru
      _
    // Predicated region
    $region18: #{tpu_custom_call.1} parent=1 // pred_check
      _
    $region19: #{tpu_custom_call.1} parent=1 // pred_check_branch
      %53 = sbr.rel (0) target = $region21
    $region20: #{tpu_custom_call.1} parent=1 // pred_region
      %55 = dma.done [#allocation6], 16384
    $region21: #{tpu_custom_call.1} parent=1 // pred_fallthru
      _
    // Predicated region
    $region22: #{tpu_custom_call.1} parent=1 // pred_check
      _
    $region23: #{tpu_custom_call.1} parent=1 // pred_check_branch
      %57 = sbr.rel (0) target = $region25
    $region24: #{tpu_custom_call.1} parent=1 // pred_region
      %59 = dma.done [#allocation6], 16384
    $region25: #{tpu_custom_call.1} parent=1 // pred_fallthru
      _
    %v60 = vld [vmem:[#allocation5] sm:$0xff]
    %v61 = vld [vmem:[#allocation5 + $0x8] sm:$0xff]
    %v62 = vld [vmem:[#allocation5 + $0x10] sm:$0xff]
    %v63 = vld [vmem:[#allocation5 + $0x18] sm:$0xff]
    %v64 = vld [vmem:[#allocation5 + $0x20] sm:$0xff]
    %v65 = vld [vmem:[#allocation5 + $0x28] sm:$0xff]
    %v66 = vld [vmem:[#allocation5 + $0x30] sm:$0xff]
    %v67 = vld [vmem:[#allocation5 + $0x38] sm:$0xff]
    %v68 = vld [vmem:[#allocation5 + $0x40] sm:$0xff]
    %v69 = vld [vmem:[#allocation5 + $0x48] sm:$0xff]
    %v70 = vld [vmem:[#allocation5 + $0x50] sm:$0xff]
    %v71 = vld [vmem:[#allocation5 + $0x58] sm:$0xff]
    %v72 = vld [vmem:[#allocation5 + $0x60] sm:$0xff]
    %v73 = vld [vmem:[#allocation5 + $0x68] sm:$0xff]
    %v74 = vld [vmem:[#allocation5 + $0x70] sm:$0xff]
    %v75 = vld [vmem:[#allocation5 + $0x78] sm:$0xff]
    %v76 = vld [vmem:[#allocation5 + $0x80] sm:$0xff]
    %v77 = vld [vmem:[#allocation5 + $0x88] sm:$0xff]
    %v78 = vld [vmem:[#allocation5 + $0x90] sm:$0xff]
    %v79 = vld [vmem:[#allocation5 + $0x98] sm:$0xff]
    %v80 = vld [vmem:[#allocation5 + $0xa0] sm:$0xff]
    %v81 = vld [vmem:[#allocation5 + $0xa8] sm:$0xff]
    %v82 = vld [vmem:[#allocation5 + $0xb0] sm:$0xff]
    %v83 = vld [vmem:[#allocation5 + $0xb8] sm:$0xff]
    %v84 = vld [vmem:[#allocation5 + $0xc0] sm:$0xff]
    %v85 = vld [vmem:[#allocation5 + $0xc8] sm:$0xff]
    %v86 = vld [vmem:[#allocation5 + $0xd0] sm:$0xff]
    %v87 = vld [vmem:[#allocation5 + $0xd8] sm:$0xff]
    %v88 = vld [vmem:[#allocation5 + $0xe0] sm:$0xff]
    %v89 = vld [vmem:[#allocation5 + $0xe8] sm:$0xff]
    %v90 = vld [vmem:[#allocation5 + $0xf0] sm:$0xff]
    %v91 = vld [vmem:[#allocation5 + $0xf8] sm:$0xff]
    %v92 = vld [vmem:[#allocation5 + $0x100] sm:$0xff]
    %v93 = vld [vmem:[#allocation5 + $0x108] sm:$0xff]
    %v94 = vld [vmem:[#allocation5 + $0x110] sm:$0xff]
    %v95 = vld [vmem:[#allocation5 + $0x118] sm:$0xff]
    %v96 = vld [vmem:[#allocation5 + $0x120] sm:$0xff]
    %v97 = vld [vmem:[#allocation5 + $0x128] sm:$0xff]
    %v98 = vld [vmem:[#allocation5 + $0x130] sm:$0xff]
    %v99 = vld [vmem:[#allocation5 + $0x138] sm:$0xff]
    %v100 = vld [vmem:[#allocation5 + $0x140] sm:$0xff]
    %v101 = vld [vmem:[#allocation5 + $0x148] sm:$0xff]
    %v102 = vld [vmem:[#allocation5 + $0x150] sm:$0xff]
    %v103 = vld [vmem:[#allocation5 + $0x158] sm:$0xff]
    %v104 = vld [vmem:[#allocation5 + $0x160] sm:$0xff]
    %v105 = vld [vmem:[#allocation5 + $0x168] sm:$0xff]
    %v106 = vld [vmem:[#allocation5 + $0x170] sm:$0xff]
    %v107 = vld [vmem:[#allocation5 + $0x178] sm:$0xff]
    %v108 = vld [vmem:[#allocation5 + $0x180] sm:$0xff]
    %v109 = vld [vmem:[#allocation5 + $0x188] sm:$0xff]
    %v110 = vld [vmem:[#allocation5 + $0x190] sm:$0xff]
    %v111 = vld [vmem:[#allocation5 + $0x198] sm:$0xff]
    %v112 = vld [vmem:[#allocation5 + $0x1a0] sm:$0xff]
    %v113 = vld [vmem:[#allocation5 + $0x1a8] sm:$0xff]
    %v114 = vld [vmem:[#allocation5 + $0x1b0] sm:$0xff]
    %v115 = vld [vmem:[#allocation5 + $0x1b8] sm:$0xff]
    %v116 = vld [vmem:[#allocation5 + $0x1c0] sm:$0xff]
    %v117 = vld [vmem:[#allocation5 + $0x1c8] sm:$0xff]
    %v118 = vld [vmem:[#allocation5 + $0x1d0] sm:$0xff]
    %v119 = vld [vmem:[#allocation5 + $0x1d8] sm:$0xff]
    %v120 = vld [vmem:[#allocation5 + $0x1e0] sm:$0xff]
    %v121 = vld [vmem:[#allocation5 + $0x1e8] sm:$0xff]
    %v122 = vld [vmem:[#allocation5 + $0x1f0] sm:$0xff]
    %v123 = vld [vmem:[#allocation5 + $0x1f8] sm:$0xff]
    %v124 = vld [vmem:[#allocation5 + $0x200] sm:$0xff]
    %v125 = vld [vmem:[#allocation5 + $0x208] sm:$0xff]
    %v126 = vld [vmem:[#allocation5 + $0x210] sm:$0xff]
    %v127 = vld [vmem:[#allocation5 + $0x218] sm:$0xff]
    %v128 = vld [vmem:[#allocation5 + $0x220] sm:$0xff]
    %v129 = vld [vmem:[#allocation5 + $0x228] sm:$0xff]
    %v130 = vld [vmem:[#allocation5 + $0x230] sm:$0xff]
    %v131 = vld [vmem:[#allocation5 + $0x238] sm:$0xff]
    %v132 = vld [vmem:[#allocation5 + $0x240] sm:$0xff]
    %v133 = vld [vmem:[#allocation5 + $0x248] sm:$0xff]
    %v134 = vld [vmem:[#allocation5 + $0x250] sm:$0xff]
    %v135 = vld [vmem:[#allocation5 + $0x258] sm:$0xff]
    %v136 = vld [vmem:[#allocation5 + $0x260] sm:$0xff]
    %v137 = vld [vmem:[#allocation5 + $0x268] sm:$0xff]
    %v138 = vld [vmem:[#allocation5 + $0x270] sm:$0xff]
    %v139 = vld [vmem:[#allocation5 + $0x278] sm:$0xff]
    %v140 = vld [vmem:[#allocation5 + $0x280] sm:$0xff]
    %v141 = vld [vmem:[#allocation5 + $0x288] sm:$0xff]
    %v142 = vld [vmem:[#allocation5 + $0x290] sm:$0xff]
    %v143 = vld [vmem:[#allocation5 + $0x298] sm:$0xff]
    %v144 = vld [vmem:[#allocation5 + $0x2a0] sm:$0xff]
    %v145 = vld [vmem:[#allocation5 + $0x2a8] sm:$0xff]
    %v146 = vld [vmem:[#allocation5 + $0x2b0] sm:$0xff]
    %v147 = vld [vmem:[#allocation5 + $0x2b8] sm:$0xff]
    %v148 = vld [vmem:[#allocation5 + $0x2c0] sm:$0xff]
    %v149 = vld [vmem:[#allocation5 + $0x2c8] sm:$0xff]
    %v150 = vld [vmem:[#allocation5 + $0x2d0] sm:$0xff]
    %v151 = vld [vmem:[#allocation5 + $0x2d8] sm:$0xff]
    %v152 = vld [vmem:[#allocation5 + $0x2e0] sm:$0xff]
    %v153 = vld [vmem:[#allocation5 + $0x2e8] sm:$0xff]
    %v154 = vld [vmem:[#allocation5 + $0x2f0] sm:$0xff]
    %v155 = vld [vmem:[#allocation5 + $0x2f8] sm:$0xff]
    %v156 = vld [vmem:[#allocation5 + $0x300] sm:$0xff]
    %v157 = vld [vmem:[#allocation5 + $0x308] sm:$0xff]
    %v158 = vld [vmem:[#allocation5 + $0x310] sm:$0xff]
    %v159 = vld [vmem:[#allocation5 + $0x318] sm:$0xff]
    %v160 = vld [vmem:[#allocation5 + $0x320] sm:$0xff]
    %v161 = vld [vmem:[#allocation5 + $0x328] sm:$0xff]
    %v162 = vld [vmem:[#allocation5 + $0x330] sm:$0xff]
    %v163 = vld [vmem:[#allocation5 + $0x338] sm:$0xff]
    %v164 = vld [vmem:[#allocation5 + $0x340] sm:$0xff]
    %v165 = vld [vmem:[#allocation5 + $0x348] sm:$0xff]
    %v166 = vld [vmem:[#allocation5 + $0x350] sm:$0xff]
    %v167 = vld [vmem:[#allocation5 + $0x358] sm:$0xff]
    %v168 = vld [vmem:[#allocation5 + $0x360] sm:$0xff]
    %v169 = vld [vmem:[#allocation5 + $0x368] sm:$0xff]
    %v170 = vld [vmem:[#allocation5 + $0x370] sm:$0xff]
    %v171 = vld [vmem:[#allocation5 + $0x378] sm:$0xff]
    %v172 = vld [vmem:[#allocation5 + $0x380] sm:$0xff]
    %v173 = vld [vmem:[#allocation5 + $0x388] sm:$0xff]
    %v174 = vld [vmem:[#allocation5 + $0x390] sm:$0xff]
    %v175 = vld [vmem:[#allocation5 + $0x398] sm:$0xff]
    %v176 = vld [vmem:[#allocation5 + $0x3a0] sm:$0xff]
    %v177 = vld [vmem:[#allocation5 + $0x3a8] sm:$0xff]
    %v178 = vld [vmem:[#allocation5 + $0x3b0] sm:$0xff]
    %v179 = vld [vmem:[#allocation5 + $0x3b8] sm:$0xff]
    %v180 = vld [vmem:[#allocation5 + $0x3c0] sm:$0xff]
    %v181 = vld [vmem:[#allocation5 + $0x3c8] sm:$0xff]
    %v182 = vld [vmem:[#allocation5 + $0x3d0] sm:$0xff]
    %v183 = vld [vmem:[#allocation5 + $0x3d8] sm:$0xff]
    %v184 = vld [vmem:[#allocation5 + $0x3e0] sm:$0xff]
    %v185 = vld [vmem:[#allocation5 + $0x3e8] sm:$0xff]
    %v186 = vld [vmem:[#allocation5 + $0x3f0] sm:$0xff]
    %v187 = vld [vmem:[#allocation5 + $0x3f8] sm:$0xff]
    %v188 = vld [vmem:[#allocation7] sm:$0xff]
    %v189 = vld [vmem:[#allocation7 + $0x8] sm:$0xf]
    %v190 = vld [vmem:[#allocation7 + $0x10] sm:$0xff]
    %v191 = vld [vmem:[#allocation7 + $0x18] sm:$0xf]
    %v192 = vld [vmem:[#allocation7 + $0x20] sm:$0xff]
    %v193 = vld [vmem:[#allocation7 + $0x28] sm:$0xf]
    %v194 = vld [vmem:[#allocation7 + $0x30] sm:$0xff]
    %v195 = vld [vmem:[#allocation7 + $0x38] sm:$0xf]
    %v196 = vld [vmem:[#allocation7 + $0x40] sm:$0xff]
    %v197 = vld [vmem:[#allocation7 + $0x48] sm:$0xf]
    %v198 = vld [vmem:[#allocation7 + $0x50] sm:$0xff]
    %v199 = vld [vmem:[#allocation7 + $0x58] sm:$0xf]
    %v200 = vld [vmem:[#allocation7 + $0x60] sm:$0xff]
    %v201 = vld [vmem:[#allocation7 + $0x68] sm:$0xf]
    %v202 = vld [vmem:[#allocation7 + $0x70] sm:$0xff]
    %v203 = vld [vmem:[#allocation7 + $0x78] sm:$0xf]
    %v204 = vld [vmem:[#allocation7 + $0x80] sm:$0xff]
    %v205 = vld [vmem:[#allocation7 + $0x88] sm:$0xf]
    %v206 = vld [vmem:[#allocation7 + $0x90] sm:$0xff]
    %v207 = vld [vmem:[#allocation7 + $0x98] sm:$0xf]
    %v208 = vld [vmem:[#allocation7 + $0xa0] sm:$0xff]
    %v209 = vld [vmem:[#allocation7 + $0xa8] sm:$0xf]
    %v210 = vld [vmem:[#allocation7 + $0xb0] sm:$0xff]
    %v211 = vld [vmem:[#allocation7 + $0xb8] sm:$0xf]
    %v212 = vld [vmem:[#allocation7 + $0xc0] sm:$0xff]
    %v213 = vld [vmem:[#allocation7 + $0xc8] sm:$0xf]
    %v214 = vld [vmem:[#allocation7 + $0xd0] sm:$0xff]
    %v215 = vld [vmem:[#allocation7 + $0xd8] sm:$0xf]
    %v216 = vld [vmem:[#allocation7 + $0xe0] sm:$0xff]
    %v217 = vld [vmem:[#allocation7 + $0xe8] sm:$0xf]
    %v218 = vld [vmem:[#allocation7 + $0xf0] sm:$0xff]
    %v219 = vld [vmem:[#allocation7 + $0xf8] sm:$0xf]
    %v220 = vld [vmem:[#allocation7 + $0x100] sm:$0xff]
    %v221 = vld [vmem:[#allocation7 + $0x108] sm:$0xf]
    %v222 = vld [vmem:[#allocation7 + $0x110] sm:$0xff]
    %v223 = vld [vmem:[#allocation7 + $0x118] sm:$0xf]
    %v224 = vld [vmem:[#allocation7 + $0x120] sm:$0xff]
    %v225 = vld [vmem:[#allocation7 + $0x128] sm:$0xf]
    %v226 = vld [vmem:[#allocation7 + $0x130] sm:$0xff]
    %v227 = vld [vmem:[#allocation7 + $0x138] sm:$0xf]
    %v228 = vld [vmem:[#allocation7 + $0x140] sm:$0xff]
    %v229 = vld [vmem:[#allocation7 + $0x148] sm:$0xf]
    %v230 = vld [vmem:[#allocation7 + $0x150] sm:$0xff]
    %v231 = vld [vmem:[#allocation7 + $0x158] sm:$0xf]
    %v232 = vld [vmem:[#allocation7 + $0x160] sm:$0xff]
    %v233 = vld [vmem:[#allocation7 + $0x168] sm:$0xf]
    %v234 = vld [vmem:[#allocation7 + $0x170] sm:$0xff]
    %v235 = vld [vmem:[#allocation7 + $0x178] sm:$0xf]
    %v236 = vld [vmem:[#allocation7 + $0x180] sm:$0xff]
    %v237 = vld [vmem:[#allocation7 + $0x188] sm:$0xf]
    %v238 = vld [vmem:[#allocation7 + $0x190] sm:$0xff]
    %v239 = vld [vmem:[#allocation7 + $0x198] sm:$0xf]
    %v240 = vld [vmem:[#allocation7 + $0x1a0] sm:$0xff]
    %v241 = vld [vmem:[#allocation7 + $0x1a8] sm:$0xf]
    %v242 = vld [vmem:[#allocation7 + $0x1b0] sm:$0xff]
    %v243 = vld [vmem:[#allocation7 + $0x1b8] sm:$0xf]
    %v244 = vld [vmem:[#allocation7 + $0x1c0] sm:$0xff]
    %v245 = vld [vmem:[#allocation7 + $0x1c8] sm:$0xf]
    %v246 = vld [vmem:[#allocation7 + $0x1d0] sm:$0xff]
    %v247 = vld [vmem:[#allocation7 + $0x1d8] sm:$0xf]
    %v248 = vld [vmem:[#allocation7 + $0x1e0] sm:$0xff]
    %v249 = vld [vmem:[#allocation7 + $0x1e8] sm:$0xf]
    %v250 = vld [vmem:[#allocation7 + $0x1f0] sm:$0xff]
    %v251 = vld [vmem:[#allocation7 + $0x1f8] sm:$0xf]
    %v252 = vld [vmem:[#allocation7 + $0x200] sm:$0xff]
    %v253 = vld [vmem:[#allocation7 + $0x208] sm:$0xf]
    %v254 = vld [vmem:[#allocation7 + $0x210] sm:$0xff]
    %v255 = vld [vmem:[#allocation7 + $0x218] sm:$0xf]
    %v256 = vld [vmem:[#allocation7 + $0x220] sm:$0xff]
    %v257 = vld [vmem:[#allocation7 + $0x228] sm:$0xf]
    %v258 = vld [vmem:[#allocation7 + $0x230] sm:$0xff]
    %v259 = vld [vmem:[#allocation7 + $0x238] sm:$0xf]
    %v260 = vld [vmem:[#allocation7 + $0x240] sm:$0xff]
    %v261 = vld [vmem:[#allocation7 + $0x248] sm:$0xf]
    %v262 = vld [vmem:[#allocation7 + $0x250] sm:$0xff]
    %v263 = vld [vmem:[#allocation7 + $0x258] sm:$0xf]
    %v264 = vld [vmem:[#allocation7 + $0x260] sm:$0xff]
    %v265 = vld [vmem:[#allocation7 + $0x268] sm:$0xf]
    %v266 = vld [vmem:[#allocation7 + $0x270] sm:$0xff]
    %v267 = vld [vmem:[#allocation7 + $0x278] sm:$0xf]
    %v268 = vld [vmem:[#allocation7 + $0x280] sm:$0xff]
    %v269 = vld [vmem:[#allocation7 + $0x288] sm:$0xf]
    %v270 = vld [vmem:[#allocation7 + $0x290] sm:$0xff]
    %v271 = vld [vmem:[#allocation7 + $0x298] sm:$0xf]
    %v272 = vld [vmem:[#allocation7 + $0x2a0] sm:$0xff]
    %v273 = vld [vmem:[#allocation7 + $0x2a8] sm:$0xf]
    %v274 = vld [vmem:[#allocation7 + $0x2b0] sm:$0xff]
    %v275 = vld [vmem:[#allocation7 + $0x2b8] sm:$0xf]
    %v276 = vld [vmem:[#allocation7 + $0x2c0] sm:$0xff]
    %v277 = vld [vmem:[#allocation7 + $0x2c8] sm:$0xf]
    %v278 = vld [vmem:[#allocation7 + $0x2d0] sm:$0xff]
    %v279 = vld [vmem:[#allocation7 + $0x2d8] sm:$0xf]
    %v280 = vld [vmem:[#allocation7 + $0x2e0] sm:$0xff]
    %v281 = vld [vmem:[#allocation7 + $0x2e8] sm:$0xf]
    %v282 = vld [vmem:[#allocation7 + $0x2f0] sm:$0xff]
    %v283 = vld [vmem:[#allocation7 + $0x2f8] sm:$0xf]
    %v284 = vld [vmem:[#allocation7 + $0x300] sm:$0xff]
    %v285 = vld [vmem:[#allocation7 + $0x308] sm:$0xf]
    %v286 = vld [vmem:[#allocation7 + $0x310] sm:$0xff]
    %v287 = vld [vmem:[#allocation7 + $0x318] sm:$0xf]
    %v288 = vld [vmem:[#allocation7 + $0x320] sm:$0xff]
    %v289 = vld [vmem:[#allocation7 + $0x328] sm:$0xf]
    %v290 = vld [vmem:[#allocation7 + $0x330] sm:$0xff]
    %v291 = vld [vmem:[#allocation7 + $0x338] sm:$0xf]
    %v292 = vld [vmem:[#allocation7 + $0x340] sm:$0xff]
    %v293 = vld [vmem:[#allocation7 + $0x348] sm:$0xf]
    %v294 = vld [vmem:[#allocation7 + $0x350] sm:$0xff]
    %v295 = vld [vmem:[#allocation7 + $0x358] sm:$0xf]
    %v296 = vld [vmem:[#allocation7 + $0x360] sm:$0xff]
    %v297 = vld [vmem:[#allocation7 + $0x368] sm:$0xf]
    %v298 = vld [vmem:[#allocation7 + $0x370] sm:$0xff]
    %v299 = vld [vmem:[#allocation7 + $0x378] sm:$0xf]
    %v300 = vld [vmem:[#allocation7 + $0x380] sm:$0xff]
    %v301 = vld [vmem:[#allocation7 + $0x388] sm:$0xf]
    %v302 = vld [vmem:[#allocation7 + $0x390] sm:$0xff]
    %v303 = vld [vmem:[#allocation7 + $0x398] sm:$0xf]
    %v304 = vld [vmem:[#allocation7 + $0x3a0] sm:$0xff]
    %v305 = vld [vmem:[#allocation7 + $0x3a8] sm:$0xf]
    %v306 = vld [vmem:[#allocation7 + $0x3b0] sm:$0xff]
    %v307 = vld [vmem:[#allocation7 + $0x3b8] sm:$0xf]
    %v308 = vld [vmem:[#allocation7 + $0x3c0] sm:$0xff]
    %v309 = vld [vmem:[#allocation7 + $0x3c8] sm:$0xf]
    %v310 = vld [vmem:[#allocation7 + $0x3d0] sm:$0xff]
    %v311 = vld [vmem:[#allocation7 + $0x3d8] sm:$0xf]
    %v312 = vld [vmem:[#allocation7 + $0x3e0] sm:$0xff]
    %v313 = vld [vmem:[#allocation7 + $0x3e8] sm:$0xf]
    %v314 = vld [vmem:[#allocation7 + $0x3f0] sm:$0xff]
    %v315 = vld [vmem:[#allocation7 + $0x3f8] sm:$0xf]
    %v316 = vld [vmem:[#allocation7 + $0xc] sm:$0xf]
    %v317 = vld [vmem:[#allocation7 + $0x1c] sm:$0xf]
    %v318 = vld [vmem:[#allocation7 + $0x2c] sm:$0xf]
    %v319 = vld [vmem:[#allocation7 + $0x3c] sm:$0xf]
    %v320 = vld [vmem:[#allocation7 + $0x4c] sm:$0xf]
    %v321 = vld [vmem:[#allocation7 + $0x5c] sm:$0xf]
    %v322 = vld [vmem:[#allocation7 + $0x6c] sm:$0xf]
    %v323 = vld [vmem:[#allocation7 + $0x7c] sm:$0xf]
    %v324 = vld [vmem:[#allocation7 + $0x8c] sm:$0xf]
    %v325 = vld [vmem:[#allocation7 + $0x9c] sm:$0xf]
    %v326 = vld [vmem:[#allocation7 + $0xac] sm:$0xf]
    %v327 = vld [vmem:[#allocation7 + $0xbc] sm:$0xf]
    %v328 = vld [vmem:[#allocation7 + $0xcc] sm:$0xf]
    %v329 = vld [vmem:[#allocation7 + $0xdc] sm:$0xf]
    %v330 = vld [vmem:[#allocation7 + $0xec] sm:$0xf]
    %v331 = vld [vmem:[#allocation7 + $0xfc] sm:$0xf]
    %v332 = vld [vmem:[#allocation7 + $0x10c] sm:$0xf]
    %v333 = vld [vmem:[#allocation7 + $0x11c] sm:$0xf]
    %v334 = vld [vmem:[#allocation7 + $0x12c] sm:$0xf]
    %v335 = vld [vmem:[#allocation7 + $0x13c] sm:$0xf]
    %v336 = vld [vmem:[#allocation7 + $0x14c] sm:$0xf]
    %v337 = vld [vmem:[#allocation7 + $0x15c] sm:$0xf]
    %v338 = vld [vmem:[#allocation7 + $0x16c] sm:$0xf]
    %v339 = vld [vmem:[#allocation7 + $0x17c] sm:$0xf]
    %v340 = vld [vmem:[#allocation7 + $0x18c] sm:$0xf]
    %v341 = vld [vmem:[#allocation7 + $0x19c] sm:$0xf]
    %v342 = vld [vmem:[#allocation7 + $0x1ac] sm:$0xf]
    %v343 = vld [vmem:[#allocation7 + $0x1bc] sm:$0xf]
    %v344 = vld [vmem:[#allocation7 + $0x1cc] sm:$0xf]
    %v345 = vld [vmem:[#allocation7 + $0x1dc] sm:$0xf]
    %v346 = vld [vmem:[#allocation7 + $0x1ec] sm:$0xf]
    %v347 = vld [vmem:[#allocation7 + $0x1fc] sm:$0xf]
    %v348 = vld [vmem:[#allocation7 + $0x20c] sm:$0xf]
    %v349 = vld [vmem:[#allocation7 + $0x21c] sm:$0xf]
    %v350 = vld [vmem:[#allocation7 + $0x22c] sm:$0xf]
    %v351 = vld [vmem:[#allocation7 + $0x23c] sm:$0xf]
    %v352 = vld [vmem:[#allocation7 + $0x24c] sm:$0xf]
    %v353 = vld [vmem:[#allocation7 + $0x25c] sm:$0xf]
    %v354 = vld [vmem:[#allocation7 + $0x26c] sm:$0xf]
    %v355 = vld [vmem:[#allocation7 + $0x27c] sm:$0xf]
    %v356 = vld [vmem:[#allocation7 + $0x28c] sm:$0xf]
    %v357 = vld [vmem:[#allocation7 + $0x29c] sm:$0xf]
    %v358 = vld [vmem:[#allocation7 + $0x2ac] sm:$0xf]
    %v359 = vld [vmem:[#allocation7 + $0x2bc] sm:$0xf]
    %v360 = vld [vmem:[#allocation7 + $0x2cc] sm:$0xf]
    %v361 = vld [vmem:[#allocation7 + $0x2dc] sm:$0xf]
    %v362 = vld [vmem:[#allocation7 + $0x2ec] sm:$0xf]
    %v363 = vld [vmem:[#allocation7 + $0x2fc] sm:$0xf]
    %v364 = vld [vmem:[#allocation7 + $0x30c] sm:$0xf]
    %v365 = vld [vmem:[#allocation7 + $0x31c] sm:$0xf]
    %v366 = vld [vmem:[#allocation7 + $0x32c] sm:$0xf]
    %v367 = vld [vmem:[#allocation7 + $0x33c] sm:$0xf]
    %v368 = vld [vmem:[#allocation7 + $0x34c] sm:$0xf]
    %v369 = vld [vmem:[#allocation7 + $0x35c] sm:$0xf]
    %v370 = vld [vmem:[#allocation7 + $0x36c] sm:$0xf]
    %v371 = vld [vmem:[#allocation7 + $0x37c] sm:$0xf]
    %v372 = vld [vmem:[#allocation7 + $0x38c] sm:$0xf]
    %v373 = vld [vmem:[#allocation7 + $0x39c] sm:$0xf]
    %v374 = vld [vmem:[#allocation7 + $0x3ac] sm:$0xf]
    %v375 = vld [vmem:[#allocation7 + $0x3bc] sm:$0xf]
    %v376 = vld [vmem:[#allocation7 + $0x3cc] sm:$0xf]
    %v377 = vld [vmem:[#allocation7 + $0x3dc] sm:$0xf]
    %v378 = vld [vmem:[#allocation7 + $0x3ec] sm:$0xf]
    %v379 = vld [vmem:[#allocation7 + $0x3fc] sm:$0xf]
    %v380 = vld [vmem:[#allocation2] sm:$0xff]
    %v381 = vpack.c.bf16 %v380, %v380
    %v414 = vunpack.c.l.b16 %v60
    %v415 = vunpack.c.h.b16 %v60
    %v416 = vunpack.c.l.b16 %v61
    %v417 = vunpack.c.h.b16 %v61
    %v418 = vunpack.c.l.b16 %v62
    %v419 = vunpack.c.h.b16 %v62
    %v420 = vunpack.c.l.b16 %v63
    %v421 = vunpack.c.h.b16 %v63
    %v422 = vunpack.c.l.b16 %v64
    %v423 = vunpack.c.h.b16 %v64
    %v424 = vunpack.c.l.b16 %v65
    %v425 = vunpack.c.h.b16 %v65
    %v426 = vunpack.c.l.b16 %v66
    %v427 = vunpack.c.h.b16 %v66
    %v428 = vunpack.c.l.b16 %v67
    %v429 = vunpack.c.h.b16 %v67
    %v430 = vunpack.c.l.b16 %v68
    %v431 = vunpack.c.h.b16 %v68
    %v432 = vunpack.c.l.b16 %v69
    %v433 = vunpack.c.h.b16 %v69
    %v434 = vunpack.c.l.b16 %v70
    %v435 = vunpack.c.h.b16 %v70
    %v436 = vunpack.c.l.b16 %v71
    %v437 = vunpack.c.h.b16 %v71
    %v438 = vunpack.c.l.b16 %v72
    %v439 = vunpack.c.h.b16 %v72
    %v440 = vunpack.c.l.b16 %v73
    %v441 = vunpack.c.h.b16 %v73
    %v442 = vunpack.c.l.b16 %v74
    %v443 = vunpack.c.h.b16 %v74
    %v444 = vunpack.c.l.b16 %v75
    %v445 = vunpack.c.h.b16 %v75
    %v446 = vunpack.c.l.b16 %v76
    %v447 = vunpack.c.h.b16 %v76
    %v448 = vunpack.c.l.b16 %v77
    %v449 = vunpack.c.h.b16 %v77
    %v450 = vunpack.c.l.b16 %v78
    %v451 = vunpack.c.h.b16 %v78
    %v452 = vunpack.c.l.b16 %v79
    %v453 = vunpack.c.h.b16 %v79
    %v454 = vunpack.c.l.b16 %v80
    %v455 = vunpack.c.h.b16 %v80
    %v456 = vunpack.c.l.b16 %v81
    %v457 = vunpack.c.h.b16 %v81
    %v458 = vunpack.c.l.b16 %v82
    %v459 = vunpack.c.h.b16 %v82
    %v460 = vunpack.c.l.b16 %v83
    %v461 = vunpack.c.h.b16 %v83
    %v462 = vunpack.c.l.b16 %v84
    %v463 = vunpack.c.h.b16 %v84
    %v464 = vunpack.c.l.b16 %v85
    %v465 = vunpack.c.h.b16 %v85
    %v466 = vunpack.c.l.b16 %v86
    %v467 = vunpack.c.h.b16 %v86
    %v468 = vunpack.c.l.b16 %v87
    %v469 = vunpack.c.h.b16 %v87
    %v470 = vunpack.c.l.b16 %v88
    %v471 = vunpack.c.h.b16 %v88
    %v472 = vunpack.c.l.b16 %v89
    %v473 = vunpack.c.h.b16 %v89
    %v474 = vunpack.c.l.b16 %v90
    %v475 = vunpack.c.h.b16 %v90
    %v476 = vunpack.c.l.b16 %v91
    %v477 = vunpack.c.h.b16 %v91
    %v478 = vpack.c.b16 %v418, %v414
    %v479 = vpack.c.b16 %v419, %v415
    %v480 = vpack.c.b16 %v420, %v416
    %v481 = vpack.c.b16 %v421, %v417
    %v482 = vpack.c.b16 %v426, %v422
    %v483 = vpack.c.b16 %v427, %v423
    %v484 = vpack.c.b16 %v428, %v424
    %v485 = vpack.c.b16 %v429, %v425
    %v486 = vpack.c.b16 %v434, %v430
    %v487 = vpack.c.b16 %v435, %v431
    %v488 = vpack.c.b16 %v436, %v432
    %v489 = vpack.c.b16 %v437, %v433
    %v490 = vpack.c.b16 %v442, %v438
    %v491 = vpack.c.b16 %v443, %v439
    %v492 = vpack.c.b16 %v444, %v440
    %v493 = vpack.c.b16 %v445, %v441
    %v494 = vpack.c.b16 %v450, %v446
    %v495 = vpack.c.b16 %v451, %v447
    %v496 = vpack.c.b16 %v452, %v448
    %v497 = vpack.c.b16 %v453, %v449
    %v498 = vpack.c.b16 %v458, %v454
    %v499 = vpack.c.b16 %v459, %v455
    %v500 = vpack.c.b16 %v460, %v456
    %v501 = vpack.c.b16 %v461, %v457
    %v502 = vpack.c.b16 %v466, %v462
    %v503 = vpack.c.b16 %v467, %v463
    %v504 = vpack.c.b16 %v468, %v464
    %v505 = vpack.c.b16 %v469, %v465
    %v506 = vpack.c.b16 %v474, %v470
    %v507 = vpack.c.b16 %v475, %v471
    %v508 = vpack.c.b16 %v476, %v472
    %v509 = vpack.c.b16 %v477, %v473
    %542 = vmatpush.bf16.msra.mxu0 %v506
    %543 = vmatpush.bf16.msra.mxu0 %v502
    %544 = vmatpush.bf16.msra.mxu0 %v498
    %545 = vmatpush.bf16.msra.mxu0 %v494
    %546 = vmatpush.bf16.msra.mxu0 %v490
    %547 = vmatpush.bf16.msra.mxu0 %v486
    %548 = vmatpush.bf16.msra.mxu0 %v482
    %549 = vmatpush.bf16.msra.mxu0 %v478
    %550 = vmatmul.bf16.gmra.mxu0 %v381
    %v551 = vpop.f32.mrf.mxu0
    %v552 = vadd.f32 0.0, %v551
    %v553 = vpop.f32.mrf.mxu0
    %554 = vdwg.mxu0
    %555 = vmatpush.bf16.msra.mxu0 %v507
    %556 = vmatpush.bf16.msra.mxu0 %v503
    %557 = vmatpush.bf16.msra.mxu0 %v499
    %558 = vmatpush.bf16.msra.mxu0 %v495
    %559 = vmatpush.bf16.msra.mxu0 %v491
    %560 = vmatpush.bf16.msra.mxu0 %v487
    %561 = vmatpush.bf16.msra.mxu0 %v483
    %562 = vmatpush.bf16.msra.mxu0 %v479
    %563 = vmatmul.bf16.gmra.mxu0 %v381
    %v564 = vpop.f32.mrf.mxu0
    %v565 = vadd.f32 0.0, %v564
    %v566 = vpop.f32.mrf.mxu0
    %567 = vdwg.mxu0
    %568 = vmatpush.bf16.msra.mxu0 %v508
    %569 = vmatpush.bf16.msra.mxu0 %v504
    %570 = vmatpush.bf16.msra.mxu0 %v500
    %571 = vmatpush.bf16.msra.mxu0 %v496
    %572 = vmatpush.bf16.msra.mxu0 %v492
    %573 = vmatpush.bf16.msra.mxu0 %v488
    %574 = vmatpush.bf16.msra.mxu0 %v484
    %575 = vmatpush.bf16.msra.mxu0 %v480
    %576 = vmatmul.bf16.gmra.mxu0 %v381
    %v577 = vpop.f32.mrf.mxu0
    %v578 = vadd.f32 0.0, %v577
    %v579 = vpop.f32.mrf.mxu0
    %580 = vdwg.mxu0
    %581 = vmatpush.bf16.msra.mxu0 %v509
    %582 = vmatpush.bf16.msra.mxu0 %v505
    %583 = vmatpush.bf16.msra.mxu0 %v501
    %584 = vmatpush.bf16.msra.mxu0 %v497
    %585 = vmatpush.bf16.msra.mxu0 %v493
    %586 = vmatpush.bf16.msra.mxu0 %v489
    %587 = vmatpush.bf16.msra.mxu0 %v485
    %588 = vmatpush.bf16.msra.mxu0 %v481
    %589 = vmatmul.bf16.gmra.mxu0 %v381
    %v590 = vpop.f32.mrf.mxu0
    %v591 = vadd.f32 0.0, %v590
    %v592 = vpop.f32.mrf.mxu0
    %593 = vdwg.mxu0
    %vm594 = vcmp.ge.f32.partialorder %v552, 0.0
    %vm595 = vcmp.ge.f32.partialorder %v565, 0.0
    %vm596 = vcmp.ge.f32.partialorder %v578, 0.0
    %vm597 = vcmp.ge.f32.partialorder %v591, 0.0
    %v598 = vmul.f32 %v552, 0.01
    %v599 = vmul.f32 %v565, 0.01
    %v600 = vmul.f32 %v578, 0.01
    %v601 = vmul.f32 %v591, 0.01
    %v602 = vsel %vm594, %v552, %v598
    %v603 = vsel %vm595, %v565, %v599
    %v604 = vsel %vm596, %v578, %v600
    %v605 = vsel %vm597, %v591, %v601
    %v606 = vpack.c.bf16 %v602, %v602
    %v607 = vpack.c.bf16 %v603, %v603
    %v608 = vpack.c.bf16 %v604, %v604
    %v609 = vpack.c.bf16 %v605, %v605
    %v738 = vunpack.c.l.b16 %v188
    %v739 = vunpack.c.h.b16 %v188
    %v740 = vunpack.c.l.b16 %v189
    %v741 = vunpack.c.l.b16 %v190
    %v742 = vunpack.c.h.b16 %v190
    %v743 = vunpack.c.l.b16 %v191
    %v744 = vunpack.c.l.b16 %v192
    %v745 = vunpack.c.h.b16 %v192
    %v746 = vunpack.c.l.b16 %v193
    %v747 = vunpack.c.l.b16 %v194
    %v748 = vunpack.c.h.b16 %v194
    %v749 = vunpack.c.l.b16 %v195
    %v750 = vunpack.c.l.b16 %v196
    %v751 = vunpack.c.h.b16 %v196
    %v752 = vunpack.c.l.b16 %v197
    %v753 = vunpack.c.l.b16 %v198
    %v754 = vunpack.c.h.b16 %v198
    %v755 = vunpack.c.l.b16 %v199
    %v756 = vunpack.c.l.b16 %v200
    %v757 = vunpack.c.h.b16 %v200
    %v758 = vunpack.c.l.b16 %v201
    %v759 = vunpack.c.l.b16 %v202
    %v760 = vunpack.c.h.b16 %v202
    %v761 = vunpack.c.l.b16 %v203
    %v762 = vunpack.c.l.b16 %v204
    %v763 = vunpack.c.h.b16 %v204
    %v764 = vunpack.c.l.b16 %v205
    %v765 = vunpack.c.l.b16 %v206
    %v766 = vunpack.c.h.b16 %v206
    %v767 = vunpack.c.l.b16 %v207
    %v768 = vunpack.c.l.b16 %v208
    %v769 = vunpack.c.h.b16 %v208
    %v770 = vunpack.c.l.b16 %v209
    %v771 = vunpack.c.l.b16 %v210
    %v772 = vunpack.c.h.b16 %v210
    %v773 = vunpack.c.l.b16 %v211
    %v774 = vunpack.c.l.b16 %v212
    %v775 = vunpack.c.h.b16 %v212
    %v776 = vunpack.c.l.b16 %v213
    %v777 = vunpack.c.l.b16 %v214
    %v778 = vunpack.c.h.b16 %v214
    %v779 = vunpack.c.l.b16 %v215
    %v780 = vunpack.c.l.b16 %v216
    %v781 = vunpack.c.h.b16 %v216
    %v782 = vunpack.c.l.b16 %v217
    %v783 = vunpack.c.l.b16 %v218
    %v784 = vunpack.c.h.b16 %v218
    %v785 = vunpack.c.l.b16 %v219
    %v786 = vunpack.c.l.b16 %v220
    %v787 = vunpack.c.h.b16 %v220
    %v788 = vunpack.c.l.b16 %v221
    %v789 = vunpack.c.l.b16 %v222
    %v790 = vunpack.c.h.b16 %v222
    %v791 = vunpack.c.l.b16 %v223
    %v792 = vunpack.c.l.b16 %v224
    %v793 = vunpack.c.h.b16 %v224
    %v794 = vunpack.c.l.b16 %v225
    %v795 = vunpack.c.l.b16 %v226
    %v796 = vunpack.c.h.b16 %v226
    %v797 = vunpack.c.l.b16 %v227
    %v798 = vunpack.c.l.b16 %v228
    %v799 = vunpack.c.h.b16 %v228
    %v800 = vunpack.c.l.b16 %v229
    %v801 = vunpack.c.l.b16 %v230
    %v802 = vunpack.c.h.b16 %v230
    %v803 = vunpack.c.l.b16 %v231
    %v804 = vunpack.c.l.b16 %v232
    %v805 = vunpack.c.h.b16 %v232
    %v806 = vunpack.c.l.b16 %v233
    %v807 = vunpack.c.l.b16 %v234
    %v808 = vunpack.c.h.b16 %v234
    %v809 = vunpack.c.l.b16 %v235
    %v810 = vunpack.c.l.b16 %v236
    %v811 = vunpack.c.h.b16 %v236
    %v812 = vunpack.c.l.b16 %v237
    %v813 = vunpack.c.l.b16 %v238
    %v814 = vunpack.c.h.b16 %v238
    %v815 = vunpack.c.l.b16 %v239
    %v816 = vunpack.c.l.b16 %v240
    %v817 = vunpack.c.h.b16 %v240
    %v818 = vunpack.c.l.b16 %v241
    %v819 = vunpack.c.l.b16 %v242
    %v820 = vunpack.c.h.b16 %v242
    %v821 = vunpack.c.l.b16 %v243
    %v822 = vunpack.c.l.b16 %v244
    %v823 = vunpack.c.h.b16 %v244
    %v824 = vunpack.c.l.b16 %v245
    %v825 = vunpack.c.l.b16 %v246
    %v826 = vunpack.c.h.b16 %v246
    %v827 = vunpack.c.l.b16 %v247
    %v828 = vunpack.c.l.b16 %v248
    %v829 = vunpack.c.h.b16 %v248
    %v830 = vunpack.c.l.b16 %v249
    %v831 = vunpack.c.l.b16 %v250
    %v832 = vunpack.c.h.b16 %v250
    %v833 = vunpack.c.l.b16 %v251
    %v834 = vunpack.c.l.b16 %v252
    %v835 = vunpack.c.h.b16 %v252
    %v836 = vunpack.c.l.b16 %v253
    %v837 = vunpack.c.l.b16 %v254
    %v838 = vunpack.c.h.b16 %v254
    %v839 = vunpack.c.l.b16 %v255
    %v840 = vunpack.c.l.b16 %v256
    %v841 = vunpack.c.h.b16 %v256
    %v842 = vunpack.c.l.b16 %v257
    %v843 = vunpack.c.l.b16 %v258
    %v844 = vunpack.c.h.b16 %v258
    %v845 = vunpack.c.l.b16 %v259
    %v846 = vunpack.c.l.b16 %v260
    %v847 = vunpack.c.h.b16 %v260
    %v848 = vunpack.c.l.b16 %v261
    %v849 = vunpack.c.l.b16 %v262
    %v850 = vunpack.c.h.b16 %v262
    %v851 = vunpack.c.l.b16 %v263
    %v852 = vunpack.c.l.b16 %v264
    %v853 = vunpack.c.h.b16 %v264
    %v854 = vunpack.c.l.b16 %v265
    %v855 = vunpack.c.l.b16 %v266
    %v856 = vunpack.c.h.b16 %v266
    %v857 = vunpack.c.l.b16 %v267
    %v858 = vunpack.c.l.b16 %v268
    %v859 = vunpack.c.h.b16 %v268
    %v860 = vunpack.c.l.b16 %v269
    %v861 = vunpack.c.l.b16 %v270
    %v862 = vunpack.c.h.b16 %v270
    %v863 = vunpack.c.l.b16 %v271
    %v864 = vunpack.c.l.b16 %v272
    %v865 = vunpack.c.h.b16 %v272
    %v866 = vunpack.c.l.b16 %v273
    %v867 = vunpack.c.l.b16 %v274
    %v868 = vunpack.c.h.b16 %v274
    %v869 = vunpack.c.l.b16 %v275
    %v870 = vunpack.c.l.b16 %v276
    %v871 = vunpack.c.h.b16 %v276
    %v872 = vunpack.c.l.b16 %v277
    %v873 = vunpack.c.l.b16 %v278
    %v874 = vunpack.c.h.b16 %v278
    %v875 = vunpack.c.l.b16 %v279
    %v876 = vunpack.c.l.b16 %v280
    %v877 = vunpack.c.h.b16 %v280
    %v878 = vunpack.c.l.b16 %v281
    %v879 = vunpack.c.l.b16 %v282
    %v880 = vunpack.c.h.b16 %v282
    %v881 = vunpack.c.l.b16 %v283
    %v882 = vunpack.c.l.b16 %v284
    %v883 = vunpack.c.h.b16 %v284
    %v884 = vunpack.c.l.b16 %v285
    %v885 = vunpack.c.l.b16 %v286
    %v886 = vunpack.c.h.b16 %v286
    %v887 = vunpack.c.l.b16 %v287
    %v888 = vunpack.c.l.b16 %v288
    %v889 = vunpack.c.h.b16 %v288
    %v890 = vunpack.c.l.b16 %v289
    %v891 = vunpack.c.l.b16 %v290
    %v892 = vunpack.c.h.b16 %v290
    %v893 = vunpack.c.l.b16 %v291
    %v894 = vunpack.c.l.b16 %v292
    %v895 = vunpack.c.h.b16 %v292
    %v896 = vunpack.c.l.b16 %v293
    %v897 = vunpack.c.l.b16 %v294
    %v898 = vunpack.c.h.b16 %v294
    %v899 = vunpack.c.l.b16 %v295
    %v900 = vunpack.c.l.b16 %v296
    %v901 = vunpack.c.h.b16 %v296
    %v902 = vunpack.c.l.b16 %v297
    %v903 = vunpack.c.l.b16 %v298
    %v904 = vunpack.c.h.b16 %v298
    %v905 = vunpack.c.l.b16 %v299
    %v906 = vunpack.c.l.b16 %v300
    %v907 = vunpack.c.h.b16 %v300
    %v908 = vunpack.c.l.b16 %v301
    %v909 = vunpack.c.l.b16 %v302
    %v910 = vunpack.c.h.b16 %v302
    %v911 = vunpack.c.l.b16 %v303
    %v912 = vunpack.c.l.b16 %v304
    %v913 = vunpack.c.h.b16 %v304
    %v914 = vunpack.c.l.b16 %v305
    %v915 = vunpack.c.l.b16 %v306
    %v916 = vunpack.c.h.b16 %v306
    %v917 = vunpack.c.l.b16 %v307
    %v918 = vunpack.c.l.b16 %v308
    %v919 = vunpack.c.h.b16 %v308
    %v920 = vunpack.c.l.b16 %v309
    %v921 = vunpack.c.l.b16 %v310
    %v922 = vunpack.c.h.b16 %v310
    %v923 = vunpack.c.l.b16 %v311
    %v924 = vunpack.c.l.b16 %v312
    %v925 = vunpack.c.h.b16 %v312
    %v926 = vunpack.c.l.b16 %v313
    %v927 = vunpack.c.l.b16 %v314
    %v928 = vunpack.c.h.b16 %v314
    %v929 = vunpack.c.l.b16 %v315
    %v930 = vpack.c.b16 %v741, %v738
    %v931 = vpack.c.b16 %v742, %v739
    %v932 = vpack.c.b16 %v743, %v740
    %v933 = vpack.c.b16 %v747, %v744
    %v934 = vpack.c.b16 %v748, %v745
    %v935 = vpack.c.b16 %v749, %v746
    %v936 = vpack.c.b16 %v753, %v750
    %v937 = vpack.c.b16 %v754, %v751
    %v938 = vpack.c.b16 %v755, %v752
    %v939 = vpack.c.b16 %v759, %v756
    %v940 = vpack.c.b16 %v760, %v757
    %v941 = vpack.c.b16 %v761, %v758
    %v942 = vpack.c.b16 %v765, %v762
    %v943 = vpack.c.b16 %v766, %v763
    %v944 = vpack.c.b16 %v767, %v764
    %v945 = vpack.c.b16 %v771, %v768
    %v946 = vpack.c.b16 %v772, %v769
    %v947 = vpack.c.b16 %v773, %v770
    %v948 = vpack.c.b16 %v777, %v774
    %v949 = vpack.c.b16 %v778, %v775
    %v950 = vpack.c.b16 %v779, %v776
    %v951 = vpack.c.b16 %v783, %v780
    %v952 = vpack.c.b16 %v784, %v781
    %v953 = vpack.c.b16 %v785, %v782
    %v954 = vpack.c.b16 %v789, %v786
    %v955 = vpack.c.b16 %v790, %v787
    %v956 = vpack.c.b16 %v791, %v788
    %v957 = vpack.c.b16 %v795, %v792
    %v958 = vpack.c.b16 %v796, %v793
    %v959 = vpack.c.b16 %v797, %v794
    %v960 = vpack.c.b16 %v801, %v798
    %v961 = vpack.c.b16 %v802, %v799
    %v962 = vpack.c.b16 %v803, %v800
    %v963 = vpack.c.b16 %v807, %v804
    %v964 = vpack.c.b16 %v808, %v805
    %v965 = vpack.c.b16 %v809, %v806
    %v966 = vpack.c.b16 %v813, %v810
    %v967 = vpack.c.b16 %v814, %v811
    %v968 = vpack.c.b16 %v815, %v812
    %v969 = vpack.c.b16 %v819, %v816
    %v970 = vpack.c.b16 %v820, %v817
    %v971 = vpack.c.b16 %v821, %v818
    %v972 = vpack.c.b16 %v825, %v822
    %v973 = vpack.c.b16 %v826, %v823
    %v974 = vpack.c.b16 %v827, %v824
    %v975 = vpack.c.b16 %v831, %v828
    %v976 = vpack.c.b16 %v832, %v829
    %v977 = vpack.c.b16 %v833, %v830
    %v978 = vpack.c.b16 %v837, %v834
    %v979 = vpack.c.b16 %v838, %v835
    %v980 = vpack.c.b16 %v839, %v836
    %v981 = vpack.c.b16 %v843, %v840
    %v982 = vpack.c.b16 %v844, %v841
    %v983 = vpack.c.b16 %v845, %v842
    %v984 = vpack.c.b16 %v849, %v846
    %v985 = vpack.c.b16 %v850, %v847
    %v986 = vpack.c.b16 %v851, %v848
    %v987 = vpack.c.b16 %v855, %v852
    %v988 = vpack.c.b16 %v856, %v853
    %v989 = vpack.c.b16 %v857, %v854
    %v990 = vpack.c.b16 %v861, %v858
    %v991 = vpack.c.b16 %v862, %v859
    %v992 = vpack.c.b16 %v863, %v860
    %v993 = vpack.c.b16 %v867, %v864
    %v994 = vpack.c.b16 %v868, %v865
    %v995 = vpack.c.b16 %v869, %v866
    %v996 = vpack.c.b16 %v873, %v870
    %v997 = vpack.c.b16 %v874, %v871
    %v998 = vpack.c.b16 %v875, %v872
    %v999 = vpack.c.b16 %v879, %v876
    %v1000 = vpack.c.b16 %v880, %v877
    %v1001 = vpack.c.b16 %v881, %v878
    %v1002 = vpack.c.b16 %v885, %v882
    %v1003 = vpack.c.b16 %v886, %v883
    %v1004 = vpack.c.b16 %v887, %v884
    %v1005 = vpack.c.b16 %v891, %v888
    %v1006 = vpack.c.b16 %v892, %v889
    %v1007 = vpack.c.b16 %v893, %v890
    %v1008 = vpack.c.b16 %v897, %v894
    %v1009 = vpack.c.b16 %v898, %v895
    %v1010 = vpack.c.b16 %v899, %v896
    %v1011 = vpack.c.b16 %v903, %v900
    %v1012 = vpack.c.b16 %v904, %v901
    %v1013 = vpack.c.b16 %v905, %v902
    %v1014 = vpack.c.b16 %v909, %v906
    %v1015 = vpack.c.b16 %v910, %v907
    %v1016 = vpack.c.b16 %v911, %v908
    %v1017 = vpack.c.b16 %v915, %v912
    %v1018 = vpack.c.b16 %v916, %v913
    %v1019 = vpack.c.b16 %v917, %v914
    %v1020 = vpack.c.b16 %v921, %v918
    %v1021 = vpack.c.b16 %v922, %v919
    %v1022 = vpack.c.b16 %v923, %v920
    %v1023 = vpack.c.b16 %v927, %v924
    %v1024 = vpack.c.b16 %v928, %v925
    %v1025 = vpack.c.b16 %v929, %v926
    %1122 = vmatpush.bf16.msra.mxu0 %v951
    %1123 = vmatpush.bf16.msra.mxu0 %v948
    %1124 = vmatpush.bf16.msra.mxu0 %v945
    %1125 = vmatpush.bf16.msra.mxu0 %v942
    %1126 = vmatpush.bf16.msra.mxu0 %v939
    %1127 = vmatpush.bf16.msra.mxu0 %v936
    %1128 = vmatpush.bf16.msra.mxu0 %v933
    %1129 = vmatpush.bf16.msra.mxu0 %v930
    %1130 = vmatmul.bf16.gmra.mxu0 %v606
    %v1131 = vpop.f32.mrf.mxu0
    %v1132 = vadd.f32 0.0, %v1131
    %v1133 = vpop.f32.mrf.mxu0
    %1134 = vdwg.mxu0
    %1135 = vmatpush.bf16.msra.mxu0 %v975
    %1136 = vmatpush.bf16.msra.mxu0 %v972
    %1137 = vmatpush.bf16.msra.mxu0 %v969
    %1138 = vmatpush.bf16.msra.mxu0 %v966
    %1139 = vmatpush.bf16.msra.mxu0 %v963
    %1140 = vmatpush.bf16.msra.mxu0 %v960
    %1141 = vmatpush.bf16.msra.mxu0 %v957
    %1142 = vmatpush.bf16.msra.mxu0 %v954
    %1143 = vmatmul.bf16.gmra.mxu0 %v607
    %v1144 = vpop.f32.mrf.mxu0
    %v1145 = vadd.f32 %v1132, %v1144
    %v1146 = vpop.f32.mrf.mxu0
    %1147 = vdwg.mxu0
    %1148 = vmatpush.bf16.msra.mxu0 %v999
    %1149 = vmatpush.bf16.msra.mxu0 %v996
    %1150 = vmatpush.bf16.msra.mxu0 %v993
    %1151 = vmatpush.bf16.msra.mxu0 %v990
    %1152 = vmatpush.bf16.msra.mxu0 %v987
    %1153 = vmatpush.bf16.msra.mxu0 %v984
    %1154 = vmatpush.bf16.msra.mxu0 %v981
    %1155 = vmatpush.bf16.msra.mxu0 %v978
    %1156 = vmatmul.bf16.gmra.mxu0 %v608
    %v1157 = vpop.f32.mrf.mxu0
    %v1158 = vadd.f32 %v1145, %v1157
    %v1159 = vpop.f32.mrf.mxu0
    %1160 = vdwg.mxu0
    %1161 = vmatpush.bf16.msra.mxu0 %v1023
    %1162 = vmatpush.bf16.msra.mxu0 %v1020
    %1163 = vmatpush.bf16.msra.mxu0 %v1017
    %1164 = vmatpush.bf16.msra.mxu0 %v1014
    %1165 = vmatpush.bf16.msra.mxu0 %v1011
    %1166 = vmatpush.bf16.msra.mxu0 %v1008
    %1167 = vmatpush.bf16.msra.mxu0 %v1005
    %1168 = vmatpush.bf16.msra.mxu0 %v1002
    %1169 = vmatmul.bf16.gmra.mxu0 %v609
    %v1170 = vpop.f32.mrf.mxu0
    %v1171 = vadd.f32 %v1158, %v1170
    %v1172 = vpop.f32.mrf.mxu0
    %1173 = vdwg.mxu0
    %1174 = vmatpush.bf16.msra.mxu0 %v952
    %1175 = vmatpush.bf16.msra.mxu0 %v949
    %1176 = vmatpush.bf16.msra.mxu0 %v946
    %1177 = vmatpush.bf16.msra.mxu0 %v943
    %1178 = vmatpush.bf16.msra.mxu0 %v940
    %1179 = vmatpush.bf16.msra.mxu0 %v937
    %1180 = vmatpush.bf16.msra.mxu0 %v934
    %1181 = vmatpush.bf16.msra.mxu0 %v931
    %1182 = vmatmul.bf16.gmra.mxu0 %v606
    %v1183 = vpop.f32.mrf.mxu0
    %v1184 = vadd.f32 0.0, %v1183
    %v1185 = vpop.f32.mrf.mxu0
    %1186 = vdwg.mxu0
    %1187 = vmatpush.bf16.msra.mxu0 %v976
    %1188 = vmatpush.bf16.msra.mxu0 %v973
    %1189 = vmatpush.bf16.msra.mxu0 %v970
    %1190 = vmatpush.bf16.msra.mxu0 %v967
    %1191 = vmatpush.bf16.msra.mxu0 %v964
    %1192 = vmatpush.bf16.msra.mxu0 %v961
    %1193 = vmatpush.bf16.msra.mxu0 %v958
    %1194 = vmatpush.bf16.msra.mxu0 %v955
    %1195 = vmatmul.bf16.gmra.mxu0 %v607
    %v1196 = vpop.f32.mrf.mxu0
    %v1197 = vadd.f32 %v1184, %v1196
    %v1198 = vpop.f32.mrf.mxu0
    %1199 = vdwg.mxu0
    %1200 = vmatpush.bf16.msra.mxu0 %v1000
    %1201 = vmatpush.bf16.msra.mxu0 %v997
    %1202 = vmatpush.bf16.msra.mxu0 %v994
    %1203 = vmatpush.bf16.msra.mxu0 %v991
    %1204 = vmatpush.bf16.msra.mxu0 %v988
    %1205 = vmatpush.bf16.msra.mxu0 %v985
    %1206 = vmatpush.bf16.msra.mxu0 %v982
    %1207 = vmatpush.bf16.msra.mxu0 %v979
    %1208 = vmatmul.bf16.gmra.mxu0 %v608
    %v1209 = vpop.f32.mrf.mxu0
    %v1210 = vadd.f32 %v1197, %v1209
    %v1211 = vpop.f32.mrf.mxu0
    %1212 = vdwg.mxu0
    %1213 = vmatpush.bf16.msra.mxu0 %v1024
    %1214 = vmatpush.bf16.msra.mxu0 %v1021
    %1215 = vmatpush.bf16.msra.mxu0 %v1018
    %1216 = vmatpush.bf16.msra.mxu0 %v1015
    %1217 = vmatpush.bf16.msra.mxu0 %v1012
    %1218 = vmatpush.bf16.msra.mxu0 %v1009
    %1219 = vmatpush.bf16.msra.mxu0 %v1006
    %1220 = vmatpush.bf16.msra.mxu0 %v1003
    %1221 = vmatmul.bf16.gmra.mxu0 %v609
    %v1222 = vpop.f32.mrf.mxu0
    %v1223 = vadd.f32 %v1210, %v1222
    %v1224 = vpop.f32.mrf.mxu0
    %1225 = vdwg.mxu0
    %1226 = vmatpush.bf16.msra.mxu0 %v953
    %1227 = vmatpush.bf16.msra.mxu0 %v950
    %1228 = vmatpush.bf16.msra.mxu0 %v947
    %1229 = vmatpush.bf16.msra.mxu0 %v944
    %1230 = vmatpush.bf16.msra.mxu0 %v941
    %1231 = vmatpush.bf16.msra.mxu0 %v938
    %1232 = vmatpush.bf16.msra.mxu0 %v935
    %1233 = vmatpush.bf16.msra.mxu0 %v932
    %1234 = vmatmul.bf16.gmra.mxu0 %v606
    %v1235 = vpop.f32.mrf.mxu0
    %v1236 = vadd.f32 0.0, %v1235
    %v1237 = vpop.f32.mrf.mxu0
    %1238 = vdwg.mxu0
    %1239 = vmatpush.bf16.msra.mxu0 %v977
    %1240 = vmatpush.bf16.msra.mxu0 %v974
    %1241 = vmatpush.bf16.msra.mxu0 %v971
    %1242 = vmatpush.bf16.msra.mxu0 %v968
    %1243 = vmatpush.bf16.msra.mxu0 %v965
    %1244 = vmatpush.bf16.msra.mxu0 %v962
    %1245 = vmatpush.bf16.msra.mxu0 %v959
    %1246 = vmatpush.bf16.msra.mxu0 %v956
    %1247 = vmatmul.bf16.gmra.mxu0 %v607
    %v1248 = vpop.f32.mrf.mxu0
    %v1249 = vadd.f32 %v1236, %v1248
    %v1250 = vpop.f32.mrf.mxu0
    %1251 = vdwg.mxu0
    %1252 = vmatpush.bf16.msra.mxu0 %v1001
    %1253 = vmatpush.bf16.msra.mxu0 %v998
    %1254 = vmatpush.bf16.msra.mxu0 %v995
    %1255 = vmatpush.bf16.msra.mxu0 %v992
    %1256 = vmatpush.bf16.msra.mxu0 %v989
    %1257 = vmatpush.bf16.msra.mxu0 %v986
    %1258 = vmatpush.bf16.msra.mxu0 %v983
    %1259 = vmatpush.bf16.msra.mxu0 %v980
    %1260 = vmatmul.bf16.gmra.mxu0 %v608
    %v1261 = vpop.f32.mrf.mxu0
    %v1262 = vadd.f32 %v1249, %v1261
    %v1263 = vpop.f32.mrf.mxu0
    %1264 = vdwg.mxu0
    %1265 = vmatpush.bf16.msra.mxu0 %v1025
    %1266 = vmatpush.bf16.msra.mxu0 %v1022
    %1267 = vmatpush.bf16.msra.mxu0 %v1019
    %1268 = vmatpush.bf16.msra.mxu0 %v1016
    %1269 = vmatpush.bf16.msra.mxu0 %v1013
    %1270 = vmatpush.bf16.msra.mxu0 %v1010
    %1271 = vmatpush.bf16.msra.mxu0 %v1007
    %1272 = vmatpush.bf16.msra.mxu0 %v1004
    %1273 = vmatmul.bf16.gmra.mxu0 %v609
    %v1274 = vpop.f32.mrf.mxu0
    %v1275 = vadd.f32 %v1262, %v1274
    %v1276 = vpop.f32.mrf.mxu0
    %1277 = vdwg.mxu0
    %vm1278 = vcmp.ge.f32.partialorder %v1171, 0.0
    %vm1279 = vcmp.ge.f32.partialorder %v1223, 0.0
    %vm1280 = vcmp.ge.f32.partialorder %v1275, 0.0
    %v1281 = vmul.f32 %v1171, 0.01
    %v1282 = vmul.f32 %v1223, 0.01
    %v1283 = vmul.f32 %v1275, 0.01
    %v1284 = vsel %vm1278, %v1171, %v1281
    %v1285 = vsel %vm1279, %v1223, %v1282
    %v1286 = vsel %vm1280, %v1275, %v1283
    %v1287 = vpack.c.bf16 %v1284, %v1284
    %v1288 = vpack.c.bf16 %v1285, %v1285
    %v1289 = vpack.c.bf16 %v1286, %v1286
    %v1386 = vunpack.c.l.b16 %v92
    %v1387 = vunpack.c.h.b16 %v92
    %v1388 = vunpack.c.l.b16 %v93
    %v1389 = vunpack.c.h.b16 %v93
    %v1390 = vunpack.c.l.b16 %v94
    %v1391 = vunpack.c.h.b16 %v94
    %v1392 = vunpack.c.l.b16 %v95
    %v1393 = vunpack.c.h.b16 %v95
    %v1394 = vunpack.c.l.b16 %v96
    %v1395 = vunpack.c.h.b16 %v96
    %v1396 = vunpack.c.l.b16 %v97
    %v1397 = vunpack.c.h.b16 %v97
    %v1398 = vunpack.c.l.b16 %v98
    %v1399 = vunpack.c.h.b16 %v98
    %v1400 = vunpack.c.l.b16 %v99
    %v1401 = vunpack.c.h.b16 %v99
    %v1402 = vunpack.c.l.b16 %v100
    %v1403 = vunpack.c.h.b16 %v100
    %v1404 = vunpack.c.l.b16 %v101
    %v1405 = vunpack.c.h.b16 %v101
    %v1406 = vunpack.c.l.b16 %v102
    %v1407 = vunpack.c.h.b16 %v102
    %v1408 = vunpack.c.l.b16 %v103
    %v1409 = vunpack.c.h.b16 %v103
    %v1410 = vunpack.c.l.b16 %v104
    %v1411 = vunpack.c.h.b16 %v104
    %v1412 = vunpack.c.l.b16 %v105
    %v1413 = vunpack.c.h.b16 %v105
    %v1414 = vunpack.c.l.b16 %v106
    %v1415 = vunpack.c.h.b16 %v106
    %v1416 = vunpack.c.l.b16 %v107
    %v1417 = vunpack.c.h.b16 %v107
    %v1418 = vunpack.c.l.b16 %v108
    %v1419 = vunpack.c.h.b16 %v108
    %v1420 = vunpack.c.l.b16 %v109
    %v1421 = vunpack.c.h.b16 %v109
    %v1422 = vunpack.c.l.b16 %v110
    %v1423 = vunpack.c.h.b16 %v110
    %v1424 = vunpack.c.l.b16 %v111
    %v1425 = vunpack.c.h.b16 %v111
    %v1426 = vunpack.c.l.b16 %v112
    %v1427 = vunpack.c.h.b16 %v112
    %v1428 = vunpack.c.l.b16 %v113
    %v1429 = vunpack.c.h.b16 %v113
    %v1430 = vunpack.c.l.b16 %v114
    %v1431 = vunpack.c.h.b16 %v114
    %v1432 = vunpack.c.l.b16 %v115
    %v1433 = vunpack.c.h.b16 %v115
    %v1434 = vunpack.c.l.b16 %v116
    %v1435 = vunpack.c.h.b16 %v116
    %v1436 = vunpack.c.l.b16 %v117
    %v1437 = vunpack.c.h.b16 %v117
    %v1438 = vunpack.c.l.b16 %v118
    %v1439 = vunpack.c.h.b16 %v118
    %v1440 = vunpack.c.l.b16 %v119
    %v1441 = vunpack.c.h.b16 %v119
    %v1442 = vunpack.c.l.b16 %v120
    %v1443 = vunpack.c.h.b16 %v120
    %v1444 = vunpack.c.l.b16 %v121
    %v1445 = vunpack.c.h.b16 %v121
    %v1446 = vunpack.c.l.b16 %v122
    %v1447 = vunpack.c.h.b16 %v122
    %v1448 = vunpack.c.l.b16 %v123
    %v1449 = vunpack.c.h.b16 %v123
    %v1450 = vunpack.c.l.b16 %v124
    %v1451 = vunpack.c.h.b16 %v124
    %v1452 = vunpack.c.l.b16 %v125
    %v1453 = vunpack.c.h.b16 %v125
    %v1454 = vunpack.c.l.b16 %v126
    %v1455 = vunpack.c.h.b16 %v126
    %v1456 = vunpack.c.l.b16 %v127
    %v1457 = vunpack.c.h.b16 %v127
    %v1458 = vunpack.c.l.b16 %v128
    %v1459 = vunpack.c.h.b16 %v128
    %v1460 = vunpack.c.l.b16 %v129
    %v1461 = vunpack.c.h.b16 %v129
    %v1462 = vunpack.c.l.b16 %v130
    %v1463 = vunpack.c.h.b16 %v130
    %v1464 = vunpack.c.l.b16 %v131
    %v1465 = vunpack.c.h.b16 %v131
    %v1466 = vunpack.c.l.b16 %v132
    %v1467 = vunpack.c.h.b16 %v132
    %v1468 = vunpack.c.l.b16 %v133
    %v1469 = vunpack.c.h.b16 %v133
    %v1470 = vunpack.c.l.b16 %v134
    %v1471 = vunpack.c.h.b16 %v134
    %v1472 = vunpack.c.l.b16 %v135
    %v1473 = vunpack.c.h.b16 %v135
    %v1474 = vunpack.c.l.b16 %v136
    %v1475 = vunpack.c.h.b16 %v136
    %v1476 = vunpack.c.l.b16 %v137
    %v1477 = vunpack.c.h.b16 %v137
    %v1478 = vunpack.c.l.b16 %v138
    %v1479 = vunpack.c.h.b16 %v138
    %v1480 = vunpack.c.l.b16 %v139
    %v1481 = vunpack.c.h.b16 %v139
    %v1482 = vunpack.c.l.b16 %v140
    %v1483 = vunpack.c.h.b16 %v140
    %v1484 = vunpack.c.l.b16 %v141
    %v1485 = vunpack.c.h.b16 %v141
    %v1486 = vunpack.c.l.b16 %v142
    %v1487 = vunpack.c.h.b16 %v142
    %v1488 = vunpack.c.l.b16 %v143
    %v1489 = vunpack.c.h.b16 %v143
    %v1490 = vunpack.c.l.b16 %v144
    %v1491 = vunpack.c.h.b16 %v144
    %v1492 = vunpack.c.l.b16 %v145
    %v1493 = vunpack.c.h.b16 %v145
    %v1494 = vunpack.c.l.b16 %v146
    %v1495 = vunpack.c.h.b16 %v146
    %v1496 = vunpack.c.l.b16 %v147
    %v1497 = vunpack.c.h.b16 %v147
    %v1498 = vunpack.c.l.b16 %v148
    %v1499 = vunpack.c.h.b16 %v148
    %v1500 = vunpack.c.l.b16 %v149
    %v1501 = vunpack.c.h.b16 %v149
    %v1502 = vunpack.c.l.b16 %v150
    %v1503 = vunpack.c.h.b16 %v150
    %v1504 = vunpack.c.l.b16 %v151
    %v1505 = vunpack.c.h.b16 %v151
    %v1506 = vunpack.c.l.b16 %v152
    %v1507 = vunpack.c.h.b16 %v152
    %v1508 = vunpack.c.l.b16 %v153
    %v1509 = vunpack.c.h.b16 %v153
    %v1510 = vunpack.c.l.b16 %v154
    %v1511 = vunpack.c.h.b16 %v154
    %v1512 = vunpack.c.l.b16 %v155
    %v1513 = vunpack.c.h.b16 %v155
    %v1514 = vunpack.c.l.b16 %v156
    %v1515 = vunpack.c.h.b16 %v156
    %v1516 = vunpack.c.l.b16 %v157
    %v1517 = vunpack.c.h.b16 %v157
    %v1518 = vunpack.c.l.b16 %v158
    %v1519 = vunpack.c.h.b16 %v158
    %v1520 = vunpack.c.l.b16 %v159
    %v1521 = vunpack.c.h.b16 %v159
    %v1522 = vunpack.c.l.b16 %v160
    %v1523 = vunpack.c.h.b16 %v160
    %v1524 = vunpack.c.l.b16 %v161
    %v1525 = vunpack.c.h.b16 %v161
    %v1526 = vunpack.c.l.b16 %v162
    %v1527 = vunpack.c.h.b16 %v162
    %v1528 = vunpack.c.l.b16 %v163
    %v1529 = vunpack.c.h.b16 %v163
    %v1530 = vunpack.c.l.b16 %v164
    %v1531 = vunpack.c.h.b16 %v164
    %v1532 = vunpack.c.l.b16 %v165
    %v1533 = vunpack.c.h.b16 %v165
    %v1534 = vunpack.c.l.b16 %v166
    %v1535 = vunpack.c.h.b16 %v166
    %v1536 = vunpack.c.l.b16 %v167
    %v1537 = vunpack.c.h.b16 %v167
    %v1538 = vunpack.c.l.b16 %v168
    %v1539 = vunpack.c.h.b16 %v168
    %v1540 = vunpack.c.l.b16 %v169
    %v1541 = vunpack.c.h.b16 %v169
    %v1542 = vunpack.c.l.b16 %v170
    %v1543 = vunpack.c.h.b16 %v170
    %v1544 = vunpack.c.l.b16 %v171
    %v1545 = vunpack.c.h.b16 %v171
    %v1546 = vunpack.c.l.b16 %v172
    %v1547 = vunpack.c.h.b16 %v172
    %v1548 = vunpack.c.l.b16 %v173
    %v1549 = vunpack.c.h.b16 %v173
    %v1550 = vunpack.c.l.b16 %v174
    %v1551 = vunpack.c.h.b16 %v174
    %v1552 = vunpack.c.l.b16 %v175
    %v1553 = vunpack.c.h.b16 %v175
    %v1554 = vunpack.c.l.b16 %v176
    %v1555 = vunpack.c.h.b16 %v176
    %v1556 = vunpack.c.l.b16 %v177
    %v1557 = vunpack.c.h.b16 %v177
    %v1558 = vunpack.c.l.b16 %v178
    %v1559 = vunpack.c.h.b16 %v178
    %v1560 = vunpack.c.l.b16 %v179
    %v1561 = vunpack.c.h.b16 %v179
    %v1562 = vunpack.c.l.b16 %v180
    %v1563 = vunpack.c.h.b16 %v180
    %v1564 = vunpack.c.l.b16 %v181
    %v1565 = vunpack.c.h.b16 %v181
    %v1566 = vunpack.c.l.b16 %v182
    %v1567 = vunpack.c.h.b16 %v182
    %v1568 = vunpack.c.l.b16 %v183
    %v1569 = vunpack.c.h.b16 %v183
    %v1570 = vunpack.c.l.b16 %v184
    %v1571 = vunpack.c.h.b16 %v184
    %v1572 = vunpack.c.l.b16 %v185
    %v1573 = vunpack.c.h.b16 %v185
    %v1574 = vunpack.c.l.b16 %v186
    %v1575 = vunpack.c.h.b16 %v186
    %v1576 = vunpack.c.l.b16 %v187
    %v1577 = vunpack.c.h.b16 %v187
    %v1578 = vpack.c.b16 %v1390, %v1386
    %v1579 = vpack.c.b16 %v1391, %v1387
    %v1580 = vpack.c.b16 %v1392, %v1388
    %v1581 = vpack.c.b16 %v1393, %v1389
    %v1582 = vpack.c.b16 %v1398, %v1394
    %v1583 = vpack.c.b16 %v1399, %v1395
    %v1584 = vpack.c.b16 %v1400, %v1396
    %v1585 = vpack.c.b16 %v1401, %v1397
    %v1586 = vpack.c.b16 %v1406, %v1402
    %v1587 = vpack.c.b16 %v1407, %v1403
    %v1588 = vpack.c.b16 %v1408, %v1404
    %v1589 = vpack.c.b16 %v1409, %v1405
    %v1590 = vpack.c.b16 %v1414, %v1410
    %v1591 = vpack.c.b16 %v1415, %v1411
    %v1592 = vpack.c.b16 %v1416, %v1412
    %v1593 = vpack.c.b16 %v1417, %v1413
    %v1594 = vpack.c.b16 %v1422, %v1418
    %v1595 = vpack.c.b16 %v1423, %v1419
    %v1596 = vpack.c.b16 %v1424, %v1420
    %v1597 = vpack.c.b16 %v1425, %v1421
    %v1598 = vpack.c.b16 %v1430, %v1426
    %v1599 = vpack.c.b16 %v1431, %v1427
    %v1600 = vpack.c.b16 %v1432, %v1428
    %v1601 = vpack.c.b16 %v1433, %v1429
    %v1602 = vpack.c.b16 %v1438, %v1434
    %v1603 = vpack.c.b16 %v1439, %v1435
    %v1604 = vpack.c.b16 %v1440, %v1436
    %v1605 = vpack.c.b16 %v1441, %v1437
    %v1606 = vpack.c.b16 %v1446, %v1442
    %v1607 = vpack.c.b16 %v1447, %v1443
    %v1608 = vpack.c.b16 %v1448, %v1444
    %v1609 = vpack.c.b16 %v1449, %v1445
    %v1610 = vpack.c.b16 %v1454, %v1450
    %v1611 = vpack.c.b16 %v1455, %v1451
    %v1612 = vpack.c.b16 %v1456, %v1452
    %v1613 = vpack.c.b16 %v1457, %v1453
    %v1614 = vpack.c.b16 %v1462, %v1458
    %v1615 = vpack.c.b16 %v1463, %v1459
    %v1616 = vpack.c.b16 %v1464, %v1460
    %v1617 = vpack.c.b16 %v1465, %v1461
    %v1618 = vpack.c.b16 %v1470, %v1466
    %v1619 = vpack.c.b16 %v1471, %v1467
    %v1620 = vpack.c.b16 %v1472, %v1468
    %v1621 = vpack.c.b16 %v1473, %v1469
    %v1622 = vpack.c.b16 %v1478, %v1474
    %v1623 = vpack.c.b16 %v1479, %v1475
    %v1624 = vpack.c.b16 %v1480, %v1476
    %v1625 = vpack.c.b16 %v1481, %v1477
    %v1626 = vpack.c.b16 %v1486, %v1482
    %v1627 = vpack.c.b16 %v1487, %v1483
    %v1628 = vpack.c.b16 %v1488, %v1484
    %v1629 = vpack.c.b16 %v1489, %v1485
    %v1630 = vpack.c.b16 %v1494, %v1490
    %v1631 = vpack.c.b16 %v1495, %v1491
    %v1632 = vpack.c.b16 %v1496, %v1492
    %v1633 = vpack.c.b16 %v1497, %v1493
    %v1634 = vpack.c.b16 %v1502, %v1498
    %v1635 = vpack.c.b16 %v1503, %v1499
    %v1636 = vpack.c.b16 %v1504, %v1500
    %v1637 = vpack.c.b16 %v1505, %v1501
    %v1638 = vpack.c.b16 %v1510, %v1506
    %v1639 = vpack.c.b16 %v1511, %v1507
    %v1640 = vpack.c.b16 %v1512, %v1508
    %v1641 = vpack.c.b16 %v1513, %v1509
    %v1642 = vpack.c.b16 %v1518, %v1514
    %v1643 = vpack.c.b16 %v1519, %v1515
    %v1644 = vpack.c.b16 %v1520, %v1516
    %v1645 = vpack.c.b16 %v1521, %v1517
    %v1646 = vpack.c.b16 %v1526, %v1522
    %v1647 = vpack.c.b16 %v1527, %v1523
    %v1648 = vpack.c.b16 %v1528, %v1524
    %v1649 = vpack.c.b16 %v1529, %v1525
    %v1650 = vpack.c.b16 %v1534, %v1530
    %v1651 = vpack.c.b16 %v1535, %v1531
    %v1652 = vpack.c.b16 %v1536, %v1532
    %v1653 = vpack.c.b16 %v1537, %v1533
    %v1654 = vpack.c.b16 %v1542, %v1538
    %v1655 = vpack.c.b16 %v1543, %v1539
    %v1656 = vpack.c.b16 %v1544, %v1540
    %v1657 = vpack.c.b16 %v1545, %v1541
    %v1658 = vpack.c.b16 %v1550, %v1546
    %v1659 = vpack.c.b16 %v1551, %v1547
    %v1660 = vpack.c.b16 %v1552, %v1548
    %v1661 = vpack.c.b16 %v1553, %v1549
    %v1662 = vpack.c.b16 %v1558, %v1554
    %v1663 = vpack.c.b16 %v1559, %v1555
    %v1664 = vpack.c.b16 %v1560, %v1556
    %v1665 = vpack.c.b16 %v1561, %v1557
    %v1666 = vpack.c.b16 %v1566, %v1562
    %v1667 = vpack.c.b16 %v1567, %v1563
    %v1668 = vpack.c.b16 %v1568, %v1564
    %v1669 = vpack.c.b16 %v1569, %v1565
    %v1670 = vpack.c.b16 %v1574, %v1570
    %v1671 = vpack.c.b16 %v1575, %v1571
    %v1672 = vpack.c.b16 %v1576, %v1572
    %v1673 = vpack.c.b16 %v1577, %v1573
    %1770 = vmatpush.bf16.msra.mxu0 %v1606
    %1771 = vmatpush.bf16.msra.mxu0 %v1602
    %1772 = vmatpush.bf16.msra.mxu0 %v1598
    %1773 = vmatpush.bf16.msra.mxu0 %v1594
    %1774 = vmatpush.bf16.msra.mxu0 %v1590
    %1775 = vmatpush.bf16.msra.mxu0 %v1586
    %1776 = vmatpush.bf16.msra.mxu0 %v1582
    %1777 = vmatpush.bf16.msra.mxu0 %v1578
    %1778 = vmatmul.bf16.gmra.mxu0 %v1287
    %v1779 = vpop.f32.mrf.mxu0
    %v1780 = vadd.f32 0.0, %v1779
    %v1781 = vpop.f32.mrf.mxu0
    %1782 = vdwg.mxu0
    %1783 = vmatpush.bf16.msra.mxu0 %v1638
    %1784 = vmatpush.bf16.msra.mxu0 %v1634
    %1785 = vmatpush.bf16.msra.mxu0 %v1630
    %1786 = vmatpush.bf16.msra.mxu0 %v1626
    %1787 = vmatpush.bf16.msra.mxu0 %v1622
    %1788 = vmatpush.bf16.msra.mxu0 %v1618
    %1789 = vmatpush.bf16.msra.mxu0 %v1614
    %1790 = vmatpush.bf16.msra.mxu0 %v1610
    %1791 = vmatmul.bf16.gmra.mxu0 %v1288
    %v1792 = vpop.f32.mrf.mxu0
    %v1793 = vadd.f32 %v1780, %v1792
    %v1794 = vpop.f32.mrf.mxu0
    %1795 = vdwg.mxu0
    %1796 = vmatpush.bf16.msra.mxu0 %v1670
    %1797 = vmatpush.bf16.msra.mxu0 %v1666
    %1798 = vmatpush.bf16.msra.mxu0 %v1662
    %1799 = vmatpush.bf16.msra.mxu0 %v1658
    %1800 = vmatpush.bf16.msra.mxu0 %v1654
    %1801 = vmatpush.bf16.msra.mxu0 %v1650
    %1802 = vmatpush.bf16.msra.mxu0 %v1646
    %1803 = vmatpush.bf16.msra.mxu0 %v1642
    %1804 = vmatmul.bf16.gmra.mxu0 %v1289
    %v1805 = vpop.f32.mrf.mxu0
    %v1806 = vadd.f32 %v1793, %v1805
    %v1807 = vpop.f32.mrf.mxu0
    %1808 = vdwg.mxu0
    %1809 = vmatpush.bf16.msra.mxu0 %v1607
    %1810 = vmatpush.bf16.msra.mxu0 %v1603
    %1811 = vmatpush.bf16.msra.mxu0 %v1599
    %1812 = vmatpush.bf16.msra.mxu0 %v1595
    %1813 = vmatpush.bf16.msra.mxu0 %v1591
    %1814 = vmatpush.bf16.msra.mxu0 %v1587
    %1815 = vmatpush.bf16.msra.mxu0 %v1583
    %1816 = vmatpush.bf16.msra.mxu0 %v1579
    %1817 = vmatmul.bf16.gmra.mxu0 %v1287
    %v1818 = vpop.f32.mrf.mxu0
    %v1819 = vadd.f32 0.0, %v1818
    %v1820 = vpop.f32.mrf.mxu0
    %1821 = vdwg.mxu0
    %1822 = vmatpush.bf16.msra.mxu0 %v1639
    %1823 = vmatpush.bf16.msra.mxu0 %v1635
    %1824 = vmatpush.bf16.msra.mxu0 %v1631
    %1825 = vmatpush.bf16.msra.mxu0 %v1627
    %1826 = vmatpush.bf16.msra.mxu0 %v1623
    %1827 = vmatpush.bf16.msra.mxu0 %v1619
    %1828 = vmatpush.bf16.msra.mxu0 %v1615
    %1829 = vmatpush.bf16.msra.mxu0 %v1611
    %1830 = vmatmul.bf16.gmra.mxu0 %v1288
    %v1831 = vpop.f32.mrf.mxu0
    %v1832 = vadd.f32 %v1819, %v1831
    %v1833 = vpop.f32.mrf.mxu0
    %1834 = vdwg.mxu0
    %1835 = vmatpush.bf16.msra.mxu0 %v1671
    %1836 = vmatpush.bf16.msra.mxu0 %v1667
    %1837 = vmatpush.bf16.msra.mxu0 %v1663
    %1838 = vmatpush.bf16.msra.mxu0 %v1659
    %1839 = vmatpush.bf16.msra.mxu0 %v1655
    %1840 = vmatpush.bf16.msra.mxu0 %v1651
    %1841 = vmatpush.bf16.msra.mxu0 %v1647
    %1842 = vmatpush.bf16.msra.mxu0 %v1643
    %1843 = vmatmul.bf16.gmra.mxu0 %v1289
    %v1844 = vpop.f32.mrf.mxu0
    %v1845 = vadd.f32 %v1832, %v1844
    %v1846 = vpop.f32.mrf.mxu0
    %1847 = vdwg.mxu0
    %1848 = vmatpush.bf16.msra.mxu0 %v1608
    %1849 = vmatpush.bf16.msra.mxu0 %v1604
    %1850 = vmatpush.bf16.msra.mxu0 %v1600
    %1851 = vmatpush.bf16.msra.mxu0 %v1596
    %1852 = vmatpush.bf16.msra.mxu0 %v1592
    %1853 = vmatpush.bf16.msra.mxu0 %v1588
    %1854 = vmatpush.bf16.msra.mxu0 %v1584
    %1855 = vmatpush.bf16.msra.mxu0 %v1580
    %1856 = vmatmul.bf16.gmra.mxu0 %v1287
    %v1857 = vpop.f32.mrf.mxu0
    %v1858 = vadd.f32 0.0, %v1857
    %v1859 = vpop.f32.mrf.mxu0
    %1860 = vdwg.mxu0
    %1861 = vmatpush.bf16.msra.mxu0 %v1640
    %1862 = vmatpush.bf16.msra.mxu0 %v1636
    %1863 = vmatpush.bf16.msra.mxu0 %v1632
    %1864 = vmatpush.bf16.msra.mxu0 %v1628
    %1865 = vmatpush.bf16.msra.mxu0 %v1624
    %1866 = vmatpush.bf16.msra.mxu0 %v1620
    %1867 = vmatpush.bf16.msra.mxu0 %v1616
    %1868 = vmatpush.bf16.msra.mxu0 %v1612
    %1869 = vmatmul.bf16.gmra.mxu0 %v1288
    %v1870 = vpop.f32.mrf.mxu0
    %v1871 = vadd.f32 %v1858, %v1870
    %v1872 = vpop.f32.mrf.mxu0
    %1873 = vdwg.mxu0
    %1874 = vmatpush.bf16.msra.mxu0 %v1672
    %1875 = vmatpush.bf16.msra.mxu0 %v1668
    %1876 = vmatpush.bf16.msra.mxu0 %v1664
    %1877 = vmatpush.bf16.msra.mxu0 %v1660
    %1878 = vmatpush.bf16.msra.mxu0 %v1656
    %1879 = vmatpush.bf16.msra.mxu0 %v1652
    %1880 = vmatpush.bf16.msra.mxu0 %v1648
    %1881 = vmatpush.bf16.msra.mxu0 %v1644
    %1882 = vmatmul.bf16.gmra.mxu0 %v1289
    %v1883 = vpop.f32.mrf.mxu0
    %v1884 = vadd.f32 %v1871, %v1883
    %v1885 = vpop.f32.mrf.mxu0
    %1886 = vdwg.mxu0
    %1887 = vmatpush.bf16.msra.mxu0 %v1609
    %1888 = vmatpush.bf16.msra.mxu0 %v1605
    %1889 = vmatpush.bf16.msra.mxu0 %v1601
    %1890 = vmatpush.bf16.msra.mxu0 %v1597
    %1891 = vmatpush.bf16.msra.mxu0 %v1593
    %1892 = vmatpush.bf16.msra.mxu0 %v1589
    %1893 = vmatpush.bf16.msra.mxu0 %v1585
    %1894 = vmatpush.bf16.msra.mxu0 %v1581
    %1895 = vmatmul.bf16.gmra.mxu0 %v1287
    %v1896 = vpop.f32.mrf.mxu0
    %v1897 = vadd.f32 0.0, %v1896
    %v1898 = vpop.f32.mrf.mxu0
    %1899 = vdwg.mxu0
    %1900 = vmatpush.bf16.msra.mxu0 %v1641
    %1901 = vmatpush.bf16.msra.mxu0 %v1637
    %1902 = vmatpush.bf16.msra.mxu0 %v1633
    %1903 = vmatpush.bf16.msra.mxu0 %v1629
    %1904 = vmatpush.bf16.msra.mxu0 %v1625
    %1905 = vmatpush.bf16.msra.mxu0 %v1621
    %1906 = vmatpush.bf16.msra.mxu0 %v1617
    %1907 = vmatpush.bf16.msra.mxu0 %v1613
    %1908 = vmatmul.bf16.gmra.mxu0 %v1288
    %v1909 = vpop.f32.mrf.mxu0
    %v1910 = vadd.f32 %v1897, %v1909
    %v1911 = vpop.f32.mrf.mxu0
    %1912 = vdwg.mxu0
    %1913 = vmatpush.bf16.msra.mxu0 %v1673
    %1914 = vmatpush.bf16.msra.mxu0 %v1669
    %1915 = vmatpush.bf16.msra.mxu0 %v1665
    %1916 = vmatpush.bf16.msra.mxu0 %v1661
    %1917 = vmatpush.bf16.msra.mxu0 %v1657
    %1918 = vmatpush.bf16.msra.mxu0 %v1653
    %1919 = vmatpush.bf16.msra.mxu0 %v1649
    %1920 = vmatpush.bf16.msra.mxu0 %v1645
    %1921 = vmatmul.bf16.gmra.mxu0 %v1289
    %v1922 = vpop.f32.mrf.mxu0
    %v1923 = vadd.f32 %v1910, %v1922
    %v1924 = vpop.f32.mrf.mxu0
    %1925 = vdwg.mxu0
    %vm1926 = vcmp.ge.f32.partialorder %v1806, 0.0
    %vm1927 = vcmp.ge.f32.partialorder %v1845, 0.0
    %vm1928 = vcmp.ge.f32.partialorder %v1884, 0.0
    %vm1929 = vcmp.ge.f32.partialorder %v1923, 0.0
    %v1930 = vmul.f32 %v1806, 0.01
    %v1931 = vmul.f32 %v1845, 0.01
    %v1932 = vmul.f32 %v1884, 0.01
    %v1933 = vmul.f32 %v1923, 0.01
    %v1934 = vsel %vm1926, %v1806, %v1930
    %v1935 = vsel %vm1927, %v1845, %v1931
    %v1936 = vsel %vm1928, %v1884, %v1932
    %v1937 = vsel %vm1929, %v1923, %v1933
    %v1938 = vpack.c.bf16 %v1934, %v1934
    %v1939 = vpack.c.bf16 %v1935, %v1935
    %v1940 = vpack.c.bf16 %v1936, %v1936
    %v1941 = vpack.c.bf16 %v1937, %v1937
    %v2006 = vunpack.c.l.b16 %v316
    %v2007 = vunpack.c.l.b16 %v317
    %v2008 = vunpack.c.l.b16 %v318
    %v2009 = vunpack.c.l.b16 %v319
    %v2010 = vunpack.c.l.b16 %v320
    %v2011 = vunpack.c.l.b16 %v321
    %v2012 = vunpack.c.l.b16 %v322
    %v2013 = vunpack.c.l.b16 %v323
    %v2014 = vunpack.c.l.b16 %v324
    %v2015 = vunpack.c.l.b16 %v325
    %v2016 = vunpack.c.l.b16 %v326
    %v2017 = vunpack.c.l.b16 %v327
    %v2018 = vunpack.c.l.b16 %v328
    %v2019 = vunpack.c.l.b16 %v329
    %v2020 = vunpack.c.l.b16 %v330
    %v2021 = vunpack.c.l.b16 %v331
    %v2022 = vunpack.c.l.b16 %v332
    %v2023 = vunpack.c.l.b16 %v333
    %v2024 = vunpack.c.l.b16 %v334
    %v2025 = vunpack.c.l.b16 %v335
    %v2026 = vunpack.c.l.b16 %v336
    %v2027 = vunpack.c.l.b16 %v337
    %v2028 = vunpack.c.l.b16 %v338
    %v2029 = vunpack.c.l.b16 %v339
    %v2030 = vunpack.c.l.b16 %v340
    %v2031 = vunpack.c.l.b16 %v341
    %v2032 = vunpack.c.l.b16 %v342
    %v2033 = vunpack.c.l.b16 %v343
    %v2034 = vunpack.c.l.b16 %v344
    %v2035 = vunpack.c.l.b16 %v345
    %v2036 = vunpack.c.l.b16 %v346
    %v2037 = vunpack.c.l.b16 %v347
    %v2038 = vunpack.c.l.b16 %v348
    %v2039 = vunpack.c.l.b16 %v349
    %v2040 = vunpack.c.l.b16 %v350
    %v2041 = vunpack.c.l.b16 %v351
    %v2042 = vunpack.c.l.b16 %v352
    %v2043 = vunpack.c.l.b16 %v353
    %v2044 = vunpack.c.l.b16 %v354
    %v2045 = vunpack.c.l.b16 %v355
    %v2046 = vunpack.c.l.b16 %v356
    %v2047 = vunpack.c.l.b16 %v357
    %v2048 = vunpack.c.l.b16 %v358
    %v2049 = vunpack.c.l.b16 %v359
    %v2050 = vunpack.c.l.b16 %v360
    %v2051 = vunpack.c.l.b16 %v361
    %v2052 = vunpack.c.l.b16 %v362
    %v2053 = vunpack.c.l.b16 %v363
    %v2054 = vunpack.c.l.b16 %v364
    %v2055 = vunpack.c.l.b16 %v365
    %v2056 = vunpack.c.l.b16 %v366
    %v2057 = vunpack.c.l.b16 %v367
    %v2058 = vunpack.c.l.b16 %v368
    %v2059 = vunpack.c.l.b16 %v369
    %v2060 = vunpack.c.l.b16 %v370
    %v2061 = vunpack.c.l.b16 %v371
    %v2062 = vunpack.c.l.b16 %v372
    %v2063 = vunpack.c.l.b16 %v373
    %v2064 = vunpack.c.l.b16 %v374
    %v2065 = vunpack.c.l.b16 %v375
    %v2066 = vunpack.c.l.b16 %v376
    %v2067 = vunpack.c.l.b16 %v377
    %v2068 = vunpack.c.l.b16 %v378
    %v2069 = vunpack.c.l.b16 %v379
    %v2070 = vpack.c.b16 %v2007, %v2006
    %v2071 = vpack.c.b16 %v2009, %v2008
    %v2072 = vpack.c.b16 %v2011, %v2010
    %v2073 = vpack.c.b16 %v2013, %v2012
    %v2074 = vpack.c.b16 %v2015, %v2014
    %v2075 = vpack.c.b16 %v2017, %v2016
    %v2076 = vpack.c.b16 %v2019, %v2018
    %v2077 = vpack.c.b16 %v2021, %v2020
    %v2078 = vpack.c.b16 %v2023, %v2022
    %v2079 = vpack.c.b16 %v2025, %v2024
    %v2080 = vpack.c.b16 %v2027, %v2026
    %v2081 = vpack.c.b16 %v2029, %v2028
    %v2082 = vpack.c.b16 %v2031, %v2030
    %v2083 = vpack.c.b16 %v2033, %v2032
    %v2084 = vpack.c.b16 %v2035, %v2034
    %v2085 = vpack.c.b16 %v2037, %v2036
    %v2086 = vpack.c.b16 %v2039, %v2038
    %v2087 = vpack.c.b16 %v2041, %v2040
    %v2088 = vpack.c.b16 %v2043, %v2042
    %v2089 = vpack.c.b16 %v2045, %v2044
    %v2090 = vpack.c.b16 %v2047, %v2046
    %v2091 = vpack.c.b16 %v2049, %v2048
    %v2092 = vpack.c.b16 %v2051, %v2050
    %v2093 = vpack.c.b16 %v2053, %v2052
    %v2094 = vpack.c.b16 %v2055, %v2054
    %v2095 = vpack.c.b16 %v2057, %v2056
    %v2096 = vpack.c.b16 %v2059, %v2058
    %v2097 = vpack.c.b16 %v2061, %v2060
    %v2098 = vpack.c.b16 %v2063, %v2062
    %v2099 = vpack.c.b16 %v2065, %v2064
    %v2100 = vpack.c.b16 %v2067, %v2066
    %v2101 = vpack.c.b16 %v2069, %v2068
    %2134 = vmatpush.bf16.msra.mxu0 %v2077
    %2135 = vmatpush.bf16.msra.mxu0 %v2076
    %2136 = vmatpush.bf16.msra.mxu0 %v2075
    %2137 = vmatpush.bf16.msra.mxu0 %v2074
    %2138 = vmatpush.bf16.msra.mxu0 %v2073
    %2139 = vmatpush.bf16.msra.mxu0 %v2072
    %2140 = vmatpush.bf16.msra.mxu0 %v2071
    %2141 = vmatpush.bf16.msra.mxu0 %v2070
    %2142 = vmatmul.bf16.gmra.mxu0 %v1938
    %v2143 = vpop.f32.mrf.mxu0
    %v2144 = vadd.f32 0.0, %v2143
    %v2145 = vpop.f32.mrf.mxu0
    %2146 = vdwg.mxu0
    %2147 = vmatpush.bf16.msra.mxu0 %v2085
    %2148 = vmatpush.bf16.msra.mxu0 %v2084
    %2149 = vmatpush.bf16.msra.mxu0 %v2083
    %2150 = vmatpush.bf16.msra.mxu0 %v2082
    %2151 = vmatpush.bf16.msra.mxu0 %v2081
    %2152 = vmatpush.bf16.msra.mxu0 %v2080
    %2153 = vmatpush.bf16.msra.mxu0 %v2079
    %2154 = vmatpush.bf16.msra.mxu0 %v2078
    %2155 = vmatmul.bf16.gmra.mxu0 %v1939
    %v2156 = vpop.f32.mrf.mxu0
    %v2157 = vadd.f32 %v2144, %v2156
    %v2158 = vpop.f32.mrf.mxu0
    %2159 = vdwg.mxu0
    %2160 = vmatpush.bf16.msra.mxu0 %v2093
    %2161 = vmatpush.bf16.msra.mxu0 %v2092
    %2162 = vmatpush.bf16.msra.mxu0 %v2091
    %2163 = vmatpush.bf16.msra.mxu0 %v2090
    %2164 = vmatpush.bf16.msra.mxu0 %v2089
    %2165 = vmatpush.bf16.msra.mxu0 %v2088
    %2166 = vmatpush.bf16.msra.mxu0 %v2087
    %2167 = vmatpush.bf16.msra.mxu0 %v2086
    %2168 = vmatmul.bf16.gmra.mxu0 %v1940
    %v2169 = vpop.f32.mrf.mxu0
    %v2170 = vadd.f32 %v2157, %v2169
    %v2171 = vpop.f32.mrf.mxu0
    %2172 = vdwg.mxu0
    %2173 = vmatpush.bf16.msra.mxu0 %v2101
    %2174 = vmatpush.bf16.msra.mxu0 %v2100
    %2175 = vmatpush.bf16.msra.mxu0 %v2099
    %2176 = vmatpush.bf16.msra.mxu0 %v2098
    %2177 = vmatpush.bf16.msra.mxu0 %v2097
    %2178 = vmatpush.bf16.msra.mxu0 %v2096
    %2179 = vmatpush.bf16.msra.mxu0 %v2095
    %2180 = vmatpush.bf16.msra.mxu0 %v2094
    %2181 = vmatmul.bf16.gmra.mxu0 %v1941
    %v2182 = vpop.f32.mrf.mxu0
    %v2183 = vadd.f32 %v2170, %v2182
    %v2184 = vpop.f32.mrf.mxu0
    %2185 = vdwg.mxu0
    %v2186 = vtanh.pop %v2183
    %2187 = vst [vmem:[#allocation8] sm:$0xff] %v2186
    // Predicated region
    $region26: #{tpu_custom_call.1} parent=1 // pred_check
      _
    $region27: #{tpu_custom_call.1} parent=1 // pred_check_branch
      %2189 = sbr.rel (0) target = $region29
    $region28: #{tpu_custom_call.1} parent=1 // pred_region
      %2191 = vsyncadd [#allocation4], 0
      %s2193 = sshll.u32 [#allocation8], 4
      %s2194 = int_to_ptr.vmem [resolvable:$true] %s2193
      %s2195 = sshll.u32 %s3, 4
      %s2196 = int_to_ptr.hbm [resolvable:$true] %s2195
      %2198 = dma.vmem_to_hbm [thread:$0]  %s2194, 128, %s2196, [#allocation4]
    $region29: #{tpu_custom_call.1} parent=1 // pred_fallthru
      _
    // Predicated region
    $region30: #{tpu_custom_call.1} parent=1 // pred_check
      _
    $region31: #{tpu_custom_call.1} parent=1 // pred_check_branch
      %2200 = sbr.rel (0) target = $region33
    $region32: #{tpu_custom_call.1} parent=1 // pred_region
      %2202 = dma.done [#allocation4], 128
    $region33: #{tpu_custom_call.1} parent=1 // pred_fallthru
      _
    %2203 = vsyncpa [#allocation3], 1
    %2204 = vsyncpa [#allocation6], 1
    %2205 = vsyncpa [#allocation4], 1

</llo_original>
